<compile_context>
chip_gen: v7x
topology: tpu7x:2x2x1
jax: 0.10.0
libtpu: 0.0.40
codegen_flags: <defaults>
</compile_context>

<pallas_src>
import functools

import jax
import jax.numpy as jnp
from jax.experimental import pallas as pl
from jax.experimental.pallas import tpu as pltpu


def _conv3x3(src_ref, w_ref, H, W):
    """3x3 'same' conv of a spatially padded (H+2, W+2, Cin) ref.

    src_ref : (H+2, W+2, Cin) bf16 (1-px zero halo already present)
    w_ref   : (3, 3, Cin, Cout) bf16
    returns : (H*W, Cout) float32 accumulator (MXU, f32 accumulation)
    """
    c_in = src_ref.shape[-1]
    c_out = w_ref.shape[-1]

    # Hoist the three W-shifted window loads out of the tap loop: the
    # sublane-offset read happens 3x (not 9x) and the per-tap flatten below
    # works on values whose W axis starts at sublane 0.
    cols = [src_ref[:, kw:kw + W, :] for kw in range(3)]   # each (H+2, W, Cin)

    acc = jnp.zeros((H * W, c_out), jnp.float32)
    for kh in range(3):
        for kw in range(3):
            xs = cols[kw][kh:kh + H].reshape(H * W, c_in)   # row slice: outer dim
            acc = acc + jnp.dot(xs, w_ref[kh, kw],
                                preferred_element_type=jnp.float32)
    return acc


def _double_conv_kernel(x_ref, w1_ref, b1_ref, w2_ref, b2_ref, o_ref, mid_ref,
                        *, H, W):
    """One grid step = one image.

    x_ref  : (H+2, W+2, Cin)   bf16, spatially zero-padded NHWC input
    w1_ref : (3, 3, Cin, Cmid) bf16  (BN1 folded in)         [untiled VMEM]
    b1_ref : (1, Cmid)         f32   (BN1 folded in)         [untiled VMEM]
    w2_ref : (3, 3, Cmid, Cout)bf16  (BN2 folded in)         [untiled VMEM]
    b2_ref : (1, Cout)         f32   (BN2 folded in)         [untiled VMEM]
    o_ref  : (H, W, Cout)      f32 output
    mid_ref: (H+2, W+2, Cmid)  bf16 VMEM scratch for the intermediate
    """
    cmid = w1_ref.shape[-1]
    cout = w2_ref.shape[-1]

    # ---- conv1 (+ folded BN1) + ReLU; f32 accumulator on the MXU ----
    h1 = jnp.maximum(_conv3x3(x_ref, w1_ref, H, W) + b1_ref[...], 0.0)

    # Stage the intermediate into the bf16 VMEM scratch (never touches HBM).
    # Only the 1-px halo border needs zeroing; the interior is fully
    # overwritten every grid step.  Not gated on program_id: under "parallel"
    # semantics each core has its own scratch instance.
    zrow = jnp.zeros((1, W + 2, cmid), mid_ref.dtype)
    zcol = jnp.zeros((H, 1, cmid), mid_ref.dtype)
    mid_ref[0:1, :, :] = zrow
    mid_ref[H + 1:H + 2, :, :] = zrow
    mid_ref[1:H + 1, 0:1, :] = zcol
    mid_ref[1:H + 1, W + 1:W + 2, :] = zcol
    mid_ref[1:H + 1, 1:W + 1, :] = h1.reshape(H, W, cmid).astype(mid_ref.dtype)

    # ---- conv2 (+ folded BN2) + ReLU ----
    out = jnp.maximum(_conv3x3(mid_ref, w2_ref, H, W) + b2_ref[...], 0.0)
    o_ref[...] = out.reshape(H, W, cout).astype(o_ref.dtype)


def _fold_bn(w, b, gamma, beta, mean, var, eps):
    """Fold eval-mode BatchNorm into conv weight (OIHW) and bias (f32)."""
    scale = gamma / jnp.sqrt(var + eps)
    w_f = w * scale[:, None, None, None]
    b_f = (b - mean) * scale + beta
    return w_f.astype(jnp.float32), b_f.astype(jnp.float32)


def double_conv(x, w1, b1, bn1, w2, b2, bn2, *, eps=1e-5):
    """DoubleConv forward. x is NCHW f32; conv weights are torch OIHW layout.

    bn1/bn2 = (gamma, beta, running_mean, running_var) of the BatchNorm layers.
    """
    B, Cin, H, W = x.shape
    Cmid = w1.shape[0]
    Cout = w2.shape[0]

    # Fold BN (eval mode) into conv weights/bias; compute in f32, ship bf16.
    w1f, b1f = _fold_bn(w1, b1, *bn1, eps)
    w2f, b2f = _fold_bn(w2, b2, *bn2, eps)

    # NCHW -> NHWC + spatial zero-pad of 1 + bf16 cast (one fused XLA pass).
    # No channel padding: blocks use the natural (tiny) channel extents.
    x_nhwc = jnp.transpose(x, (0, 2, 3, 1)).astype(jnp.bfloat16)
    x_pad = jnp.pad(x_nhwc, ((0, 0), (1, 1), (1, 1), (0, 0)))

    # torch (Cout, Cin, kh, kw) -> (kh, kw, Cin, Cout), bf16 for the MXU.
    w1t = jnp.transpose(w1f, (2, 3, 1, 0)).astype(jnp.bfloat16)
    w2t = jnp.transpose(w2f, (2, 3, 1, 0)).astype(jnp.bfloat16)
    b1r = b1f.reshape(1, Cmid)
    b2r = b2f.reshape(1, Cout)

    kernel = functools.partial(_double_conv_kernel, H=H, W=W)

    out_nhwc = pl.pallas_call(
        kernel,
        out_shape=jax.ShapeDtypeStruct((B, H, W, Cout), x.dtype),
        grid_spec=pltpu.PrefetchScalarGridSpec(
            num_scalar_prefetch=0,
            grid=(B,),
            in_specs=[
                # Per-image pipelined block; trailing dims equal the full dims.
                pl.BlockSpec((None, H + 2, W + 2, Cin),
                             lambda b: (b, 0, 0, 0)),
                # Constant weights/biases: untiled, single VMEM-resident copy.
                pl.BlockSpec(memory_space=pltpu.MemorySpace.VMEM),
                pl.BlockSpec(memory_space=pltpu.MemorySpace.VMEM),
                pl.BlockSpec(memory_space=pltpu.MemorySpace.VMEM),
                pl.BlockSpec(memory_space=pltpu.MemorySpace.VMEM),
            ],
            out_specs=pl.BlockSpec((None, H, W, Cout),
                                   lambda b: (b, 0, 0, 0)),
            scratch_shapes=[pltpu.VMEM((H + 2, W + 2, Cmid), jnp.bfloat16)],
        ),
        compiler_params=pltpu.CompilerParams(
            dimension_semantics=("parallel",),
            vmem_limit_bytes=32 * 1024 * 1024,
        ),
    )(x_pad, w1t, b1r, w2t, b2r)

    # Back to NCHW like the torch module.
    return jnp.transpose(out_nhwc, (0, 3, 1, 2))


def _reference(x, w1, b1, bn1, w2, b2, bn2, eps=1e-5):
    """Pure-JAX reference: conv3x3 -> eval-mode BN -> ReLU, twice (NCHW)."""
    def block(h, w, b, bn):
        gamma, beta, mean, var = bn
        y = jax.lax.conv_general_dilated(
            h, w, window_strides=(1, 1), padding=((1, 1), (1, 1)),
            dimension_numbers=("NCHW", "OIHW", "NCHW"),
            precision=jax.lax.Precision.HIGHEST)
        y = y + b[None, :, None, None]
        y = (y - mean[None, :, None, None]) / jnp.sqrt(
            var[None, :, None, None] + eps)
        y = y * gamma[None, :, None, None] + beta[None, :, None, None]
        return jnp.maximum(y, 0.0)

    return block(block(x, w1, b1, bn1), w2, b2, bn2)


if __name__ == "__main__":
    B, Cin, Cout, H, W = 2, 4, 8, 16, 16
    Cmid = Cout  # module default: mid_channels = out_channels

    key = jax.random.PRNGKey(0)
    k = jax.random.split(key, 8)
    x = jax.random.normal(k[0], (B, Cin, H, W), jnp.float32)
    w1 = 0.2 * jax.random.normal(k[1], (Cmid, Cin, 3, 3), jnp.float32)
    b1 = 0.1 * jax.random.normal(k[2], (Cmid,), jnp.float32)
    w2 = 0.2 * jax.random.normal(k[3], (Cout, Cmid, 3, 3), jnp.float32)
    b2 = 0.1 * jax.random.normal(k[4], (Cout,), jnp.float32)

    # BatchNorm params (eval mode): gamma, beta, running_mean, running_var.
    bn1 = (1.0 + 0.1 * jax.random.normal(k[5], (Cmid,), jnp.float32),
           0.1 * jax.random.normal(k[6], (Cmid,), jnp.float32),
           0.05 * jax.random.normal(k[7], (Cmid,), jnp.float32),
           jnp.ones((Cmid,), jnp.float32))
    bn2 = (jnp.ones((Cout,), jnp.float32),
           jnp.zeros((Cout,), jnp.float32),
           jnp.zeros((Cout,), jnp.float32),
           jnp.ones((Cout,), jnp.float32))

    out = double_conv(x, w1, b1, bn1, w2, b2, bn2)
    out = jax.block_until_ready(out)

    ref = _reference(x, w1, b1, bn1, w2, b2, bn2)
    assert out.shape == (B, Cout, H, W)
    # Tolerance accounts for bf16 MXU operands (f32 accumulation) vs f32 ref.
    max_diff = float(jnp.max(jnp.abs(out - ref)))
    assert jnp.allclose(out, ref, atol=3e-2, rtol=3e-2), max_diff

    print("KERNEL_OK")
</pallas_src>

<mosaic_0001>
module attributes {stable_mosaic.version = 11 : i64} {
  func.func @_double_conv_kernel(%arg0: i32, %arg1: memref<1x18x18x4xbf16, #tpu.memory_space<vmem>>, %arg2: memref<3x3x4x8xbf16, #tpu.memory_space<vmem>>, %arg3: memref<1x8xf32, #tpu.memory_space<vmem>>, %arg4: memref<3x3x8x8xbf16, #tpu.memory_space<vmem>>, %arg5: memref<1x8xf32, #tpu.memory_space<vmem>>, %arg6: memref<1x16x16x8xf32, #tpu.memory_space<vmem>>, %arg7: memref<18x18x8xbf16, #tpu.memory_space<vmem>>) attributes {dimension_semantics = [#tpu.dimension_semantics<parallel>], iteration_bounds = array<i64: 2>, scalar_prefetch = 0 : i64, scratch_operands = 1 : i64, tpu.core_type = #tpu.core_type<tc>, window_params = [{transform_indices = @transform_0, window_bounds = array<i64: 1, 18, 18, 4>}, {pipeline_mode = #tpu.pipeline_mode<synchronous>, transform_indices = @transform_1, window_bounds = array<i64: 3, 3, 4, 8>}, {pipeline_mode = #tpu.pipeline_mode<synchronous>, transform_indices = @transform_2, window_bounds = array<i64: 1, 8>}, {pipeline_mode = #tpu.pipeline_mode<synchronous>, transform_indices = @transform_3, window_bounds = array<i64: 3, 3, 8, 8>}, {pipeline_mode = #tpu.pipeline_mode<synchronous>, transform_indices = @transform_4, window_bounds = array<i64: 1, 8>}, {transform_indices = @transform_5, window_bounds = array<i64: 1, 16, 16, 8>}]} {
    %c0 = arith.constant 0 : index
    %c0_0 = arith.constant 0 : index
    %c0_1 = arith.constant 0 : index
    %c0_2 = arith.constant 0 : index
    %0 = vector.load %arg1[%c0, %c0_0, %c0_1, %c0_2] : memref<1x18x18x4xbf16, #tpu.memory_space<vmem>>, vector<1x18x16x4xbf16>
    %1 = vector.shape_cast %0 : vector<1x18x16x4xbf16> to vector<18x16x4xbf16>
    %c0_3 = arith.constant 0 : index
    %c0_4 = arith.constant 0 : index
    %c1 = arith.constant 1 : index
    %c0_5 = arith.constant 0 : index
    %2 = vector.load %arg1[%c0_3, %c0_4, %c1, %c0_5] : memref<1x18x18x4xbf16, #tpu.memory_space<vmem>>, vector<1x18x16x4xbf16>
    %3 = vector.shape_cast %2 : vector<1x18x16x4xbf16> to vector<18x16x4xbf16>
    %c0_6 = arith.constant 0 : index
    %c0_7 = arith.constant 0 : index
    %c2 = arith.constant 2 : index
    %c0_8 = arith.constant 0 : index
    %4 = vector.load %arg1[%c0_6, %c0_7, %c2, %c0_8] : memref<1x18x18x4xbf16, #tpu.memory_space<vmem>>, vector<1x18x16x4xbf16>
    %5 = vector.shape_cast %4 : vector<1x18x16x4xbf16> to vector<18x16x4xbf16>
    %cst = arith.constant 0.000000e+00 : f32
    %6 = vector.broadcast %cst : f32 to vector<256x8xf32>
    %7 = vector.extract_strided_slice %1 {offsets = [0, 0, 0], sizes = [16, 16, 4], strides = [1, 1, 1]} : vector<18x16x4xbf16> to vector<16x16x4xbf16>
    %8 = vector.shape_cast %7 : vector<16x16x4xbf16> to vector<256x4xbf16>
    %c0_9 = arith.constant 0 : index
    %c0_10 = arith.constant 0 : index
    %c0_11 = arith.constant 0 : index
    %c0_12 = arith.constant 0 : index
    %9 = vector.load %arg2[%c0_9, %c0_10, %c0_11, %c0_12] : memref<3x3x4x8xbf16, #tpu.memory_space<vmem>>, vector<1x1x4x8xbf16>
    %10 = vector.shape_cast %9 : vector<1x1x4x8xbf16> to vector<4x8xbf16>
    %cst_13 = arith.constant dense<0.000000e+00> : vector<256x8xf32>
    %11 = tpu.matmul %8, %10, %cst_13 {dimension_numbers = #tpu.dot_dimension_numbers<[1], [0], [0], [1], [0, 0, 1, 1], [], []>} : vector<256x4xbf16>, vector<4x8xbf16>, vector<256x8xf32> -> vector<256x8xf32>
    %12 = arith.addf %6, %11 : vector<256x8xf32>
    %13 = vector.extract_strided_slice %3 {offsets = [0, 0, 0], sizes = [16, 16, 4], strides = [1, 1, 1]} : vector<18x16x4xbf16> to vector<16x16x4xbf16>
    %14 = vector.shape_cast %13 : vector<16x16x4xbf16> to vector<256x4xbf16>
    %c0_14 = arith.constant 0 : index
    %c1_15 = arith.constant 1 : index
    %c0_16 = arith.constant 0 : index
    %c0_17 = arith.constant 0 : index
    %15 = vector.load %arg2[%c0_14, %c1_15, %c0_16, %c0_17] : memref<3x3x4x8xbf16, #tpu.memory_space<vmem>>, vector<1x1x4x8xbf16>
    %16 = vector.shape_cast %15 : vector<1x1x4x8xbf16> to vector<4x8xbf16>
    %cst_18 = arith.constant dense<0.000000e+00> : vector<256x8xf32>
    %17 = tpu.matmul %14, %16, %cst_18 {dimension_numbers = #tpu.dot_dimension_numbers<[1], [0], [0], [1], [0, 0, 1, 1], [], []>} : vector<256x4xbf16>, vector<4x8xbf16>, vector<256x8xf32> -> vector<256x8xf32>
    %18 = arith.addf %12, %17 : vector<256x8xf32>
    %19 = vector.extract_strided_slice %5 {offsets = [0, 0, 0], sizes = [16, 16, 4], strides = [1, 1, 1]} : vector<18x16x4xbf16> to vector<16x16x4xbf16>
    %20 = vector.shape_cast %19 : vector<16x16x4xbf16> to vector<256x4xbf16>
    %c0_19 = arith.constant 0 : index
    %c2_20 = arith.constant 2 : index
    %c0_21 = arith.constant 0 : index
    %c0_22 = arith.constant 0 : index
    %21 = vector.load %arg2[%c0_19, %c2_20, %c0_21, %c0_22] : memref<3x3x4x8xbf16, #tpu.memory_space<vmem>>, vector<1x1x4x8xbf16>
    %22 = vector.shape_cast %21 : vector<1x1x4x8xbf16> to vector<4x8xbf16>
    %cst_23 = arith.constant dense<0.000000e+00> : vector<256x8xf32>
    %23 = tpu.matmul %20, %22, %cst_23 {dimension_numbers = #tpu.dot_dimension_numbers<[1], [0], [0], [1], [0, 0, 1, 1], [], []>} : vector<256x4xbf16>, vector<4x8xbf16>, vector<256x8xf32> -> vector<256x8xf32>
    %24 = arith.addf %18, %23 : vector<256x8xf32>
    %25 = vector.extract_strided_slice %1 {offsets = [1, 0, 0], sizes = [16, 16, 4], strides = [1, 1, 1]} : vector<18x16x4xbf16> to vector<16x16x4xbf16>
    %26 = vector.shape_cast %25 : vector<16x16x4xbf16> to vector<256x4xbf16>
    %c1_24 = arith.constant 1 : index
    %c0_25 = arith.constant 0 : index
    %c0_26 = arith.constant 0 : index
    %c0_27 = arith.constant 0 : index
    %27 = vector.load %arg2[%c1_24, %c0_25, %c0_26, %c0_27] : memref<3x3x4x8xbf16, #tpu.memory_space<vmem>>, vector<1x1x4x8xbf16>
    %28 = vector.shape_cast %27 : vector<1x1x4x8xbf16> to vector<4x8xbf16>
    %cst_28 = arith.constant dense<0.000000e+00> : vector<256x8xf32>
    %29 = tpu.matmul %26, %28, %cst_28 {dimension_numbers = #tpu.dot_dimension_numbers<[1], [0], [0], [1], [0, 0, 1, 1], [], []>} : vector<256x4xbf16>, vector<4x8xbf16>, vector<256x8xf32> -> vector<256x8xf32>
    %30 = arith.addf %24, %29 : vector<256x8xf32>
    %31 = vector.extract_strided_slice %3 {offsets = [1, 0, 0], sizes = [16, 16, 4], strides = [1, 1, 1]} : vector<18x16x4xbf16> to vector<16x16x4xbf16>
    %32 = vector.shape_cast %31 : vector<16x16x4xbf16> to vector<256x4xbf16>
    %c1_29 = arith.constant 1 : index
    %c1_30 = arith.constant 1 : index
    %c0_31 = arith.constant 0 : index
    %c0_32 = arith.constant 0 : index
    %33 = vector.load %arg2[%c1_29, %c1_30, %c0_31, %c0_32] : memref<3x3x4x8xbf16, #tpu.memory_space<vmem>>, vector<1x1x4x8xbf16>
    %34 = vector.shape_cast %33 : vector<1x1x4x8xbf16> to vector<4x8xbf16>
    %cst_33 = arith.constant dense<0.000000e+00> : vector<256x8xf32>
    %35 = tpu.matmul %32, %34, %cst_33 {dimension_numbers = #tpu.dot_dimension_numbers<[1], [0], [0], [1], [0, 0, 1, 1], [], []>} : vector<256x4xbf16>, vector<4x8xbf16>, vector<256x8xf32> -> vector<256x8xf32>
    %36 = arith.addf %30, %35 : vector<256x8xf32>
    %37 = vector.extract_strided_slice %5 {offsets = [1, 0, 0], sizes = [16, 16, 4], strides = [1, 1, 1]} : vector<18x16x4xbf16> to vector<16x16x4xbf16>
    %38 = vector.shape_cast %37 : vector<16x16x4xbf16> to vector<256x4xbf16>
    %c1_34 = arith.constant 1 : index
    %c2_35 = arith.constant 2 : index
    %c0_36 = arith.constant 0 : index
    %c0_37 = arith.constant 0 : index
    %39 = vector.load %arg2[%c1_34, %c2_35, %c0_36, %c0_37] : memref<3x3x4x8xbf16, #tpu.memory_space<vmem>>, vector<1x1x4x8xbf16>
    %40 = vector.shape_cast %39 : vector<1x1x4x8xbf16> to vector<4x8xbf16>
    %cst_38 = arith.constant dense<0.000000e+00> : vector<256x8xf32>
    %41 = tpu.matmul %38, %40, %cst_38 {dimension_numbers = #tpu.dot_dimension_numbers<[1], [0], [0], [1], [0, 0, 1, 1], [], []>} : vector<256x4xbf16>, vector<4x8xbf16>, vector<256x8xf32> -> vector<256x8xf32>
    %42 = arith.addf %36, %41 : vector<256x8xf32>
    %43 = vector.extract_strided_slice %1 {offsets = [2, 0, 0], sizes = [16, 16, 4], strides = [1, 1, 1]} : vector<18x16x4xbf16> to vector<16x16x4xbf16>
    %44 = vector.shape_cast %43 : vector<16x16x4xbf16> to vector<256x4xbf16>
    %c2_39 = arith.constant 2 : index
    %c0_40 = arith.constant 0 : index
    %c0_41 = arith.constant 0 : index
    %c0_42 = arith.constant 0 : index
    %45 = vector.load %arg2[%c2_39, %c0_40, %c0_41, %c0_42] : memref<3x3x4x8xbf16, #tpu.memory_space<vmem>>, vector<1x1x4x8xbf16>
    %46 = vector.shape_cast %45 : vector<1x1x4x8xbf16> to vector<4x8xbf16>
    %cst_43 = arith.constant dense<0.000000e+00> : vector<256x8xf32>
    %47 = tpu.matmul %44, %46, %cst_43 {dimension_numbers = #tpu.dot_dimension_numbers<[1], [0], [0], [1], [0, 0, 1, 1], [], []>} : vector<256x4xbf16>, vector<4x8xbf16>, vector<256x8xf32> -> vector<256x8xf32>
    %48 = arith.addf %42, %47 : vector<256x8xf32>
    %49 = vector.extract_strided_slice %3 {offsets = [2, 0, 0], sizes = [16, 16, 4], strides = [1, 1, 1]} : vector<18x16x4xbf16> to vector<16x16x4xbf16>
    %50 = vector.shape_cast %49 : vector<16x16x4xbf16> to vector<256x4xbf16>
    %c2_44 = arith.constant 2 : index
    %c1_45 = arith.constant 1 : index
    %c0_46 = arith.constant 0 : index
    %c0_47 = arith.constant 0 : index
    %51 = vector.load %arg2[%c2_44, %c1_45, %c0_46, %c0_47] : memref<3x3x4x8xbf16, #tpu.memory_space<vmem>>, vector<1x1x4x8xbf16>
    %52 = vector.shape_cast %51 : vector<1x1x4x8xbf16> to vector<4x8xbf16>
    %cst_48 = arith.constant dense<0.000000e+00> : vector<256x8xf32>
    %53 = tpu.matmul %50, %52, %cst_48 {dimension_numbers = #tpu.dot_dimension_numbers<[1], [0], [0], [1], [0, 0, 1, 1], [], []>} : vector<256x4xbf16>, vector<4x8xbf16>, vector<256x8xf32> -> vector<256x8xf32>
    %54 = arith.addf %48, %53 : vector<256x8xf32>
    %55 = vector.extract_strided_slice %5 {offsets = [2, 0, 0], sizes = [16, 16, 4], strides = [1, 1, 1]} : vector<18x16x4xbf16> to vector<16x16x4xbf16>
    %56 = vector.shape_cast %55 : vector<16x16x4xbf16> to vector<256x4xbf16>
    %c2_49 = arith.constant 2 : index
    %c2_50 = arith.constant 2 : index
    %c0_51 = arith.constant 0 : index
    %c0_52 = arith.constant 0 : index
    %57 = vector.load %arg2[%c2_49, %c2_50, %c0_51, %c0_52] : memref<3x3x4x8xbf16, #tpu.memory_space<vmem>>, vector<1x1x4x8xbf16>
    %58 = vector.shape_cast %57 : vector<1x1x4x8xbf16> to vector<4x8xbf16>
    %cst_53 = arith.constant dense<0.000000e+00> : vector<256x8xf32>
    %59 = tpu.matmul %56, %58, %cst_53 {dimension_numbers = #tpu.dot_dimension_numbers<[1], [0], [0], [1], [0, 0, 1, 1], [], []>} : vector<256x4xbf16>, vector<4x8xbf16>, vector<256x8xf32> -> vector<256x8xf32>
    %60 = arith.addf %54, %59 : vector<256x8xf32>
    %c0_54 = arith.constant 0 : index
    %c0_55 = arith.constant 0 : index
    %61 = vector.load %arg3[%c0_54, %c0_55] : memref<1x8xf32, #tpu.memory_space<vmem>>, vector<1x8xf32>
    %62 = vector.broadcast %61 : vector<1x8xf32> to vector<256x8xf32>
    %63 = arith.addf %60, %62 : vector<256x8xf32>
    %cst_56 = arith.constant 0.000000e+00 : f32
    %64 = vector.broadcast %cst_56 : f32 to vector<256x8xf32>
    %65 = arith.maximumf %63, %64 : vector<256x8xf32>
    %cst_57 = arith.constant 0.000000e+00 : bf16
    %66 = vector.broadcast %cst_57 : bf16 to vector<1x18x8xbf16>
    %cst_58 = arith.constant 0.000000e+00 : bf16
    %67 = vector.broadcast %cst_58 : bf16 to vector<16x1x8xbf16>
    %c0_59 = arith.constant 0 : index
    %c0_60 = arith.constant 0 : index
    %c0_61 = arith.constant 0 : index
    %68 = vector.load %arg7[%c0_59, %c0_60, %c0_61] : memref<18x18x8xbf16, #tpu.memory_space<vmem>>, vector<1x18x8xbf16>
    tpu.vector_store %arg7[%c0_59, %c0_60, %c0_61], %66 {strides = array<i32>} : memref<18x18x8xbf16, #tpu.memory_space<vmem>>, vector<1x18x8xbf16>,
    %c17 = arith.constant 17 : index
    %c0_62 = arith.constant 0 : index
    %c0_63 = arith.constant 0 : index
    %69 = vector.load %arg7[%c17, %c0_62, %c0_63] : memref<18x18x8xbf16, #tpu.memory_space<vmem>>, vector<1x18x8xbf16>
    tpu.vector_store %arg7[%c17, %c0_62, %c0_63], %66 {strides = array<i32>} : memref<18x18x8xbf16, #tpu.memory_space<vmem>>, vector<1x18x8xbf16>,
    %c1_64 = arith.constant 1 : index
    %c0_65 = arith.constant 0 : index
    %c0_66 = arith.constant 0 : index
    %70 = vector.load %arg7[%c1_64, %c0_65, %c0_66] : memref<18x18x8xbf16, #tpu.memory_space<vmem>>, vector<16x1x8xbf16>
    tpu.vector_store %arg7[%c1_64, %c0_65, %c0_66], %67 {strides = array<i32>} : memref<18x18x8xbf16, #tpu.memory_space<vmem>>, vector<16x1x8xbf16>,
    %c1_67 = arith.constant 1 : index
    %c17_68 = arith.constant 17 : index
    %c0_69 = arith.constant 0 : index
    %71 = vector.load %arg7[%c1_67, %c17_68, %c0_69] : memref<18x18x8xbf16, #tpu.memory_space<vmem>>, vector<16x1x8xbf16>
    tpu.vector_store %arg7[%c1_67, %c17_68, %c0_69], %67 {strides = array<i32>} : memref<18x18x8xbf16, #tpu.memory_space<vmem>>, vector<16x1x8xbf16>,
    %72 = vector.shape_cast %65 : vector<256x8xf32> to vector<16x16x8xf32>
    %73 = arith.truncf %72 : vector<16x16x8xf32> to vector<16x16x8xbf16>
    %c1_70 = arith.constant 1 : index
    %c1_71 = arith.constant 1 : index
    %c0_72 = arith.constant 0 : index
    %74 = vector.load %arg7[%c1_70, %c1_71, %c0_72] : memref<18x18x8xbf16, #tpu.memory_space<vmem>>, vector<16x16x8xbf16>
    tpu.vector_store %arg7[%c1_70, %c1_71, %c0_72], %73 {strides = array<i32>} : memref<18x18x8xbf16, #tpu.memory_space<vmem>>, vector<16x16x8xbf16>,
    %c0_73 = arith.constant 0 : index
    %c0_74 = arith.constant 0 : index
    %c0_75 = arith.constant 0 : index
    %75 = vector.load %arg7[%c0_73, %c0_74, %c0_75] : memref<18x18x8xbf16, #tpu.memory_space<vmem>>, vector<18x16x8xbf16>
    %c0_76 = arith.constant 0 : index
    %c1_77 = arith.constant 1 : index
    %c0_78 = arith.constant 0 : index
    %76 = vector.load %arg7[%c0_76, %c1_77, %c0_78] : memref<18x18x8xbf16, #tpu.memory_space<vmem>>, vector<18x16x8xbf16>
    %c0_79 = arith.constant 0 : index
    %c2_80 = arith.constant 2 : index
    %c0_81 = arith.constant 0 : index
    %77 = vector.load %arg7[%c0_79, %c2_80, %c0_81] : memref<18x18x8xbf16, #tpu.memory_space<vmem>>, vector<18x16x8xbf16>
    %cst_82 = arith.constant 0.000000e+00 : f32
    %78 = vector.broadcast %cst_82 : f32 to vector<256x8xf32>
    %79 = vector.extract_strided_slice %75 {offsets = [0, 0, 0], sizes = [16, 16, 8], strides = [1, 1, 1]} : vector<18x16x8xbf16> to vector<16x16x8xbf16>
    %80 = vector.shape_cast %79 : vector<16x16x8xbf16> to vector<256x8xbf16>
    %c0_83 = arith.constant 0 : index
    %c0_84 = arith.constant 0 : index
    %c0_85 = arith.constant 0 : index
    %c0_86 = arith.constant 0 : index
    %81 = vector.load %arg4[%c0_83, %c0_84, %c0_85, %c0_86] : memref<3x3x8x8xbf16, #tpu.memory_space<vmem>>, vector<1x1x8x8xbf16>
    %82 = vector.shape_cast %81 : vector<1x1x8x8xbf16> to vector<8x8xbf16>
    %cst_87 = arith.constant dense<0.000000e+00> : vector<256x8xf32>
    %83 = tpu.matmul %80, %82, %cst_87 {dimension_numbers = #tpu.dot_dimension_numbers<[1], [0], [0], [1], [0, 0, 1, 1], [], []>} : vector<256x8xbf16>, vector<8x8xbf16>, vector<256x8xf32> -> vector<256x8xf32>
    %84 = arith.addf %78, %83 : vector<256x8xf32>
    %85 = vector.extract_strided_slice %76 {offsets = [0, 0, 0], sizes = [16, 16, 8], strides = [1, 1, 1]} : vector<18x16x8xbf16> to vector<16x16x8xbf16>
    %86 = vector.shape_cast %85 : vector<16x16x8xbf16> to vector<256x8xbf16>
    %c0_88 = arith.constant 0 : index
    %c1_89 = arith.constant 1 : index
    %c0_90 = arith.constant 0 : index
    %c0_91 = arith.constant 0 : index
    %87 = vector.load %arg4[%c0_88, %c1_89, %c0_90, %c0_91] : memref<3x3x8x8xbf16, #tpu.memory_space<vmem>>, vector<1x1x8x8xbf16>
    %88 = vector.shape_cast %87 : vector<1x1x8x8xbf16> to vector<8x8xbf16>
    %cst_92 = arith.constant dense<0.000000e+00> : vector<256x8xf32>
    %89 = tpu.matmul %86, %88, %cst_92 {dimension_numbers = #tpu.dot_dimension_numbers<[1], [0], [0], [1], [0, 0, 1, 1], [], []>} : vector<256x8xbf16>, vector<8x8xbf16>, vector<256x8xf32> -> vector<256x8xf32>
    %90 = arith.addf %84, %89 : vector<256x8xf32>
    %91 = vector.extract_strided_slice %77 {offsets = [0, 0, 0], sizes = [16, 16, 8], strides = [1, 1, 1]} : vector<18x16x8xbf16> to vector<16x16x8xbf16>
    %92 = vector.shape_cast %91 : vector<16x16x8xbf16> to vector<256x8xbf16>
    %c0_93 = arith.constant 0 : index
    %c2_94 = arith.constant 2 : index
    %c0_95 = arith.constant 0 : index
    %c0_96 = arith.constant 0 : index
    %93 = vector.load %arg4[%c0_93, %c2_94, %c0_95, %c0_96] : memref<3x3x8x8xbf16, #tpu.memory_space<vmem>>, vector<1x1x8x8xbf16>
    %94 = vector.shape_cast %93 : vector<1x1x8x8xbf16> to vector<8x8xbf16>
    %cst_97 = arith.constant dense<0.000000e+00> : vector<256x8xf32>
    %95 = tpu.matmul %92, %94, %cst_97 {dimension_numbers = #tpu.dot_dimension_numbers<[1], [0], [0], [1], [0, 0, 1, 1], [], []>} : vector<256x8xbf16>, vector<8x8xbf16>, vector<256x8xf32> -> vector<256x8xf32>
    %96 = arith.addf %90, %95 : vector<256x8xf32>
    %97 = vector.extract_strided_slice %75 {offsets = [1, 0, 0], sizes = [16, 16, 8], strides = [1, 1, 1]} : vector<18x16x8xbf16> to vector<16x16x8xbf16>
    %98 = vector.shape_cast %97 : vector<16x16x8xbf16> to vector<256x8xbf16>
    %c1_98 = arith.constant 1 : index
    %c0_99 = arith.constant 0 : index
    %c0_100 = arith.constant 0 : index
    %c0_101 = arith.constant 0 : index
    %99 = vector.load %arg4[%c1_98, %c0_99, %c0_100, %c0_101] : memref<3x3x8x8xbf16, #tpu.memory_space<vmem>>, vector<1x1x8x8xbf16>
    %100 = vector.shape_cast %99 : vector<1x1x8x8xbf16> to vector<8x8xbf16>
    %cst_102 = arith.constant dense<0.000000e+00> : vector<256x8xf32>
    %101 = tpu.matmul %98, %100, %cst_102 {dimension_numbers = #tpu.dot_dimension_numbers<[1], [0], [0], [1], [0, 0, 1, 1], [], []>} : vector<256x8xbf16>, vector<8x8xbf16>, vector<256x8xf32> -> vector<256x8xf32>
    %102 = arith.addf %96, %101 : vector<256x8xf32>
    %103 = vector.extract_strided_slice %76 {offsets = [1, 0, 0], sizes = [16, 16, 8], strides = [1, 1, 1]} : vector<18x16x8xbf16> to vector<16x16x8xbf16>
    %104 = vector.shape_cast %103 : vector<16x16x8xbf16> to vector<256x8xbf16>
    %c1_103 = arith.constant 1 : index
    %c1_104 = arith.constant 1 : index
    %c0_105 = arith.constant 0 : index
    %c0_106 = arith.constant 0 : index
    %105 = vector.load %arg4[%c1_103, %c1_104, %c0_105, %c0_106] : memref<3x3x8x8xbf16, #tpu.memory_space<vmem>>, vector<1x1x8x8xbf16>
    %106 = vector.shape_cast %105 : vector<1x1x8x8xbf16> to vector<8x8xbf16>
    %cst_107 = arith.constant dense<0.000000e+00> : vector<256x8xf32>
    %107 = tpu.matmul %104, %106, %cst_107 {dimension_numbers = #tpu.dot_dimension_numbers<[1], [0], [0], [1], [0, 0, 1, 1], [], []>} : vector<256x8xbf16>, vector<8x8xbf16>, vector<256x8xf32> -> vector<256x8xf32>
    %108 = arith.addf %102, %107 : vector<256x8xf32>
    %109 = vector.extract_strided_slice %77 {offsets = [1, 0, 0], sizes = [16, 16, 8], strides = [1, 1, 1]} : vector<18x16x8xbf16> to vector<16x16x8xbf16>
    %110 = vector.shape_cast %109 : vector<16x16x8xbf16> to vector<256x8xbf16>
    %c1_108 = arith.constant 1 : index
    %c2_109 = arith.constant 2 : index
    %c0_110 = arith.constant 0 : index
    %c0_111 = arith.constant 0 : index
    %111 = vector.load %arg4[%c1_108, %c2_109, %c0_110, %c0_111] : memref<3x3x8x8xbf16, #tpu.memory_space<vmem>>, vector<1x1x8x8xbf16>
    %112 = vector.shape_cast %111 : vector<1x1x8x8xbf16> to vector<8x8xbf16>
    %cst_112 = arith.constant dense<0.000000e+00> : vector<256x8xf32>
    %113 = tpu.matmul %110, %112, %cst_112 {dimension_numbers = #tpu.dot_dimension_numbers<[1], [0], [0], [1], [0, 0, 1, 1], [], []>} : vector<256x8xbf16>, vector<8x8xbf16>, vector<256x8xf32> -> vector<256x8xf32>
    %114 = arith.addf %108, %113 : vector<256x8xf32>
    %115 = vector.extract_strided_slice %75 {offsets = [2, 0, 0], sizes = [16, 16, 8], strides = [1, 1, 1]} : vector<18x16x8xbf16> to vector<16x16x8xbf16>
    %116 = vector.shape_cast %115 : vector<16x16x8xbf16> to vector<256x8xbf16>
    %c2_113 = arith.constant 2 : index
    %c0_114 = arith.constant 0 : index
    %c0_115 = arith.constant 0 : index
    %c0_116 = arith.constant 0 : index
    %117 = vector.load %arg4[%c2_113, %c0_114, %c0_115, %c0_116] : memref<3x3x8x8xbf16, #tpu.memory_space<vmem>>, vector<1x1x8x8xbf16>
    %118 = vector.shape_cast %117 : vector<1x1x8x8xbf16> to vector<8x8xbf16>
    %cst_117 = arith.constant dense<0.000000e+00> : vector<256x8xf32>
    %119 = tpu.matmul %116, %118, %cst_117 {dimension_numbers = #tpu.dot_dimension_numbers<[1], [0], [0], [1], [0, 0, 1, 1], [], []>} : vector<256x8xbf16>, vector<8x8xbf16>, vector<256x8xf32> -> vector<256x8xf32>
    %120 = arith.addf %114, %119 : vector<256x8xf32>
    %121 = vector.extract_strided_slice %76 {offsets = [2, 0, 0], sizes = [16, 16, 8], strides = [1, 1, 1]} : vector<18x16x8xbf16> to vector<16x16x8xbf16>
    %122 = vector.shape_cast %121 : vector<16x16x8xbf16> to vector<256x8xbf16>
    %c2_118 = arith.constant 2 : index
    %c1_119 = arith.constant 1 : index
    %c0_120 = arith.constant 0 : index
    %c0_121 = arith.constant 0 : index
    %123 = vector.load %arg4[%c2_118, %c1_119, %c0_120, %c0_121] : memref<3x3x8x8xbf16, #tpu.memory_space<vmem>>, vector<1x1x8x8xbf16>
    %124 = vector.shape_cast %123 : vector<1x1x8x8xbf16> to vector<8x8xbf16>
    %cst_122 = arith.constant dense<0.000000e+00> : vector<256x8xf32>
    %125 = tpu.matmul %122, %124, %cst_122 {dimension_numbers = #tpu.dot_dimension_numbers<[1], [0], [0], [1], [0, 0, 1, 1], [], []>} : vector<256x8xbf16>, vector<8x8xbf16>, vector<256x8xf32> -> vector<256x8xf32>
    %126 = arith.addf %120, %125 : vector<256x8xf32>
    %127 = vector.extract_strided_slice %77 {offsets = [2, 0, 0], sizes = [16, 16, 8], strides = [1, 1, 1]} : vector<18x16x8xbf16> to vector<16x16x8xbf16>
    %128 = vector.shape_cast %127 : vector<16x16x8xbf16> to vector<256x8xbf16>
    %c2_123 = arith.constant 2 : index
    %c2_124 = arith.constant 2 : index
    %c0_125 = arith.constant 0 : index
    %c0_126 = arith.constant 0 : index
    %129 = vector.load %arg4[%c2_123, %c2_124, %c0_125, %c0_126] : memref<3x3x8x8xbf16, #tpu.memory_space<vmem>>, vector<1x1x8x8xbf16>
    %130 = vector.shape_cast %129 : vector<1x1x8x8xbf16> to vector<8x8xbf16>
    %cst_127 = arith.constant dense<0.000000e+00> : vector<256x8xf32>
    %131 = tpu.matmul %128, %130, %cst_127 {dimension_numbers = #tpu.dot_dimension_numbers<[1], [0], [0], [1], [0, 0, 1, 1], [], []>} : vector<256x8xbf16>, vector<8x8xbf16>, vector<256x8xf32> -> vector<256x8xf32>
    %132 = arith.addf %126, %131 : vector<256x8xf32>
    %c0_128 = arith.constant 0 : index
    %c0_129 = arith.constant 0 : index
    %133 = vector.load %arg5[%c0_128, %c0_129] : memref<1x8xf32, #tpu.memory_space<vmem>>, vector<1x8xf32>
    %134 = vector.broadcast %133 : vector<1x8xf32> to vector<256x8xf32>
    %135 = arith.addf %132, %134 : vector<256x8xf32>
    %cst_130 = arith.constant 0.000000e+00 : f32
    %136 = vector.broadcast %cst_130 : f32 to vector<256x8xf32>
    %137 = arith.maximumf %135, %136 : vector<256x8xf32>
    %138 = vector.shape_cast %137 : vector<256x8xf32> to vector<16x16x8xf32>
    %c0_131 = arith.constant 0 : index
    %c0_132 = arith.constant 0 : index
    %c0_133 = arith.constant 0 : index
    %c0_134 = arith.constant 0 : index
    %139 = vector.load %arg6[%c0_131, %c0_132, %c0_133, %c0_134] : memref<1x16x16x8xf32, #tpu.memory_space<vmem>>, vector<1x16x16x8xf32>
    %140 = vector.shape_cast %139 : vector<1x16x16x8xf32> to vector<16x16x8xf32>
    %141 = vector.shape_cast %138 : vector<16x16x8xf32> to vector<1x16x16x8xf32>
    tpu.vector_store %arg6[%c0_131, %c0_132, %c0_133, %c0_134], %141 {strides = array<i32>} : memref<1x16x16x8xf32, #tpu.memory_space<vmem>>, vector<1x16x16x8xf32>,
    return
  }
  func.func @transform_0(%arg0: i32) -> (i32, i32, i32, i32) {
    %c0_i32 = arith.constant 0 : i32
    %c0_i32_0 = arith.constant 0 : i32
    %c0_i32_1 = arith.constant 0 : i32
    %c0_i32_2 = arith.constant 0 : i32
    return %arg0, %c0_i32, %c0_i32_0, %c0_i32_1 : i32, i32, i32, i32
  }
  func.func @transform_1(%arg0: i32) -> (i32, i32, i32, i32) {
    %c0_i32 = arith.constant 0 : i32
    %c0_i32_0 = arith.constant 0 : i32
    %c0_i32_1 = arith.constant 0 : i32
    %c0_i32_2 = arith.constant 0 : i32
    %c0_i32_3 = arith.constant 0 : i32
    return %c0_i32, %c0_i32_0, %c0_i32_1, %c0_i32_2 : i32, i32, i32, i32
  }
  func.func @transform_2(%arg0: i32) -> (i32, i32) {
    %c0_i32 = arith.constant 0 : i32
    %c0_i32_0 = arith.constant 0 : i32
    %c0_i32_1 = arith.constant 0 : i32
    return %c0_i32, %c0_i32_0 : i32, i32
  }
  func.func @transform_3(%arg0: i32) -> (i32, i32, i32, i32) {
    %c0_i32 = arith.constant 0 : i32
    %c0_i32_0 = arith.constant 0 : i32
    %c0_i32_1 = arith.constant 0 : i32
    %c0_i32_2 = arith.constant 0 : i32
    %c0_i32_3 = arith.constant 0 : i32
    return %c0_i32, %c0_i32_0, %c0_i32_1, %c0_i32_2 : i32, i32, i32, i32
  }
  func.func @transform_4(%arg0: i32) -> (i32, i32) {
    %c0_i32 = arith.constant 0 : i32
    %c0_i32_0 = arith.constant 0 : i32
    %c0_i32_1 = arith.constant 0 : i32
    return %c0_i32, %c0_i32_0 : i32, i32
  }
  func.func @transform_5(%arg0: i32) -> (i32, i32, i32, i32) {
    %c0_i32 = arith.constant 0 : i32
    %c0_i32_0 = arith.constant 0 : i32
    %c0_i32_1 = arith.constant 0 : i32
    %c0_i32_2 = arith.constant 0 : i32
    return %arg0, %c0_i32, %c0_i32_0, %c0_i32_1 : i32, i32, i32, i32
  }
}

</mosaic_0001>

<llo_original>
// kernel: tpu_custom_call.1
$region0: #{tpu_custom_call.1}
  #allocation0 [shape = 'u32[]', space=smem, size = 0x4, offset = 0x4, fixed_abs, tag = 'smem constant byte address 0x4 - core index']
  #allocation1 [shape = 'u32[144,128]{1,0:T(1,128)}', space=vmem, size = 0x12000, scoped, tag = 'internal scratch']
  #allocation2 [shape = 'bf16[18,18,8]{2,1,0:T(8,128)(2,1)}', space=vmem, size = 0x1b000, scoped, tag = 'scratch operand']
  %s0 = inlined_call_operand.vmem [shape: bf16[2,18,18,4], index: 0, kind: input, shape index: {}]
  %s1 = inlined_call_operand.vmem [shape: bf16[3,3,4,8], index: 1, kind: input, shape index: {}]
  %s2 = inlined_call_operand.vmem [shape: f32[1,8], index: 2, kind: input, shape index: {}]
  %s3 = inlined_call_operand.vmem [shape: bf16[3,3,8,8], index: 3, kind: input, shape index: {}]
  %s4 = inlined_call_operand.vmem [shape: f32[1,8], index: 4, kind: input, shape index: {}]
  %s5 = inlined_call_operand.vmem [shape: f32[2,16,16,8], index: 5, kind: output, shape index: {}]
  %s6 = sld [smem:[#allocation0]]
  $region53: #{tpu_custom_call.1} parent=0
    _
  %s8 = ssub.s32 1, %s6
  %s9 = scalar_select 0, %s8, %s6
  loop: start=0, step=1, limit=4
  $region2: #{tpu_custom_call.1} parent=0 // loop_pre_header
    _
  $region3: #{tpu_custom_call.1} parent=0 // loop_header
    %s11 = sphi 0, %s15
    %p12 = scmp.ge.s32.totalorder %s11, 4
    %s21 = sphi 0, %s23
    %s24 = sphi 0, %s21
    %s25 = sphi 0, %s24
    %s41 = sphi 0, %s25
    %s45 = sphi 0, %s45
    %s47 = sphi 0, %s45
    %s48 = sphi 0, %s47
    %s62 = sphi 0, %s48
    %s66 = sphi 0, %s66
    %s68 = sphi 0, %s66
    %s69 = sphi 0, %s68
    %s83 = sphi 0, %s69
    %s87 = sphi 0, %s87
    %s89 = sphi 0, %s87
    %s90 = sphi 0, %s89
    %s104 = sphi 0, %s90
    %s108 = sphi 0, %s108
    %s110 = sphi 0, %s108
    %s111 = sphi 0, %s110
    %s125 = sphi 0, %s111
    %s131 = sphi 0, %s133
    %s134 = sphi 0, %s131
    %s135 = sphi 0, %s134
    %s151 = sphi 0, %s135
  $region4: #{tpu_custom_call.1} parent=0 // loop_header_branch
    %14 = sbr.rel (%p12) target = $region8
  $region5: #{tpu_custom_call.1} parent=0 // loop_body
    %s16 = ssub.s32 %s11, 1
    %s17 = ssub.s32 %s11, 2
    %s18 = sadd.s32 %s11, 1
    %s19 = ssub.s32 %s11, %s18
    %p20 = scmp.eq.s32.totalorder %s19, 0
    %s22 = sadd.s32 %s21, 1
    %s23 = scalar_select %p20, %s21, %s22
    %p26 = pneg %p20
    %p27 = scmp.eq.s32.totalorder %s11, 1
    %p28 = por %p26, %p27
    %p29 = scmp.ne.s32.totalorder %s21, %s24
    %p30 = scmp.eq.s32.totalorder %s11, 0
    %p31 = por %p29, %p30
    %p32 = scmp.ne.s32.totalorder %s21, %s24
    %p33 = scmp.eq.s32.totalorder %s16, 1
    %p34 = por %p32, %p33
    %p35 = scmp.ne.s32.totalorder %s24, %s25
    %p36 = scmp.eq.s32.totalorder %s16, 0
    %p37 = por %p35, %p36
    %p38 = scmp.ne.s32.totalorder %s24, %s25
    %p39 = scmp.eq.s32.totalorder %s17, 1
    %p40 = por %p38, %p39
    %p42 = scmp.ne.s32.totalorder %s25, %s41
    %p43 = scmp.eq.s32.totalorder %s17, 0
    %p44 = por %p42, %p43
    %s46 = sadd.s32 %s45, 1
    %p49 = scmp.eq.s32.totalorder %s11, 1
    %p50 = scmp.ne.s32.totalorder %s45, %s47
    %p51 = scmp.eq.s32.totalorder %s11, 0
    %p52 = por %p50, %p51
    %p53 = scmp.ne.s32.totalorder %s45, %s47
    %p54 = scmp.eq.s32.totalorder %s16, 1
    %p55 = por %p53, %p54
    %p56 = scmp.ne.s32.totalorder %s47, %s48
    %p57 = scmp.eq.s32.totalorder %s16, 0
    %p58 = por %p56, %p57
    %p59 = scmp.ne.s32.totalorder %s47, %s48
    %p60 = scmp.eq.s32.totalorder %s17, 1
    %p61 = por %p59, %p60
    %p63 = scmp.ne.s32.totalorder %s48, %s62
    %p64 = scmp.eq.s32.totalorder %s17, 0
    %p65 = por %p63, %p64
    %s67 = sadd.s32 %s66, 1
    %p70 = scmp.eq.s32.totalorder %s11, 1
    %p71 = scmp.ne.s32.totalorder %s66, %s68
    %p72 = scmp.eq.s32.totalorder %s11, 0
    %p73 = por %p71, %p72
    %p74 = scmp.ne.s32.totalorder %s66, %s68
    %p75 = scmp.eq.s32.totalorder %s16, 1
    %p76 = por %p74, %p75
    %p77 = scmp.ne.s32.totalorder %s68, %s69
    %p78 = scmp.eq.s32.totalorder %s16, 0
    %p79 = por %p77, %p78
    %p80 = scmp.ne.s32.totalorder %s68, %s69
    %p81 = scmp.eq.s32.totalorder %s17, 1
    %p82 = por %p80, %p81
    %p84 = scmp.ne.s32.totalorder %s69, %s83
    %p85 = scmp.eq.s32.totalorder %s17, 0
    %p86 = por %p84, %p85
    %s88 = sadd.s32 %s87, 1
    %p91 = scmp.eq.s32.totalorder %s11, 1
    %p92 = scmp.ne.s32.totalorder %s87, %s89
    %p93 = scmp.eq.s32.totalorder %s11, 0
    %p94 = por %p92, %p93
    %p95 = scmp.ne.s32.totalorder %s87, %s89
    %p96 = scmp.eq.s32.totalorder %s16, 1
    %p97 = por %p95, %p96
    %p98 = scmp.ne.s32.totalorder %s89, %s90
    %p99 = scmp.eq.s32.totalorder %s16, 0
    %p100 = por %p98, %p99
    %p101 = scmp.ne.s32.totalorder %s89, %s90
    %p102 = scmp.eq.s32.totalorder %s17, 1
    %p103 = por %p101, %p102
    %p105 = scmp.ne.s32.totalorder %s90, %s104
    %p106 = scmp.eq.s32.totalorder %s17, 0
    %p107 = por %p105, %p106
    %s109 = sadd.s32 %s108, 1
    %p112 = scmp.eq.s32.totalorder %s11, 1
    %p113 = scmp.ne.s32.totalorder %s108, %s110
    %p114 = scmp.eq.s32.totalorder %s11, 0
    %p115 = por %p113, %p114
    %p116 = scmp.ne.s32.totalorder %s108, %s110
    %p117 = scmp.eq.s32.totalorder %s16, 1
    %p118 = por %p116, %p117
    %p119 = scmp.ne.s32.totalorder %s110, %s111
    %p120 = scmp.eq.s32.totalorder %s16, 0
    %p121 = por %p119, %p120
    %p122 = scmp.ne.s32.totalorder %s110, %s111
    %p123 = scmp.eq.s32.totalorder %s17, 1
    %p124 = por %p122, %p123
    %p126 = scmp.ne.s32.totalorder %s111, %s125
    %p127 = scmp.eq.s32.totalorder %s17, 0
    %p128 = por %p126, %p127
    %s129 = ssub.s32 %s11, %s18
    %p130 = scmp.eq.s32.totalorder %s129, 0
    %s132 = sadd.s32 %s131, 1
    %s133 = scalar_select %p130, %s131, %s132
    %p136 = pneg %p130
    %p137 = scmp.eq.s32.totalorder %s11, 1
    %p138 = por %p136, %p137
    %p139 = scmp.ne.s32.totalorder %s131, %s134
    %p140 = scmp.eq.s32.totalorder %s11, 0
    %p141 = por %p139, %p140
    %p142 = scmp.ne.s32.totalorder %s131, %s134
    %p143 = scmp.eq.s32.totalorder %s16, 1
    %p144 = por %p142, %p143
    %p145 = scmp.ne.s32.totalorder %s134, %s135
    %p146 = scmp.eq.s32.totalorder %s16, 0
    %p147 = por %p145, %p146
    %p148 = scmp.ne.s32.totalorder %s134, %s135
    %p149 = scmp.eq.s32.totalorder %s17, 1
    %p150 = por %p148, %p149
    %p152 = scmp.ne.s32.totalorder %s135, %s151
    %p153 = scmp.eq.s32.totalorder %s17, 0
    %p154 = por %p152, %p153
    %p155 = scmp.le.s32.totalorder 1, %s11
    %p156 = scmp.lt.s32.totalorder %s11, 3
    %p157 = pnand %p155, %p156
    %p158 = pneg %p157
    // Predicated region
    $region9: #{tpu_custom_call.1} parent=5 // pred_check
      _
    $region10: #{tpu_custom_call.1} parent=5 // pred_check_branch
      %160 = sbr.rel (%p157) target = $region12
    $region11: #{tpu_custom_call.1} parent=5 // pred_region
      %s161 = ssub.s32 %s11, 1
      // Predicated region
      $region13: #{tpu_custom_call.1} parent=11 // pred_check
        %p162 = pneg %p58
      $region14: #{tpu_custom_call.1} parent=11 // pred_check_branch
        %164 = sbr.rel (%p162) target = $region16
      $region15: #{tpu_custom_call.1} parent=11 // pred_region
        _
      $region16: #{tpu_custom_call.1} parent=11 // pred_fallthru
        _
      // Predicated region
      $region17: #{tpu_custom_call.1} parent=11 // pred_check
        %p165 = pneg %p79
      $region18: #{tpu_custom_call.1} parent=11 // pred_check_branch
        %167 = sbr.rel (%p165) target = $region20
      $region19: #{tpu_custom_call.1} parent=11 // pred_region
        _
      $region20: #{tpu_custom_call.1} parent=11 // pred_fallthru
        _
      // Predicated region
      $region21: #{tpu_custom_call.1} parent=11 // pred_check
        %p168 = pneg %p100
      $region22: #{tpu_custom_call.1} parent=11 // pred_check_branch
        %170 = sbr.rel (%p168) target = $region24
      $region23: #{tpu_custom_call.1} parent=11 // pred_region
        _
      $region24: #{tpu_custom_call.1} parent=11 // pred_fallthru
        _
      // Predicated region
      $region25: #{tpu_custom_call.1} parent=11 // pred_check
        %p171 = pneg %p121
      $region26: #{tpu_custom_call.1} parent=11 // pred_check_branch
        %173 = sbr.rel (%p171) target = $region28
      $region27: #{tpu_custom_call.1} parent=11 // pred_region
        _
      $region28: #{tpu_custom_call.1} parent=11 // pred_fallthru
        _
    $region12: #{tpu_custom_call.1} parent=5 // pred_fallthru
      _
    %p174 = scmp.lt.s32.totalorder %s11, 2
    // Predicated region
    $region29: #{tpu_custom_call.1} parent=5 // pred_check
      %p175 = pneg %p174
    $region30: #{tpu_custom_call.1} parent=5 // pred_check_branch
      %177 = sbr.rel (%p175) target = $region32
    $region31: #{tpu_custom_call.1} parent=5 // pred_region
      // Predicated region
      $region33: #{tpu_custom_call.1} parent=31 // pred_check
        %p178 = pneg %p31
      $region34: #{tpu_custom_call.1} parent=31 // pred_check_branch
        %180 = sbr.rel (%p178) target = $region36
      $region35: #{tpu_custom_call.1} parent=31 // pred_region
        %p181 = scmp.lt.s32.totalorder %s11, 1
        %s182 = scalar_select %p181, %s11, 1
        %s183 = smul.addr %s182, 54
        %s184 = smul.addr %s183, 4
        %s185 = scalar_lea.vmem %s0, %s184
      $region36: #{tpu_custom_call.1} parent=31 // pred_fallthru
        _
    $region32: #{tpu_custom_call.1} parent=5 // pred_fallthru
      _
    %p186 = scmp.le.s32.totalorder 1, %s11
    %p187 = scmp.lt.s32.totalorder %s11, 3
    %p188 = pnand %p186, %p187
    %p189 = pneg %p188
    // Predicated region
    $region37: #{tpu_custom_call.1} parent=5 // pred_check
      _
    $region38: #{tpu_custom_call.1} parent=5 // pred_check_branch
      %191 = sbr.rel (%p188) target = $region40
    $region39: #{tpu_custom_call.1} parent=5 // pred_region
      %s192 = ssub.s32 %s11, 1
      %p193 = scmp.lt.s32.totalorder %s16, 1
      %s194 = scalar_select %p193, %s16, 1
      %s195 = smul.addr %s194, 54
      %s196 = smul.addr %s195, 4
      %s197 = scalar_lea.vmem %s0, %s196
      %p198 = pneg %p37
      %p199 = pneg %p34
      %p200 = pneg %p58
      %p201 = pneg %p55
      %p202 = pneg %p79
      %p203 = pneg %p76
      %p204 = pneg %p100
      %p205 = pneg %p97
      %p206 = pneg %p121
      %p207 = pneg %p118
      %p208 = pneg %p147
      %p209 = pneg %p144
      %p210 = scmp.lt.s32.totalorder %s16, 1
      %s211 = scalar_select %p210, %s16, 1
      %s212 = smul.addr %s211, 32
      %s213 = smul.addr %s212, 8
      %s214 = scalar_lea.vmem %s5, %s213
      %p215 = scmp.lt.s32.totalorder %s16, 1
      %s216 = scalar_select %p215, %s16, 1
      %s217 = smul.addr %s216, 54
      %s218 = smul.addr %s217, 4
      %s219 = scalar_lea.vmem %s0, %s218
      %p220 = scmp.lt.s32.totalorder %s16, 1
      %s221 = scalar_select %p220, %s16, 1
      %s222 = smul.addr %s221, 32
      %s223 = smul.addr %s222, 8
      %s224 = scalar_lea.vmem %s5, %s223
      %v226 = vld [vmem:[%s219] sm:$0xf]
      %v227 = vld [vmem:[%s219 + $0x4] sm:$0xf]
      %v228 = vld [vmem:[%s219 + $0xc] sm:$0xf]
      %v229 = vld [vmem:[%s219 + $0x10] sm:$0xf]
      %v230 = vld [vmem:[%s219 + $0x18] sm:$0xf]
      %v231 = vld [vmem:[%s219 + $0x1c] sm:$0xf]
      %v232 = vld [vmem:[%s219 + $0x24] sm:$0xf]
      %v233 = vld [vmem:[%s219 + $0x28] sm:$0xf]
      %v234 = vld [vmem:[%s219 + $0x30] sm:$0xf]
      %v235 = vld [vmem:[%s219 + $0x34] sm:$0xf]
      %v236 = vld [vmem:[%s219 + $0x3c] sm:$0xf]
      %v237 = vld [vmem:[%s219 + $0x40] sm:$0xf]
      %v238 = vld [vmem:[%s219 + $0x48] sm:$0xf]
      %v239 = vld [vmem:[%s219 + $0x4c] sm:$0xf]
      %v240 = vld [vmem:[%s219 + $0x54] sm:$0xf]
      %v241 = vld [vmem:[%s219 + $0x58] sm:$0xf]
      %v242 = vld [vmem:[%s219 + $0x60] sm:$0xf]
      %v243 = vld [vmem:[%s219 + $0x64] sm:$0xf]
      %v244 = vld [vmem:[%s219 + $0x6c] sm:$0xf]
      %v245 = vld [vmem:[%s219 + $0x70] sm:$0xf]
      %v246 = vld [vmem:[%s219 + $0x78] sm:$0xf]
      %v247 = vld [vmem:[%s219 + $0x7c] sm:$0xf]
      %v248 = vld [vmem:[%s219 + $0x84] sm:$0xf]
      %v249 = vld [vmem:[%s219 + $0x88] sm:$0xf]
      %v250 = vld [vmem:[%s219 + $0x90] sm:$0xf]
      %v251 = vld [vmem:[%s219 + $0x94] sm:$0xf]
      %v252 = vld [vmem:[%s219 + $0x9c] sm:$0xf]
      %v253 = vld [vmem:[%s219 + $0xa0] sm:$0xf]
      %v254 = vld [vmem:[%s219 + $0xa8] sm:$0xf]
      %v255 = vld [vmem:[%s219 + $0xac] sm:$0xf]
      %v256 = vld [vmem:[%s219 + $0xb4] sm:$0xf]
      %v257 = vld [vmem:[%s219 + $0xb8] sm:$0xf]
      %v258 = vld [vmem:[%s219 + $0xc0] sm:$0xf]
      %v259 = vld [vmem:[%s219 + $0xc4] sm:$0xf]
      %v260 = vld [vmem:[%s219 + $0xcc] sm:$0xf]
      %v261 = vld [vmem:[%s219 + $0xd0] sm:$0xf]
      %v262 = vld [vmem:[%s219 + $0x8] sm:$0x1]
      %v263 = vld [vmem:[%s219 + $0x14] sm:$0x1]
      %v264 = vld [vmem:[%s219 + $0x20] sm:$0x1]
      %v265 = vld [vmem:[%s219 + $0x2c] sm:$0x1]
      %v266 = vld [vmem:[%s219 + $0x38] sm:$0x1]
      %v267 = vld [vmem:[%s219 + $0x44] sm:$0x1]
      %v268 = vld [vmem:[%s219 + $0x50] sm:$0x1]
      %v269 = vld [vmem:[%s219 + $0x5c] sm:$0x1]
      %v270 = vld [vmem:[%s219 + $0x68] sm:$0x1]
      %v271 = vld [vmem:[%s219 + $0x74] sm:$0x1]
      %v272 = vld [vmem:[%s219 + $0x80] sm:$0x1]
      %v273 = vld [vmem:[%s219 + $0x8c] sm:$0x1]
      %v274 = vld [vmem:[%s219 + $0x98] sm:$0x1]
      %v275 = vld [vmem:[%s219 + $0xa4] sm:$0x1]
      %v276 = vld [vmem:[%s219 + $0xb0] sm:$0x1]
      %v277 = vld [vmem:[%s219 + $0xbc] sm:$0x1]
      %v278 = vld [vmem:[%s219 + $0xc8] sm:$0x1]
      %v279 = vld [vmem:[%s219 + $0xd4] sm:$0x1]
      %v280 = vld [vmem:[%s219] sm:$0xe]
      %v281 = vld [vmem:[%s219 + $0xc] sm:$0xe]
      %v282 = vld [vmem:[%s219 + $0x18] sm:$0xe]
      %v283 = vld [vmem:[%s219 + $0x24] sm:$0xe]
      %v284 = vld [vmem:[%s219 + $0x30] sm:$0xe]
      %v285 = vld [vmem:[%s219 + $0x3c] sm:$0xe]
      %v286 = vld [vmem:[%s219 + $0x48] sm:$0xe]
      %v287 = vld [vmem:[%s219 + $0x54] sm:$0xe]
      %v288 = vld [vmem:[%s219 + $0x60] sm:$0xe]
      %v289 = vld [vmem:[%s219 + $0x6c] sm:$0xe]
      %v290 = vld [vmem:[%s219 + $0x78] sm:$0xe]
      %v291 = vld [vmem:[%s219 + $0x84] sm:$0xe]
      %v292 = vld [vmem:[%s219 + $0x90] sm:$0xe]
      %v293 = vld [vmem:[%s219 + $0x9c] sm:$0xe]
      %v294 = vld [vmem:[%s219 + $0xa8] sm:$0xe]
      %v295 = vld [vmem:[%s219 + $0xb4] sm:$0xe]
      %v296 = vld [vmem:[%s219 + $0xc0] sm:$0xe]
      %v297 = vld [vmem:[%s219 + $0xcc] sm:$0xe]
      %v298 = vld [vmem:[%s1] sm:$0x3]
      %vm299 = vsmask.f32 3328
      %vm300 = vsmask.f32 7440
      %vm301 = vmor %vm299, %vm300
      %v303 = vshrl.u32 %v226, 16
      %v305 = vrot.slane %v303, 4
      %v306 = vshll.u32 %v226, 16
      %v308 = vrot.slane %v306, 5
      %v309 = vor.u32 %v305, %v308
      %v310 = vrot.slane %v309, 4
      %v312 = vshll.u32 %v227, 16
      %v314 = vrot.slane %v312, 5
      %v315 = vsel %vm301, %v310, %v314
      %v316 = vshrl.u32 %v227, 16
      %v318 = vrot.slane %v316, 4
      %v319 = vor.u32 %v318, %v314
      %v320 = vrot.slane %v319, 4
      %v322 = vshll.u32 %v262, 16
      %v324 = vrot.slane %v322, 5
      %v325 = vsel %vm301, %v320, %v324
      %v327 = vshrl.u32 %v228, 16
      %v329 = vrot.slane %v327, 4
      %v330 = vshll.u32 %v228, 16
      %v332 = vrot.slane %v330, 5
      %v333 = vor.u32 %v329, %v332
      %v334 = vrot.slane %v333, 4
      %v336 = vshll.u32 %v229, 16
      %v338 = vrot.slane %v336, 5
      %v339 = vsel %vm301, %v334, %v338
      %v340 = vshrl.u32 %v229, 16
      %v342 = vrot.slane %v340, 4
      %v343 = vor.u32 %v342, %v338
      %v344 = vrot.slane %v343, 4
      %v346 = vshll.u32 %v263, 16
      %v348 = vrot.slane %v346, 5
      %v349 = vsel %vm301, %v344, %v348
      %v351 = vshrl.u32 %v230, 16
      %v353 = vrot.slane %v351, 4
      %v354 = vshll.u32 %v230, 16
      %v356 = vrot.slane %v354, 5
      %v357 = vor.u32 %v353, %v356
      %v358 = vrot.slane %v357, 4
      %v360 = vshll.u32 %v231, 16
      %v362 = vrot.slane %v360, 5
      %v363 = vsel %vm301, %v358, %v362
      %v364 = vshrl.u32 %v231, 16
      %v366 = vrot.slane %v364, 4
      %v367 = vor.u32 %v366, %v362
      %v368 = vrot.slane %v367, 4
      %v370 = vshll.u32 %v264, 16
      %v372 = vrot.slane %v370, 5
      %v373 = vsel %vm301, %v368, %v372
      %v375 = vshrl.u32 %v232, 16
      %v377 = vrot.slane %v375, 4
      %v378 = vshll.u32 %v232, 16
      %v380 = vrot.slane %v378, 5
      %v381 = vor.u32 %v377, %v380
      %v382 = vrot.slane %v381, 4
      %v384 = vshll.u32 %v233, 16
      %v386 = vrot.slane %v384, 5
      %v387 = vsel %vm301, %v382, %v386
      %v388 = vshrl.u32 %v233, 16
      %v390 = vrot.slane %v388, 4
      %v391 = vor.u32 %v390, %v386
      %v392 = vrot.slane %v391, 4
      %v394 = vshll.u32 %v265, 16
      %v396 = vrot.slane %v394, 5
      %v397 = vsel %vm301, %v392, %v396
      %v399 = vshrl.u32 %v234, 16
      %v401 = vrot.slane %v399, 4
      %v402 = vshll.u32 %v234, 16
      %v404 = vrot.slane %v402, 5
      %v405 = vor.u32 %v401, %v404
      %v406 = vrot.slane %v405, 4
      %v408 = vshll.u32 %v235, 16
      %v410 = vrot.slane %v408, 5
      %v411 = vsel %vm301, %v406, %v410
      %v412 = vshrl.u32 %v235, 16
      %v414 = vrot.slane %v412, 4
      %v415 = vor.u32 %v414, %v410
      %v416 = vrot.slane %v415, 4
      %v418 = vshll.u32 %v266, 16
      %v420 = vrot.slane %v418, 5
      %v421 = vsel %vm301, %v416, %v420
      %v423 = vshrl.u32 %v236, 16
      %v425 = vrot.slane %v423, 4
      %v426 = vshll.u32 %v236, 16
      %v428 = vrot.slane %v426, 5
      %v429 = vor.u32 %v425, %v428
      %v430 = vrot.slane %v429, 4
      %v432 = vshll.u32 %v237, 16
      %v434 = vrot.slane %v432, 5
      %v435 = vsel %vm301, %v430, %v434
      %v436 = vshrl.u32 %v237, 16
      %v438 = vrot.slane %v436, 4
      %v439 = vor.u32 %v438, %v434
      %v440 = vrot.slane %v439, 4
      %v442 = vshll.u32 %v267, 16
      %v444 = vrot.slane %v442, 5
      %v445 = vsel %vm301, %v440, %v444
      %v447 = vshrl.u32 %v238, 16
      %v449 = vrot.slane %v447, 4
      %v450 = vshll.u32 %v238, 16
      %v452 = vrot.slane %v450, 5
      %v453 = vor.u32 %v449, %v452
      %v454 = vrot.slane %v453, 4
      %v456 = vshll.u32 %v239, 16
      %v458 = vrot.slane %v456, 5
      %v459 = vsel %vm301, %v454, %v458
      %v460 = vshrl.u32 %v239, 16
      %v462 = vrot.slane %v460, 4
      %v463 = vor.u32 %v462, %v458
      %v464 = vrot.slane %v463, 4
      %v466 = vshll.u32 %v268, 16
      %v468 = vrot.slane %v466, 5
      %v469 = vsel %vm301, %v464, %v468
      %v471 = vshrl.u32 %v240, 16
      %v473 = vrot.slane %v471, 4
      %v474 = vshll.u32 %v240, 16
      %v476 = vrot.slane %v474, 5
      %v477 = vor.u32 %v473, %v476
      %v478 = vrot.slane %v477, 4
      %v480 = vshll.u32 %v241, 16
      %v482 = vrot.slane %v480, 5
      %v483 = vsel %vm301, %v478, %v482
      %v484 = vshrl.u32 %v241, 16
      %v486 = vrot.slane %v484, 4
      %v487 = vor.u32 %v486, %v482
      %v488 = vrot.slane %v487, 4
      %v490 = vshll.u32 %v269, 16
      %v492 = vrot.slane %v490, 5
      %v493 = vsel %vm301, %v488, %v492
      %v495 = vshrl.u32 %v242, 16
      %v497 = vrot.slane %v495, 4
      %v498 = vshll.u32 %v242, 16
      %v500 = vrot.slane %v498, 5
      %v501 = vor.u32 %v497, %v500
      %v502 = vrot.slane %v501, 4
      %v504 = vshll.u32 %v243, 16
      %v506 = vrot.slane %v504, 5
      %v507 = vsel %vm301, %v502, %v506
      %v508 = vshrl.u32 %v243, 16
      %v510 = vrot.slane %v508, 4
      %v511 = vor.u32 %v510, %v506
      %v512 = vrot.slane %v511, 4
      %v514 = vshll.u32 %v270, 16
      %v516 = vrot.slane %v514, 5
      %v517 = vsel %vm301, %v512, %v516
      %v519 = vshrl.u32 %v244, 16
      %v521 = vrot.slane %v519, 4
      %v522 = vshll.u32 %v244, 16
      %v524 = vrot.slane %v522, 5
      %v525 = vor.u32 %v521, %v524
      %v526 = vrot.slane %v525, 4
      %v528 = vshll.u32 %v245, 16
      %v530 = vrot.slane %v528, 5
      %v531 = vsel %vm301, %v526, %v530
      %v532 = vshrl.u32 %v245, 16
      %v534 = vrot.slane %v532, 4
      %v535 = vor.u32 %v534, %v530
      %v536 = vrot.slane %v535, 4
      %v538 = vshll.u32 %v271, 16
      %v540 = vrot.slane %v538, 5
      %v541 = vsel %vm301, %v536, %v540
      %v543 = vshrl.u32 %v246, 16
      %v545 = vrot.slane %v543, 4
      %v546 = vshll.u32 %v246, 16
      %v548 = vrot.slane %v546, 5
      %v549 = vor.u32 %v545, %v548
      %v550 = vrot.slane %v549, 4
      %v552 = vshll.u32 %v247, 16
      %v554 = vrot.slane %v552, 5
      %v555 = vsel %vm301, %v550, %v554
      %v556 = vshrl.u32 %v247, 16
      %v558 = vrot.slane %v556, 4
      %v559 = vor.u32 %v558, %v554
      %v560 = vrot.slane %v559, 4
      %v562 = vshll.u32 %v272, 16
      %v564 = vrot.slane %v562, 5
      %v565 = vsel %vm301, %v560, %v564
      %v567 = vshrl.u32 %v248, 16
      %v569 = vrot.slane %v567, 4
      %v570 = vshll.u32 %v248, 16
      %v572 = vrot.slane %v570, 5
      %v573 = vor.u32 %v569, %v572
      %v574 = vrot.slane %v573, 4
      %v576 = vshll.u32 %v249, 16
      %v578 = vrot.slane %v576, 5
      %v579 = vsel %vm301, %v574, %v578
      %v580 = vshrl.u32 %v249, 16
      %v582 = vrot.slane %v580, 4
      %v583 = vor.u32 %v582, %v578
      %v584 = vrot.slane %v583, 4
      %v586 = vshll.u32 %v273, 16
      %v588 = vrot.slane %v586, 5
      %v589 = vsel %vm301, %v584, %v588
      %v591 = vshrl.u32 %v250, 16
      %v593 = vrot.slane %v591, 4
      %v594 = vshll.u32 %v250, 16
      %v596 = vrot.slane %v594, 5
      %v597 = vor.u32 %v593, %v596
      %v598 = vrot.slane %v597, 4
      %v600 = vshll.u32 %v251, 16
      %v602 = vrot.slane %v600, 5
      %v603 = vsel %vm301, %v598, %v602
      %v604 = vshrl.u32 %v251, 16
      %v606 = vrot.slane %v604, 4
      %v607 = vor.u32 %v606, %v602
      %v608 = vrot.slane %v607, 4
      %v610 = vshll.u32 %v274, 16
      %v612 = vrot.slane %v610, 5
      %v613 = vsel %vm301, %v608, %v612
      %v615 = vshrl.u32 %v252, 16
      %v617 = vrot.slane %v615, 4
      %v618 = vshll.u32 %v252, 16
      %v620 = vrot.slane %v618, 5
      %v621 = vor.u32 %v617, %v620
      %v622 = vrot.slane %v621, 4
      %v624 = vshll.u32 %v253, 16
      %v626 = vrot.slane %v624, 5
      %v627 = vsel %vm301, %v622, %v626
      %v628 = vshrl.u32 %v253, 16
      %v630 = vrot.slane %v628, 4
      %v631 = vor.u32 %v630, %v626
      %v632 = vrot.slane %v631, 4
      %v634 = vshll.u32 %v275, 16
      %v636 = vrot.slane %v634, 5
      %v637 = vsel %vm301, %v632, %v636
      %v639 = vshrl.u32 %v254, 16
      %v641 = vrot.slane %v639, 4
      %v642 = vshll.u32 %v254, 16
      %v644 = vrot.slane %v642, 5
      %v645 = vor.u32 %v641, %v644
      %v646 = vrot.slane %v645, 4
      %v648 = vshll.u32 %v255, 16
      %v650 = vrot.slane %v648, 5
      %v651 = vsel %vm301, %v646, %v650
      %v652 = vshrl.u32 %v255, 16
      %v654 = vrot.slane %v652, 4
      %v655 = vor.u32 %v654, %v650
      %v656 = vrot.slane %v655, 4
      %v658 = vshll.u32 %v276, 16
      %v660 = vrot.slane %v658, 5
      %v661 = vsel %vm301, %v656, %v660
      %v663 = vshrl.u32 %v256, 16
      %v665 = vrot.slane %v663, 4
      %v666 = vshll.u32 %v256, 16
      %v668 = vrot.slane %v666, 5
      %v669 = vor.u32 %v665, %v668
      %v670 = vrot.slane %v669, 4
      %v672 = vshll.u32 %v257, 16
      %v674 = vrot.slane %v672, 5
      %v675 = vsel %vm301, %v670, %v674
      %v676 = vshrl.u32 %v257, 16
      %v678 = vrot.slane %v676, 4
      %v679 = vor.u32 %v678, %v674
      %v680 = vrot.slane %v679, 4
      %v682 = vshll.u32 %v277, 16
      %v684 = vrot.slane %v682, 5
      %v685 = vsel %vm301, %v680, %v684
      %s686 = scalar_lea.vmem %s1, 2
      %v687 = vld [vmem:[%s686] sm:$0x3]
      %v688 = vunpack.c.l.b16 %v315
      %v689 = vunpack.c.l.b16 %v325
      %v690 = vunpack.c.l.b16 %v339
      %v691 = vunpack.c.l.b16 %v349
      %v692 = vunpack.c.l.b16 %v363
      %v693 = vunpack.c.l.b16 %v373
      %v694 = vunpack.c.l.b16 %v387
      %v695 = vunpack.c.l.b16 %v397
      %v696 = vunpack.c.l.b16 %v411
      %v697 = vunpack.c.l.b16 %v421
      %v698 = vunpack.c.l.b16 %v435
      %v699 = vunpack.c.l.b16 %v445
      %v700 = vunpack.c.l.b16 %v459
      %v701 = vunpack.c.l.b16 %v469
      %v702 = vunpack.c.l.b16 %v483
      %v703 = vunpack.c.l.b16 %v493
      %v704 = vunpack.c.l.b16 %v507
      %v705 = vunpack.c.l.b16 %v517
      %v706 = vunpack.c.l.b16 %v531
      %v707 = vunpack.c.l.b16 %v541
      %v708 = vunpack.c.l.b16 %v555
      %v709 = vunpack.c.l.b16 %v565
      %v710 = vunpack.c.l.b16 %v579
      %v711 = vunpack.c.l.b16 %v589
      %v712 = vunpack.c.l.b16 %v603
      %v713 = vunpack.c.l.b16 %v613
      %v714 = vunpack.c.l.b16 %v627
      %v715 = vunpack.c.l.b16 %v637
      %v716 = vunpack.c.l.b16 %v651
      %v717 = vunpack.c.l.b16 %v661
      %v718 = vunpack.c.l.b16 %v675
      %v719 = vunpack.c.l.b16 %v685
      %v720 = vpack.c.b16 %v689, %v688
      %v721 = vpack.c.b16 %v691, %v690
      %v722 = vpack.c.b16 %v693, %v692
      %v723 = vpack.c.b16 %v695, %v694
      %v724 = vpack.c.b16 %v697, %v696
      %v725 = vpack.c.b16 %v699, %v698
      %v726 = vpack.c.b16 %v701, %v700
      %v727 = vpack.c.b16 %v703, %v702
      %v728 = vpack.c.b16 %v705, %v704
      %v729 = vpack.c.b16 %v707, %v706
      %v730 = vpack.c.b16 %v709, %v708
      %v731 = vpack.c.b16 %v711, %v710
      %v732 = vpack.c.b16 %v713, %v712
      %v733 = vpack.c.b16 %v715, %v714
      %v734 = vpack.c.b16 %v717, %v716
      %v735 = vpack.c.b16 %v719, %v718
      %vm736 = vcmask 31744
      %v738 = vsel %vm736, %v720, 0
      %v741 = vsel %vm736, %v721, 0
      %v744 = vsel %vm736, %v722, 0
      %v747 = vsel %vm736, %v723, 0
      %v750 = vsel %vm736, %v724, 0
      %v753 = vsel %vm736, %v725, 0
      %v756 = vsel %vm736, %v726, 0
      %v759 = vsel %vm736, %v727, 0
      %v762 = vsel %vm736, %v728, 0
      %v765 = vsel %vm736, %v729, 0
      %v768 = vsel %vm736, %v730, 0
      %v771 = vsel %vm736, %v731, 0
      %v774 = vsel %vm736, %v732, 0
      %v777 = vsel %vm736, %v733, 0
      %v780 = vsel %vm736, %v734, 0
      %v783 = vsel %vm736, %v735, 0
      %vm785 = vcmask 1041408
      %v787 = vsel %vm785, %v687, 0
      %789 = vmatprep.subr.bf16.mxu0 0
      %790 = vmatpush1.bf16.msra.mxu0 %v787
      %791 = vmatprep.subr.bf16.mxu0 0
      %792 = vmatpush1.bf16.msra.mxu0 0
      %793 = vmatprep.subr.bf16.mxu0 0
      %794 = vmatpush1.bf16.msra.mxu0 0
      %795 = vmatprep.subr.bf16.mxu0 0
      %796 = vmatpush1.bf16.msra.mxu0 0
      %797 = vmatprep.subr.bf16.mxu0 0
      %798 = vmatpush1.bf16.msra.mxu0 0
      %799 = vmatprep.subr.bf16.mxu0 0
      %800 = vmatpush1.bf16.msra.mxu0 0
      %801 = vmatprep.subr.bf16.mxu0 0
      %802 = vmatpush1.bf16.msra.mxu0 0
      %803 = vmatprep.subr.bf16.mxu0 0
      %804 = vmatpush1.bf16.msra.mxu0 0
      %805 = vmatprep.subr.bf16.mxu0 0
      %806 = vmatpush1.bf16.msra.mxu0 0
      %807 = vmatprep.subr.bf16.mxu0 0
      %808 = vmatpush1.bf16.msra.mxu0 0
      %809 = vmatprep.subr.bf16.mxu0 0
      %810 = vmatpush1.bf16.msra.mxu0 0
      %811 = vmatprep.subr.bf16.mxu0 0
      %812 = vmatpush1.bf16.msra.mxu0 0
      %813 = vmatprep.subr.bf16.mxu0 0
      %814 = vmatpush1.bf16.msra.mxu0 0
      %815 = vmatprep.subr.bf16.mxu0 0
      %816 = vmatpush1.bf16.msra.mxu0 0
      %817 = vmatprep.subr.bf16.mxu0 0
      %818 = vmatpush1.bf16.msra.mxu0 0
      %819 = vmatprep.subr.bf16.mxu0 0
      %820 = vmatpush1.bf16.msra.mxu0 0
      %821 = vmatprep.mubr.bf16.mxu0 0
      %822 = vmatmul.mubr.bf16.gmra.mrb[0].mxu0 %v738
      %v823 = vpop.f32.mrb[0].mxu0
      %v824 = vadd.f32 0.0, %v823
      %v825 = vpop.f32.mrb[0].mxu0
      %v826 = vpop.f32.mrb[0].mxu0
      %v827 = vadd.f32 0.0, %v826
      %v828 = vpop.f32.mrb[0].mxu0
      %829 = vmatprep.mubr.bf16.mxu0 0
      %830 = vmatmul.mubr.bf16.gmra.mrb[0].mxu0 %v741
      %v831 = vpop.f32.mrb[0].mxu0
      %v832 = vadd.f32 0.0, %v831
      %v833 = vpop.f32.mrb[0].mxu0
      %v834 = vpop.f32.mrb[0].mxu0
      %v835 = vadd.f32 0.0, %v834
      %v836 = vpop.f32.mrb[0].mxu0
      %837 = vmatprep.mubr.bf16.mxu0 0
      %838 = vmatmul.mubr.bf16.gmra.mrb[0].mxu0 %v744
      %v839 = vpop.f32.mrb[0].mxu0
      %v840 = vadd.f32 0.0, %v839
      %v841 = vpop.f32.mrb[0].mxu0
      %v842 = vpop.f32.mrb[0].mxu0
      %v843 = vadd.f32 0.0, %v842
      %v844 = vpop.f32.mrb[0].mxu0
      %845 = vmatprep.mubr.bf16.mxu0 0
      %846 = vmatmul.mubr.bf16.gmra.mrb[0].mxu0 %v747
      %v847 = vpop.f32.mrb[0].mxu0
      %v848 = vadd.f32 0.0, %v847
      %v849 = vpop.f32.mrb[0].mxu0
      %v850 = vpop.f32.mrb[0].mxu0
      %v851 = vadd.f32 0.0, %v850
      %v852 = vpop.f32.mrb[0].mxu0
      %853 = vmatprep.mubr.bf16.mxu0 0
      %854 = vmatmul.mubr.bf16.gmra.mrb[0].mxu0 %v750
      %v855 = vpop.f32.mrb[0].mxu0
      %v856 = vadd.f32 0.0, %v855
      %v857 = vpop.f32.mrb[0].mxu0
      %v858 = vpop.f32.mrb[0].mxu0
      %v859 = vadd.f32 0.0, %v858
      %v860 = vpop.f32.mrb[0].mxu0
      %861 = vmatprep.mubr.bf16.mxu0 0
      %862 = vmatmul.mubr.bf16.gmra.mrb[0].mxu0 %v753
      %v863 = vpop.f32.mrb[0].mxu0
      %v864 = vadd.f32 0.0, %v863
      %v865 = vpop.f32.mrb[0].mxu0
      %v866 = vpop.f32.mrb[0].mxu0
      %v867 = vadd.f32 0.0, %v866
      %v868 = vpop.f32.mrb[0].mxu0
      %869 = vmatprep.mubr.bf16.mxu0 0
      %870 = vmatmul.mubr.bf16.gmra.mrb[0].mxu0 %v756
      %v871 = vpop.f32.mrb[0].mxu0
      %v872 = vadd.f32 0.0, %v871
      %v873 = vpop.f32.mrb[0].mxu0
      %v874 = vpop.f32.mrb[0].mxu0
      %v875 = vadd.f32 0.0, %v874
      %v876 = vpop.f32.mrb[0].mxu0
      %877 = vmatprep.mubr.bf16.mxu0 0
      %878 = vmatmul.mubr.bf16.gmra.mrb[0].mxu0 %v759
      %v879 = vpop.f32.mrb[0].mxu0
      %v880 = vadd.f32 0.0, %v879
      %v881 = vpop.f32.mrb[0].mxu0
      %v882 = vpop.f32.mrb[0].mxu0
      %v883 = vadd.f32 0.0, %v882
      %v884 = vpop.f32.mrb[0].mxu0
      %885 = vmatprep.mubr.bf16.mxu0 0
      %886 = vmatmul.mubr.bf16.gmra.mrb[0].mxu0 %v762
      %v887 = vpop.f32.mrb[0].mxu0
      %v888 = vadd.f32 0.0, %v887
      %v889 = vpop.f32.mrb[0].mxu0
      %v890 = vpop.f32.mrb[0].mxu0
      %v891 = vadd.f32 0.0, %v890
      %v892 = vpop.f32.mrb[0].mxu0
      %893 = vmatprep.mubr.bf16.mxu0 0
      %894 = vmatmul.mubr.bf16.gmra.mrb[0].mxu0 %v765
      %v895 = vpop.f32.mrb[0].mxu0
      %v896 = vadd.f32 0.0, %v895
      %v897 = vpop.f32.mrb[0].mxu0
      %v898 = vpop.f32.mrb[0].mxu0
      %v899 = vadd.f32 0.0, %v898
      %v900 = vpop.f32.mrb[0].mxu0
      %901 = vmatprep.mubr.bf16.mxu0 0
      %902 = vmatmul.mubr.bf16.gmra.mrb[0].mxu0 %v768
      %v903 = vpop.f32.mrb[0].mxu0
      %v904 = vadd.f32 0.0, %v903
      %v905 = vpop.f32.mrb[0].mxu0
      %v906 = vpop.f32.mrb[0].mxu0
      %v907 = vadd.f32 0.0, %v906
      %v908 = vpop.f32.mrb[0].mxu0
      %909 = vmatprep.mubr.bf16.mxu0 0
      %910 = vmatmul.mubr.bf16.gmra.mrb[0].mxu0 %v771
      %v911 = vpop.f32.mrb[0].mxu0
      %v912 = vadd.f32 0.0, %v911
      %v913 = vpop.f32.mrb[0].mxu0
      %v914 = vpop.f32.mrb[0].mxu0
      %v915 = vadd.f32 0.0, %v914
      %v916 = vpop.f32.mrb[0].mxu0
      %917 = vmatprep.mubr.bf16.mxu0 0
      %918 = vmatmul.mubr.bf16.gmra.mrb[0].mxu0 %v774
      %v919 = vpop.f32.mrb[0].mxu0
      %v920 = vadd.f32 0.0, %v919
      %v921 = vpop.f32.mrb[0].mxu0
      %v922 = vpop.f32.mrb[0].mxu0
      %v923 = vadd.f32 0.0, %v922
      %v924 = vpop.f32.mrb[0].mxu0
      %925 = vmatprep.mubr.bf16.mxu0 0
      %926 = vmatmul.mubr.bf16.gmra.mrb[0].mxu0 %v777
      %v927 = vpop.f32.mrb[0].mxu0
      %v928 = vadd.f32 0.0, %v927
      %v929 = vpop.f32.mrb[0].mxu0
      %v930 = vpop.f32.mrb[0].mxu0
      %v931 = vadd.f32 0.0, %v930
      %v932 = vpop.f32.mrb[0].mxu0
      %933 = vmatprep.mubr.bf16.mxu0 0
      %934 = vmatmul.mubr.bf16.gmra.mrb[0].mxu0 %v780
      %v935 = vpop.f32.mrb[0].mxu0
      %v936 = vadd.f32 0.0, %v935
      %v937 = vpop.f32.mrb[0].mxu0
      %v938 = vpop.f32.mrb[0].mxu0
      %v939 = vadd.f32 0.0, %v938
      %v940 = vpop.f32.mrb[0].mxu0
      %941 = vmatprep.mubr.bf16.mxu0 0
      %942 = vmatmul.mubr.bf16.gmra.mrb[0].mxu0 %v783
      %v943 = vpop.f32.mrb[0].mxu0
      %v944 = vadd.f32 0.0, %v943
      %v945 = vpop.f32.mrb[0].mxu0
      %v946 = vpop.f32.mrb[0].mxu0
      %v947 = vadd.f32 0.0, %v946
      %v948 = vpop.f32.mrb[0].mxu0
      %949 = vdwg.mxu0
      %v982 = vunpack.c.l.b16 %v226
      %v983 = vunpack.c.l.b16 %v227
      %v984 = vunpack.c.l.b16 %v228
      %v985 = vunpack.c.l.b16 %v229
      %v986 = vunpack.c.l.b16 %v230
      %v987 = vunpack.c.l.b16 %v231
      %v988 = vunpack.c.l.b16 %v232
      %v989 = vunpack.c.l.b16 %v233
      %v990 = vunpack.c.l.b16 %v234
      %v991 = vunpack.c.l.b16 %v235
      %v992 = vunpack.c.l.b16 %v236
      %v993 = vunpack.c.l.b16 %v237
      %v994 = vunpack.c.l.b16 %v238
      %v995 = vunpack.c.l.b16 %v239
      %v996 = vunpack.c.l.b16 %v240
      %v997 = vunpack.c.l.b16 %v241
      %v998 = vunpack.c.l.b16 %v242
      %v999 = vunpack.c.l.b16 %v243
      %v1000 = vunpack.c.l.b16 %v244
      %v1001 = vunpack.c.l.b16 %v245
      %v1002 = vunpack.c.l.b16 %v246
      %v1003 = vunpack.c.l.b16 %v247
      %v1004 = vunpack.c.l.b16 %v248
      %v1005 = vunpack.c.l.b16 %v249
      %v1006 = vunpack.c.l.b16 %v250
      %v1007 = vunpack.c.l.b16 %v251
      %v1008 = vunpack.c.l.b16 %v252
      %v1009 = vunpack.c.l.b16 %v253
      %v1010 = vunpack.c.l.b16 %v254
      %v1011 = vunpack.c.l.b16 %v255
      %v1012 = vunpack.c.l.b16 %v256
      %v1013 = vunpack.c.l.b16 %v257
      %v1014 = vpack.c.b16 %v983, %v982
      %v1015 = vpack.c.b16 %v985, %v984
      %v1016 = vpack.c.b16 %v987, %v986
      %v1017 = vpack.c.b16 %v989, %v988
      %v1018 = vpack.c.b16 %v991, %v990
      %v1019 = vpack.c.b16 %v993, %v992
      %v1020 = vpack.c.b16 %v995, %v994
      %v1021 = vpack.c.b16 %v997, %v996
      %v1022 = vpack.c.b16 %v999, %v998
      %v1023 = vpack.c.b16 %v1001, %v1000
      %v1024 = vpack.c.b16 %v1003, %v1002
      %v1025 = vpack.c.b16 %v1005, %v1004
      %v1026 = vpack.c.b16 %v1007, %v1006
      %v1027 = vpack.c.b16 %v1009, %v1008
      %v1028 = vpack.c.b16 %v1011, %v1010
      %v1029 = vpack.c.b16 %v1013, %v1012
      %v1031 = vsel %vm736, %v1014, 0
      %v1034 = vsel %vm736, %v1015, 0
      %v1037 = vsel %vm736, %v1016, 0
      %v1040 = vsel %vm736, %v1017, 0
      %v1043 = vsel %vm736, %v1018, 0
      %v1046 = vsel %vm736, %v1019, 0
      %v1049 = vsel %vm736, %v1020, 0
      %v1052 = vsel %vm736, %v1021, 0
      %v1055 = vsel %vm736, %v1022, 0
      %v1058 = vsel %vm736, %v1023, 0
      %v1061 = vsel %vm736, %v1024, 0
      %v1064 = vsel %vm736, %v1025, 0
      %v1067 = vsel %vm736, %v1026, 0
      %v1070 = vsel %vm736, %v1027, 0
      %v1073 = vsel %vm736, %v1028, 0
      %v1076 = vsel %vm736, %v1029, 0
      %v1079 = vsel %vm785, %v298, 0
      %1081 = vmatprep.subr.bf16.mxu0 0
      %1082 = vmatpush1.bf16.msra.mxu0 %v1079
      %1083 = vmatprep.subr.bf16.mxu0 0
      %1084 = vmatpush1.bf16.msra.mxu0 0
      %1085 = vmatprep.subr.bf16.mxu0 0
      %1086 = vmatpush1.bf16.msra.mxu0 0
      %1087 = vmatprep.subr.bf16.mxu0 0
      %1088 = vmatpush1.bf16.msra.mxu0 0
      %1089 = vmatprep.subr.bf16.mxu0 0
      %1090 = vmatpush1.bf16.msra.mxu0 0
      %1091 = vmatprep.subr.bf16.mxu0 0
      %1092 = vmatpush1.bf16.msra.mxu0 0
      %1093 = vmatprep.subr.bf16.mxu0 0
      %1094 = vmatpush1.bf16.msra.mxu0 0
      %1095 = vmatprep.subr.bf16.mxu0 0
      %1096 = vmatpush1.bf16.msra.mxu0 0
      %1097 = vmatprep.subr.bf16.mxu0 0
      %1098 = vmatpush1.bf16.msra.mxu0 0
      %1099 = vmatprep.subr.bf16.mxu0 0
      %1100 = vmatpush1.bf16.msra.mxu0 0
      %1101 = vmatprep.subr.bf16.mxu0 0
      %1102 = vmatpush1.bf16.msra.mxu0 0
      %1103 = vmatprep.subr.bf16.mxu0 0
      %1104 = vmatpush1.bf16.msra.mxu0 0
      %1105 = vmatprep.subr.bf16.mxu0 0
      %1106 = vmatpush1.bf16.msra.mxu0 0
      %1107 = vmatprep.subr.bf16.mxu0 0
      %1108 = vmatpush1.bf16.msra.mxu0 0
      %1109 = vmatprep.subr.bf16.mxu0 0
      %1110 = vmatpush1.bf16.msra.mxu0 0
      %1111 = vmatprep.subr.bf16.mxu0 0
      %1112 = vmatpush1.bf16.msra.mxu0 0
      %1113 = vmatprep.mubr.bf16.mxu0 0
      %1114 = vmatmul.mubr.bf16.gmra.mrb[0].mxu0 %v1031
      %v1115 = vpop.f32.mrb[0].mxu0
      %v1116 = vadd.f32 %v824, %v1115
      %v1117 = vpop.f32.mrb[0].mxu0
      %v1118 = vpop.f32.mrb[0].mxu0
      %v1119 = vadd.f32 %v827, %v1118
      %v1120 = vpop.f32.mrb[0].mxu0
      %1121 = vmatprep.mubr.bf16.mxu0 0
      %1122 = vmatmul.mubr.bf16.gmra.mrb[0].mxu0 %v1034
      %v1123 = vpop.f32.mrb[0].mxu0
      %v1124 = vadd.f32 %v832, %v1123
      %v1125 = vpop.f32.mrb[0].mxu0
      %v1126 = vpop.f32.mrb[0].mxu0
      %v1127 = vadd.f32 %v835, %v1126
      %v1128 = vpop.f32.mrb[0].mxu0
      %1129 = vmatprep.mubr.bf16.mxu0 0
      %1130 = vmatmul.mubr.bf16.gmra.mrb[0].mxu0 %v1037
      %v1131 = vpop.f32.mrb[0].mxu0
      %v1132 = vadd.f32 %v840, %v1131
      %v1133 = vpop.f32.mrb[0].mxu0
      %v1134 = vpop.f32.mrb[0].mxu0
      %v1135 = vadd.f32 %v843, %v1134
      %v1136 = vpop.f32.mrb[0].mxu0
      %1137 = vmatprep.mubr.bf16.mxu0 0
      %1138 = vmatmul.mubr.bf16.gmra.mrb[0].mxu0 %v1040
      %v1139 = vpop.f32.mrb[0].mxu0
      %v1140 = vadd.f32 %v848, %v1139
      %v1141 = vpop.f32.mrb[0].mxu0
      %v1142 = vpop.f32.mrb[0].mxu0
      %v1143 = vadd.f32 %v851, %v1142
      %v1144 = vpop.f32.mrb[0].mxu0
      %1145 = vmatprep.mubr.bf16.mxu0 0
      %1146 = vmatmul.mubr.bf16.gmra.mrb[0].mxu0 %v1043
      %v1147 = vpop.f32.mrb[0].mxu0
      %v1148 = vadd.f32 %v856, %v1147
      %v1149 = vpop.f32.mrb[0].mxu0
      %v1150 = vpop.f32.mrb[0].mxu0
      %v1151 = vadd.f32 %v859, %v1150
      %v1152 = vpop.f32.mrb[0].mxu0
      %1153 = vmatprep.mubr.bf16.mxu0 0
      %1154 = vmatmul.mubr.bf16.gmra.mrb[0].mxu0 %v1046
      %v1155 = vpop.f32.mrb[0].mxu0
      %v1156 = vadd.f32 %v864, %v1155
      %v1157 = vpop.f32.mrb[0].mxu0
      %v1158 = vpop.f32.mrb[0].mxu0
      %v1159 = vadd.f32 %v867, %v1158
      %v1160 = vpop.f32.mrb[0].mxu0
      %1161 = vmatprep.mubr.bf16.mxu0 0
      %1162 = vmatmul.mubr.bf16.gmra.mrb[0].mxu0 %v1049
      %v1163 = vpop.f32.mrb[0].mxu0
      %v1164 = vadd.f32 %v872, %v1163
      %v1165 = vpop.f32.mrb[0].mxu0
      %v1166 = vpop.f32.mrb[0].mxu0
      %v1167 = vadd.f32 %v875, %v1166
      %v1168 = vpop.f32.mrb[0].mxu0
      %1169 = vmatprep.mubr.bf16.mxu0 0
      %1170 = vmatmul.mubr.bf16.gmra.mrb[0].mxu0 %v1052
      %v1171 = vpop.f32.mrb[0].mxu0
      %v1172 = vadd.f32 %v880, %v1171
      %v1173 = vpop.f32.mrb[0].mxu0
      %v1174 = vpop.f32.mrb[0].mxu0
      %v1175 = vadd.f32 %v883, %v1174
      %v1176 = vpop.f32.mrb[0].mxu0
      %1177 = vmatprep.mubr.bf16.mxu0 0
      %1178 = vmatmul.mubr.bf16.gmra.mrb[0].mxu0 %v1055
      %v1179 = vpop.f32.mrb[0].mxu0
      %v1180 = vadd.f32 %v888, %v1179
      %v1181 = vpop.f32.mrb[0].mxu0
      %v1182 = vpop.f32.mrb[0].mxu0
      %v1183 = vadd.f32 %v891, %v1182
      %v1184 = vpop.f32.mrb[0].mxu0
      %1185 = vmatprep.mubr.bf16.mxu0 0
      %1186 = vmatmul.mubr.bf16.gmra.mrb[0].mxu0 %v1058
      %v1187 = vpop.f32.mrb[0].mxu0
      %v1188 = vadd.f32 %v896, %v1187
      %v1189 = vpop.f32.mrb[0].mxu0
      %v1190 = vpop.f32.mrb[0].mxu0
      %v1191 = vadd.f32 %v899, %v1190
      %v1192 = vpop.f32.mrb[0].mxu0
      %1193 = vmatprep.mubr.bf16.mxu0 0
      %1194 = vmatmul.mubr.bf16.gmra.mrb[0].mxu0 %v1061
      %v1195 = vpop.f32.mrb[0].mxu0
      %v1196 = vadd.f32 %v904, %v1195
      %v1197 = vpop.f32.mrb[0].mxu0
      %v1198 = vpop.f32.mrb[0].mxu0
      %v1199 = vadd.f32 %v907, %v1198
      %v1200 = vpop.f32.mrb[0].mxu0
      %1201 = vmatprep.mubr.bf16.mxu0 0
      %1202 = vmatmul.mubr.bf16.gmra.mrb[0].mxu0 %v1064
      %v1203 = vpop.f32.mrb[0].mxu0
      %v1204 = vadd.f32 %v912, %v1203
      %v1205 = vpop.f32.mrb[0].mxu0
      %v1206 = vpop.f32.mrb[0].mxu0
      %v1207 = vadd.f32 %v915, %v1206
      %v1208 = vpop.f32.mrb[0].mxu0
      %1209 = vmatprep.mubr.bf16.mxu0 0
      %1210 = vmatmul.mubr.bf16.gmra.mrb[0].mxu0 %v1067
      %v1211 = vpop.f32.mrb[0].mxu0
      %v1212 = vadd.f32 %v920, %v1211
      %v1213 = vpop.f32.mrb[0].mxu0
      %v1214 = vpop.f32.mrb[0].mxu0
      %v1215 = vadd.f32 %v923, %v1214
      %v1216 = vpop.f32.mrb[0].mxu0
      %1217 = vmatprep.mubr.bf16.mxu0 0
      %1218 = vmatmul.mubr.bf16.gmra.mrb[0].mxu0 %v1070
      %v1219 = vpop.f32.mrb[0].mxu0
      %v1220 = vadd.f32 %v928, %v1219
      %v1221 = vpop.f32.mrb[0].mxu0
      %v1222 = vpop.f32.mrb[0].mxu0
      %v1223 = vadd.f32 %v931, %v1222
      %v1224 = vpop.f32.mrb[0].mxu0
      %1225 = vmatprep.mubr.bf16.mxu0 0
      %1226 = vmatmul.mubr.bf16.gmra.mrb[0].mxu0 %v1073
      %v1227 = vpop.f32.mrb[0].mxu0
      %v1228 = vadd.f32 %v936, %v1227
      %v1229 = vpop.f32.mrb[0].mxu0
      %v1230 = vpop.f32.mrb[0].mxu0
      %v1231 = vadd.f32 %v939, %v1230
      %v1232 = vpop.f32.mrb[0].mxu0
      %1233 = vmatprep.mubr.bf16.mxu0 0
      %1234 = vmatmul.mubr.bf16.gmra.mrb[0].mxu0 %v1076
      %v1235 = vpop.f32.mrb[0].mxu0
      %v1236 = vadd.f32 %v944, %v1235
      %v1237 = vpop.f32.mrb[0].mxu0
      %v1238 = vpop.f32.mrb[0].mxu0
      %v1239 = vadd.f32 %v947, %v1238
      %v1240 = vpop.f32.mrb[0].mxu0
      %1241 = vdwg.mxu0
      %vm1274 = vcmask 1042432
      %vm1275 = vcmask 1046532
      %vm1276 = vmor %vm1274, %vm1275
      %v1277 = vrot.slane %v280, 5
      %v1278 = vrot.slane %v1277, 4
      %v1279 = vrot.slane %v227, 5
      %v1280 = vsel %vm1276, %v1278, %v1279
      %v1281 = vrot.slane %v1279, 4
      %v1282 = vrot.slane %v262, 5
      %v1283 = vsel %vm1276, %v1281, %v1282
      %v1284 = vrot.slane %v281, 5
      %v1285 = vrot.slane %v1284, 4
      %v1286 = vrot.slane %v229, 5
      %v1287 = vsel %vm1276, %v1285, %v1286
      %v1288 = vrot.slane %v1286, 4
      %v1289 = vrot.slane %v263, 5
      %v1290 = vsel %vm1276, %v1288, %v1289
      %v1291 = vrot.slane %v282, 5
      %v1292 = vrot.slane %v1291, 4
      %v1293 = vrot.slane %v231, 5
      %v1294 = vsel %vm1276, %v1292, %v1293
      %v1295 = vrot.slane %v1293, 4
      %v1296 = vrot.slane %v264, 5
      %v1297 = vsel %vm1276, %v1295, %v1296
      %v1298 = vrot.slane %v283, 5
      %v1299 = vrot.slane %v1298, 4
      %v1300 = vrot.slane %v233, 5
      %v1301 = vsel %vm1276, %v1299, %v1300
      %v1302 = vrot.slane %v1300, 4
      %v1303 = vrot.slane %v265, 5
      %v1304 = vsel %vm1276, %v1302, %v1303
      %v1305 = vrot.slane %v284, 5
      %v1306 = vrot.slane %v1305, 4
      %v1307 = vrot.slane %v235, 5
      %v1308 = vsel %vm1276, %v1306, %v1307
      %v1309 = vrot.slane %v1307, 4
      %v1310 = vrot.slane %v266, 5
      %v1311 = vsel %vm1276, %v1309, %v1310
      %v1312 = vrot.slane %v285, 5
      %v1313 = vrot.slane %v1312, 4
      %v1314 = vrot.slane %v237, 5
      %v1315 = vsel %vm1276, %v1313, %v1314
      %v1316 = vrot.slane %v1314, 4
      %v1317 = vrot.slane %v267, 5
      %v1318 = vsel %vm1276, %v1316, %v1317
      %v1319 = vrot.slane %v286, 5
      %v1320 = vrot.slane %v1319, 4
      %v1321 = vrot.slane %v239, 5
      %v1322 = vsel %vm1276, %v1320, %v1321
      %v1323 = vrot.slane %v1321, 4
      %v1324 = vrot.slane %v268, 5
      %v1325 = vsel %vm1276, %v1323, %v1324
      %v1326 = vrot.slane %v287, 5
      %v1327 = vrot.slane %v1326, 4
      %v1328 = vrot.slane %v241, 5
      %v1329 = vsel %vm1276, %v1327, %v1328
      %v1330 = vrot.slane %v1328, 4
      %v1331 = vrot.slane %v269, 5
      %v1332 = vsel %vm1276, %v1330, %v1331
      %v1333 = vrot.slane %v288, 5
      %v1334 = vrot.slane %v1333, 4
      %v1335 = vrot.slane %v243, 5
      %v1336 = vsel %vm1276, %v1334, %v1335
      %v1337 = vrot.slane %v1335, 4
      %v1338 = vrot.slane %v270, 5
      %v1339 = vsel %vm1276, %v1337, %v1338
      %v1340 = vrot.slane %v289, 5
      %v1341 = vrot.slane %v1340, 4
      %v1342 = vrot.slane %v245, 5
      %v1343 = vsel %vm1276, %v1341, %v1342
      %v1344 = vrot.slane %v1342, 4
      %v1345 = vrot.slane %v271, 5
      %v1346 = vsel %vm1276, %v1344, %v1345
      %v1347 = vrot.slane %v290, 5
      %v1348 = vrot.slane %v1347, 4
      %v1349 = vrot.slane %v247, 5
      %v1350 = vsel %vm1276, %v1348, %v1349
      %v1351 = vrot.slane %v1349, 4
      %v1352 = vrot.slane %v272, 5
      %v1353 = vsel %vm1276, %v1351, %v1352
      %v1354 = vrot.slane %v291, 5
      %v1355 = vrot.slane %v1354, 4
      %v1356 = vrot.slane %v249, 5
      %v1357 = vsel %vm1276, %v1355, %v1356
      %v1358 = vrot.slane %v1356, 4
      %v1359 = vrot.slane %v273, 5
      %v1360 = vsel %vm1276, %v1358, %v1359
      %v1361 = vrot.slane %v292, 5
      %v1362 = vrot.slane %v1361, 4
      %v1363 = vrot.slane %v251, 5
      %v1364 = vsel %vm1276, %v1362, %v1363
      %v1365 = vrot.slane %v1363, 4
      %v1366 = vrot.slane %v274, 5
      %v1367 = vsel %vm1276, %v1365, %v1366
      %v1368 = vrot.slane %v293, 5
      %v1369 = vrot.slane %v1368, 4
      %v1370 = vrot.slane %v253, 5
      %v1371 = vsel %vm1276, %v1369, %v1370
      %v1372 = vrot.slane %v1370, 4
      %v1373 = vrot.slane %v275, 5
      %v1374 = vsel %vm1276, %v1372, %v1373
      %v1375 = vrot.slane %v294, 5
      %v1376 = vrot.slane %v1375, 4
      %v1377 = vrot.slane %v255, 5
      %v1378 = vsel %vm1276, %v1376, %v1377
      %v1379 = vrot.slane %v1377, 4
      %v1380 = vrot.slane %v276, 5
      %v1381 = vsel %vm1276, %v1379, %v1380
      %v1382 = vrot.slane %v295, 5
      %v1383 = vrot.slane %v1382, 4
      %v1384 = vrot.slane %v257, 5
      %v1385 = vsel %vm1276, %v1383, %v1384
      %v1386 = vrot.slane %v1384, 4
      %v1387 = vrot.slane %v277, 5
      %v1388 = vsel %vm1276, %v1386, %v1387
      %s1389 = scalar_lea.vmem %s1, 4
      %v1390 = vld [vmem:[%s1389] sm:$0x3]
      %v1391 = vunpack.c.l.b16 %v1280
      %v1392 = vunpack.c.l.b16 %v1283
      %v1393 = vunpack.c.l.b16 %v1287
      %v1394 = vunpack.c.l.b16 %v1290
      %v1395 = vunpack.c.l.b16 %v1294
      %v1396 = vunpack.c.l.b16 %v1297
      %v1397 = vunpack.c.l.b16 %v1301
      %v1398 = vunpack.c.l.b16 %v1304
      %v1399 = vunpack.c.l.b16 %v1308
      %v1400 = vunpack.c.l.b16 %v1311
      %v1401 = vunpack.c.l.b16 %v1315
      %v1402 = vunpack.c.l.b16 %v1318
      %v1403 = vunpack.c.l.b16 %v1322
      %v1404 = vunpack.c.l.b16 %v1325
      %v1405 = vunpack.c.l.b16 %v1329
      %v1406 = vunpack.c.l.b16 %v1332
      %v1407 = vunpack.c.l.b16 %v1336
      %v1408 = vunpack.c.l.b16 %v1339
      %v1409 = vunpack.c.l.b16 %v1343
      %v1410 = vunpack.c.l.b16 %v1346
      %v1411 = vunpack.c.l.b16 %v1350
      %v1412 = vunpack.c.l.b16 %v1353
      %v1413 = vunpack.c.l.b16 %v1357
      %v1414 = vunpack.c.l.b16 %v1360
      %v1415 = vunpack.c.l.b16 %v1364
      %v1416 = vunpack.c.l.b16 %v1367
      %v1417 = vunpack.c.l.b16 %v1371
      %v1418 = vunpack.c.l.b16 %v1374
      %v1419 = vunpack.c.l.b16 %v1378
      %v1420 = vunpack.c.l.b16 %v1381
      %v1421 = vunpack.c.l.b16 %v1385
      %v1422 = vunpack.c.l.b16 %v1388
      %v1423 = vpack.c.b16 %v1392, %v1391
      %v1424 = vpack.c.b16 %v1394, %v1393
      %v1425 = vpack.c.b16 %v1396, %v1395
      %v1426 = vpack.c.b16 %v1398, %v1397
      %v1427 = vpack.c.b16 %v1400, %v1399
      %v1428 = vpack.c.b16 %v1402, %v1401
      %v1429 = vpack.c.b16 %v1404, %v1403
      %v1430 = vpack.c.b16 %v1406, %v1405
      %v1431 = vpack.c.b16 %v1408, %v1407
      %v1432 = vpack.c.b16 %v1410, %v1409
      %v1433 = vpack.c.b16 %v1412, %v1411
      %v1434 = vpack.c.b16 %v1414, %v1413
      %v1435 = vpack.c.b16 %v1416, %v1415
      %v1436 = vpack.c.b16 %v1418, %v1417
      %v1437 = vpack.c.b16 %v1420, %v1419
      %v1438 = vpack.c.b16 %v1422, %v1421
      %v1440 = vsel %vm736, %v1423, 0
      %v1443 = vsel %vm736, %v1424, 0
      %v1446 = vsel %vm736, %v1425, 0
      %v1449 = vsel %vm736, %v1426, 0
      %v1452 = vsel %vm736, %v1427, 0
      %v1455 = vsel %vm736, %v1428, 0
      %v1458 = vsel %vm736, %v1429, 0
      %v1461 = vsel %vm736, %v1430, 0
      %v1464 = vsel %vm736, %v1431, 0
      %v1467 = vsel %vm736, %v1432, 0
      %v1470 = vsel %vm736, %v1433, 0
      %v1473 = vsel %vm736, %v1434, 0
      %v1476 = vsel %vm736, %v1435, 0
      %v1479 = vsel %vm736, %v1436, 0
      %v1482 = vsel %vm736, %v1437, 0
      %v1485 = vsel %vm736, %v1438, 0
      %v1488 = vsel %vm785, %v1390, 0
      %1490 = vmatprep.subr.bf16.mxu0 0
      %1491 = vmatpush1.bf16.msra.mxu0 %v1488
      %1492 = vmatprep.subr.bf16.mxu0 0
      %1493 = vmatpush1.bf16.msra.mxu0 0
      %1494 = vmatprep.subr.bf16.mxu0 0
      %1495 = vmatpush1.bf16.msra.mxu0 0
      %1496 = vmatprep.subr.bf16.mxu0 0
      %1497 = vmatpush1.bf16.msra.mxu0 0
      %1498 = vmatprep.subr.bf16.mxu0 0
      %1499 = vmatpush1.bf16.msra.mxu0 0
      %1500 = vmatprep.subr.bf16.mxu0 0
      %1501 = vmatpush1.bf16.msra.mxu0 0
      %1502 = vmatprep.subr.bf16.mxu0 0
      %1503 = vmatpush1.bf16.msra.mxu0 0
      %1504 = vmatprep.subr.bf16.mxu0 0
      %1505 = vmatpush1.bf16.msra.mxu0 0
      %1506 = vmatprep.subr.bf16.mxu0 0
      %1507 = vmatpush1.bf16.msra.mxu0 0
      %1508 = vmatprep.subr.bf16.mxu0 0
      %1509 = vmatpush1.bf16.msra.mxu0 0
      %1510 = vmatprep.subr.bf16.mxu0 0
      %1511 = vmatpush1.bf16.msra.mxu0 0
      %1512 = vmatprep.subr.bf16.mxu0 0
      %1513 = vmatpush1.bf16.msra.mxu0 0
      %1514 = vmatprep.subr.bf16.mxu0 0
      %1515 = vmatpush1.bf16.msra.mxu0 0
      %1516 = vmatprep.subr.bf16.mxu0 0
      %1517 = vmatpush1.bf16.msra.mxu0 0
      %1518 = vmatprep.subr.bf16.mxu0 0
      %1519 = vmatpush1.bf16.msra.mxu0 0
      %1520 = vmatprep.subr.bf16.mxu0 0
      %1521 = vmatpush1.bf16.msra.mxu0 0
      %1522 = vmatprep.mubr.bf16.mxu0 0
      %1523 = vmatmul.mubr.bf16.gmra.mrb[0].mxu0 %v1440
      %v1524 = vpop.f32.mrb[0].mxu0
      %v1525 = vadd.f32 0.0, %v1524
      %v1526 = vpop.f32.mrb[0].mxu0
      %v1527 = vpop.f32.mrb[0].mxu0
      %v1528 = vadd.f32 0.0, %v1527
      %v1529 = vpop.f32.mrb[0].mxu0
      %1530 = vmatprep.mubr.bf16.mxu0 0
      %1531 = vmatmul.mubr.bf16.gmra.mrb[0].mxu0 %v1443
      %v1532 = vpop.f32.mrb[0].mxu0
      %v1533 = vadd.f32 0.0, %v1532
      %v1534 = vpop.f32.mrb[0].mxu0
      %v1535 = vpop.f32.mrb[0].mxu0
      %v1536 = vadd.f32 0.0, %v1535
      %v1537 = vpop.f32.mrb[0].mxu0
      %1538 = vmatprep.mubr.bf16.mxu0 0
      %1539 = vmatmul.mubr.bf16.gmra.mrb[0].mxu0 %v1446
      %v1540 = vpop.f32.mrb[0].mxu0
      %v1541 = vadd.f32 0.0, %v1540
      %v1542 = vpop.f32.mrb[0].mxu0
      %v1543 = vpop.f32.mrb[0].mxu0
      %v1544 = vadd.f32 0.0, %v1543
      %v1545 = vpop.f32.mrb[0].mxu0
      %1546 = vmatprep.mubr.bf16.mxu0 0
      %1547 = vmatmul.mubr.bf16.gmra.mrb[0].mxu0 %v1449
      %v1548 = vpop.f32.mrb[0].mxu0
      %v1549 = vadd.f32 0.0, %v1548
      %v1550 = vpop.f32.mrb[0].mxu0
      %v1551 = vpop.f32.mrb[0].mxu0
      %v1552 = vadd.f32 0.0, %v1551
      %v1553 = vpop.f32.mrb[0].mxu0
      %1554 = vmatprep.mubr.bf16.mxu0 0
      %1555 = vmatmul.mubr.bf16.gmra.mrb[0].mxu0 %v1452
      %v1556 = vpop.f32.mrb[0].mxu0
      %v1557 = vadd.f32 0.0, %v1556
      %v1558 = vpop.f32.mrb[0].mxu0
      %v1559 = vpop.f32.mrb[0].mxu0
      %v1560 = vadd.f32 0.0, %v1559
      %v1561 = vpop.f32.mrb[0].mxu0
      %1562 = vmatprep.mubr.bf16.mxu0 0
      %1563 = vmatmul.mubr.bf16.gmra.mrb[0].mxu0 %v1455
      %v1564 = vpop.f32.mrb[0].mxu0
      %v1565 = vadd.f32 0.0, %v1564
      %v1566 = vpop.f32.mrb[0].mxu0
      %v1567 = vpop.f32.mrb[0].mxu0
      %v1568 = vadd.f32 0.0, %v1567
      %v1569 = vpop.f32.mrb[0].mxu0
      %1570 = vmatprep.mubr.bf16.mxu0 0
      %1571 = vmatmul.mubr.bf16.gmra.mrb[0].mxu0 %v1458
      %v1572 = vpop.f32.mrb[0].mxu0
      %v1573 = vadd.f32 0.0, %v1572
      %v1574 = vpop.f32.mrb[0].mxu0
      %v1575 = vpop.f32.mrb[0].mxu0
      %v1576 = vadd.f32 0.0, %v1575
      %v1577 = vpop.f32.mrb[0].mxu0
      %1578 = vmatprep.mubr.bf16.mxu0 0
      %1579 = vmatmul.mubr.bf16.gmra.mrb[0].mxu0 %v1461
      %v1580 = vpop.f32.mrb[0].mxu0
      %v1581 = vadd.f32 0.0, %v1580
      %v1582 = vpop.f32.mrb[0].mxu0
      %v1583 = vpop.f32.mrb[0].mxu0
      %v1584 = vadd.f32 0.0, %v1583
      %v1585 = vpop.f32.mrb[0].mxu0
      %1586 = vmatprep.mubr.bf16.mxu0 0
      %1587 = vmatmul.mubr.bf16.gmra.mrb[0].mxu0 %v1464
      %v1588 = vpop.f32.mrb[0].mxu0
      %v1589 = vadd.f32 0.0, %v1588
      %v1590 = vpop.f32.mrb[0].mxu0
      %v1591 = vpop.f32.mrb[0].mxu0
      %v1592 = vadd.f32 0.0, %v1591
      %v1593 = vpop.f32.mrb[0].mxu0
      %1594 = vmatprep.mubr.bf16.mxu0 0
      %1595 = vmatmul.mubr.bf16.gmra.mrb[0].mxu0 %v1467
      %v1596 = vpop.f32.mrb[0].mxu0
      %v1597 = vadd.f32 0.0, %v1596
      %v1598 = vpop.f32.mrb[0].mxu0
      %v1599 = vpop.f32.mrb[0].mxu0
      %v1600 = vadd.f32 0.0, %v1599
      %v1601 = vpop.f32.mrb[0].mxu0
      %1602 = vmatprep.mubr.bf16.mxu0 0
      %1603 = vmatmul.mubr.bf16.gmra.mrb[0].mxu0 %v1470
      %v1604 = vpop.f32.mrb[0].mxu0
      %v1605 = vadd.f32 0.0, %v1604
      %v1606 = vpop.f32.mrb[0].mxu0
      %v1607 = vpop.f32.mrb[0].mxu0
      %v1608 = vadd.f32 0.0, %v1607
      %v1609 = vpop.f32.mrb[0].mxu0
      %1610 = vmatprep.mubr.bf16.mxu0 0
      %1611 = vmatmul.mubr.bf16.gmra.mrb[0].mxu0 %v1473
      %v1612 = vpop.f32.mrb[0].mxu0
      %v1613 = vadd.f32 0.0, %v1612
      %v1614 = vpop.f32.mrb[0].mxu0
      %v1615 = vpop.f32.mrb[0].mxu0
      %v1616 = vadd.f32 0.0, %v1615
      %v1617 = vpop.f32.mrb[0].mxu0
      %1618 = vmatprep.mubr.bf16.mxu0 0
      %1619 = vmatmul.mubr.bf16.gmra.mrb[0].mxu0 %v1476
      %v1620 = vpop.f32.mrb[0].mxu0
      %v1621 = vadd.f32 0.0, %v1620
      %v1622 = vpop.f32.mrb[0].mxu0
      %v1623 = vpop.f32.mrb[0].mxu0
      %v1624 = vadd.f32 0.0, %v1623
      %v1625 = vpop.f32.mrb[0].mxu0
      %1626 = vmatprep.mubr.bf16.mxu0 0
      %1627 = vmatmul.mubr.bf16.gmra.mrb[0].mxu0 %v1479
      %v1628 = vpop.f32.mrb[0].mxu0
      %v1629 = vadd.f32 0.0, %v1628
      %v1630 = vpop.f32.mrb[0].mxu0
      %v1631 = vpop.f32.mrb[0].mxu0
      %v1632 = vadd.f32 0.0, %v1631
      %v1633 = vpop.f32.mrb[0].mxu0
      %1634 = vmatprep.mubr.bf16.mxu0 0
      %1635 = vmatmul.mubr.bf16.gmra.mrb[0].mxu0 %v1482
      %v1636 = vpop.f32.mrb[0].mxu0
      %v1637 = vadd.f32 0.0, %v1636
      %v1638 = vpop.f32.mrb[0].mxu0
      %v1639 = vpop.f32.mrb[0].mxu0
      %v1640 = vadd.f32 0.0, %v1639
      %v1641 = vpop.f32.mrb[0].mxu0
      %1642 = vmatprep.mubr.bf16.mxu0 0
      %1643 = vmatmul.mubr.bf16.gmra.mrb[0].mxu0 %v1485
      %v1644 = vpop.f32.mrb[0].mxu0
      %v1645 = vadd.f32 0.0, %v1644
      %v1646 = vpop.f32.mrb[0].mxu0
      %v1647 = vpop.f32.mrb[0].mxu0
      %v1648 = vadd.f32 0.0, %v1647
      %v1649 = vpop.f32.mrb[0].mxu0
      %1650 = vdwg.mxu0
      %v1651 = vadd.f32 %v1116, %v1525
      %v1652 = vadd.f32 %v1119, %v1528
      %v1653 = vadd.f32 %v1124, %v1533
      %v1654 = vadd.f32 %v1127, %v1536
      %v1655 = vadd.f32 %v1132, %v1541
      %v1656 = vadd.f32 %v1135, %v1544
      %v1657 = vadd.f32 %v1140, %v1549
      %v1658 = vadd.f32 %v1143, %v1552
      %v1659 = vadd.f32 %v1148, %v1557
      %v1660 = vadd.f32 %v1151, %v1560
      %v1661 = vadd.f32 %v1156, %v1565
      %v1662 = vadd.f32 %v1159, %v1568
      %v1663 = vadd.f32 %v1164, %v1573
      %v1664 = vadd.f32 %v1167, %v1576
      %v1665 = vadd.f32 %v1172, %v1581
      %v1666 = vadd.f32 %v1175, %v1584
      %v1667 = vadd.f32 %v1180, %v1589
      %v1668 = vadd.f32 %v1183, %v1592
      %v1669 = vadd.f32 %v1188, %v1597
      %v1670 = vadd.f32 %v1191, %v1600
      %v1671 = vadd.f32 %v1196, %v1605
      %v1672 = vadd.f32 %v1199, %v1608
      %v1673 = vadd.f32 %v1204, %v1613
      %v1674 = vadd.f32 %v1207, %v1616
      %v1675 = vadd.f32 %v1212, %v1621
      %v1676 = vadd.f32 %v1215, %v1624
      %v1677 = vadd.f32 %v1220, %v1629
      %v1678 = vadd.f32 %v1223, %v1632
      %v1679 = vadd.f32 %v1228, %v1637
      %v1680 = vadd.f32 %v1231, %v1640
      %v1681 = vadd.f32 %v1236, %v1645
      %v1682 = vadd.f32 %v1239, %v1648
      %s1683 = scalar_lea.vmem %s1, 6
      %v1684 = vld [vmem:[%s1683] sm:$0x3]
      %v1687 = vunpack.c.l.b16 %v258
      %v1688 = vunpack.c.l.b16 %v259
      %v1689 = vpack.c.b16 %v1688, %v1687
      %v1691 = vsel %vm736, %v1689, 0
      %v1694 = vsel %vm785, %v1684, 0
      %1696 = vmatprep.subr.bf16.mxu0 0
      %1697 = vmatpush1.bf16.msra.mxu0 %v1694
      %1698 = vmatprep.subr.bf16.mxu0 0
      %1699 = vmatpush1.bf16.msra.mxu0 0
      %1700 = vmatprep.subr.bf16.mxu0 0
      %1701 = vmatpush1.bf16.msra.mxu0 0
      %1702 = vmatprep.subr.bf16.mxu0 0
      %1703 = vmatpush1.bf16.msra.mxu0 0
      %1704 = vmatprep.subr.bf16.mxu0 0
      %1705 = vmatpush1.bf16.msra.mxu0 0
      %1706 = vmatprep.subr.bf16.mxu0 0
      %1707 = vmatpush1.bf16.msra.mxu0 0
      %1708 = vmatprep.subr.bf16.mxu0 0
      %1709 = vmatpush1.bf16.msra.mxu0 0
      %1710 = vmatprep.subr.bf16.mxu0 0
      %1711 = vmatpush1.bf16.msra.mxu0 0
      %1712 = vmatprep.subr.bf16.mxu0 0
      %1713 = vmatpush1.bf16.msra.mxu0 0
      %1714 = vmatprep.subr.bf16.mxu0 0
      %1715 = vmatpush1.bf16.msra.mxu0 0
      %1716 = vmatprep.subr.bf16.mxu0 0
      %1717 = vmatpush1.bf16.msra.mxu0 0
      %1718 = vmatprep.subr.bf16.mxu0 0
      %1719 = vmatpush1.bf16.msra.mxu0 0
      %1720 = vmatprep.subr.bf16.mxu0 0
      %1721 = vmatpush1.bf16.msra.mxu0 0
      %1722 = vmatprep.subr.bf16.mxu0 0
      %1723 = vmatpush1.bf16.msra.mxu0 0
      %1724 = vmatprep.subr.bf16.mxu0 0
      %1725 = vmatpush1.bf16.msra.mxu0 0
      %1726 = vmatprep.subr.bf16.mxu0 0
      %1727 = vmatpush1.bf16.msra.mxu0 0
      %1728 = vmatprep.mubr.bf16.mxu0 0
      %1729 = vmatmul.mubr.bf16.gmra.mrb[0].mxu0 %v1034
      %v1730 = vpop.f32.mrb[0].mxu0
      %v1731 = vadd.f32 0.0, %v1730
      %v1732 = vpop.f32.mrb[0].mxu0
      %v1733 = vpop.f32.mrb[0].mxu0
      %v1734 = vadd.f32 0.0, %v1733
      %v1735 = vpop.f32.mrb[0].mxu0
      %1736 = vmatprep.mubr.bf16.mxu0 0
      %1737 = vmatmul.mubr.bf16.gmra.mrb[0].mxu0 %v1037
      %v1738 = vpop.f32.mrb[0].mxu0
      %v1739 = vadd.f32 0.0, %v1738
      %v1740 = vpop.f32.mrb[0].mxu0
      %v1741 = vpop.f32.mrb[0].mxu0
      %v1742 = vadd.f32 0.0, %v1741
      %v1743 = vpop.f32.mrb[0].mxu0
      %1744 = vmatprep.mubr.bf16.mxu0 0
      %1745 = vmatmul.mubr.bf16.gmra.mrb[0].mxu0 %v1040
      %v1746 = vpop.f32.mrb[0].mxu0
      %v1747 = vadd.f32 0.0, %v1746
      %v1748 = vpop.f32.mrb[0].mxu0
      %v1749 = vpop.f32.mrb[0].mxu0
      %v1750 = vadd.f32 0.0, %v1749
      %v1751 = vpop.f32.mrb[0].mxu0
      %1752 = vmatprep.mubr.bf16.mxu0 0
      %1753 = vmatmul.mubr.bf16.gmra.mrb[0].mxu0 %v1043
      %v1754 = vpop.f32.mrb[0].mxu0
      %v1755 = vadd.f32 0.0, %v1754
      %v1756 = vpop.f32.mrb[0].mxu0
      %v1757 = vpop.f32.mrb[0].mxu0
      %v1758 = vadd.f32 0.0, %v1757
      %v1759 = vpop.f32.mrb[0].mxu0
      %1760 = vmatprep.mubr.bf16.mxu0 0
      %1761 = vmatmul.mubr.bf16.gmra.mrb[0].mxu0 %v1046
      %v1762 = vpop.f32.mrb[0].mxu0
      %v1763 = vadd.f32 0.0, %v1762
      %v1764 = vpop.f32.mrb[0].mxu0
      %v1765 = vpop.f32.mrb[0].mxu0
      %v1766 = vadd.f32 0.0, %v1765
      %v1767 = vpop.f32.mrb[0].mxu0
      %1768 = vmatprep.mubr.bf16.mxu0 0
      %1769 = vmatmul.mubr.bf16.gmra.mrb[0].mxu0 %v1049
      %v1770 = vpop.f32.mrb[0].mxu0
      %v1771 = vadd.f32 0.0, %v1770
      %v1772 = vpop.f32.mrb[0].mxu0
      %v1773 = vpop.f32.mrb[0].mxu0
      %v1774 = vadd.f32 0.0, %v1773
      %v1775 = vpop.f32.mrb[0].mxu0
      %1776 = vmatprep.mubr.bf16.mxu0 0
      %1777 = vmatmul.mubr.bf16.gmra.mrb[0].mxu0 %v1052
      %v1778 = vpop.f32.mrb[0].mxu0
      %v1779 = vadd.f32 0.0, %v1778
      %v1780 = vpop.f32.mrb[0].mxu0
      %v1781 = vpop.f32.mrb[0].mxu0
      %v1782 = vadd.f32 0.0, %v1781
      %v1783 = vpop.f32.mrb[0].mxu0
      %1784 = vmatprep.mubr.bf16.mxu0 0
      %1785 = vmatmul.mubr.bf16.gmra.mrb[0].mxu0 %v1055
      %v1786 = vpop.f32.mrb[0].mxu0
      %v1787 = vadd.f32 0.0, %v1786
      %v1788 = vpop.f32.mrb[0].mxu0
      %v1789 = vpop.f32.mrb[0].mxu0
      %v1790 = vadd.f32 0.0, %v1789
      %v1791 = vpop.f32.mrb[0].mxu0
      %1792 = vmatprep.mubr.bf16.mxu0 0
      %1793 = vmatmul.mubr.bf16.gmra.mrb[0].mxu0 %v1058
      %v1794 = vpop.f32.mrb[0].mxu0
      %v1795 = vadd.f32 0.0, %v1794
      %v1796 = vpop.f32.mrb[0].mxu0
      %v1797 = vpop.f32.mrb[0].mxu0
      %v1798 = vadd.f32 0.0, %v1797
      %v1799 = vpop.f32.mrb[0].mxu0
      %1800 = vmatprep.mubr.bf16.mxu0 0
      %1801 = vmatmul.mubr.bf16.gmra.mrb[0].mxu0 %v1061
      %v1802 = vpop.f32.mrb[0].mxu0
      %v1803 = vadd.f32 0.0, %v1802
      %v1804 = vpop.f32.mrb[0].mxu0
      %v1805 = vpop.f32.mrb[0].mxu0
      %v1806 = vadd.f32 0.0, %v1805
      %v1807 = vpop.f32.mrb[0].mxu0
      %1808 = vmatprep.mubr.bf16.mxu0 0
      %1809 = vmatmul.mubr.bf16.gmra.mrb[0].mxu0 %v1064
      %v1810 = vpop.f32.mrb[0].mxu0
      %v1811 = vadd.f32 0.0, %v1810
      %v1812 = vpop.f32.mrb[0].mxu0
      %v1813 = vpop.f32.mrb[0].mxu0
      %v1814 = vadd.f32 0.0, %v1813
      %v1815 = vpop.f32.mrb[0].mxu0
      %1816 = vmatprep.mubr.bf16.mxu0 0
      %1817 = vmatmul.mubr.bf16.gmra.mrb[0].mxu0 %v1067
      %v1818 = vpop.f32.mrb[0].mxu0
      %v1819 = vadd.f32 0.0, %v1818
      %v1820 = vpop.f32.mrb[0].mxu0
      %v1821 = vpop.f32.mrb[0].mxu0
      %v1822 = vadd.f32 0.0, %v1821
      %v1823 = vpop.f32.mrb[0].mxu0
      %1824 = vmatprep.mubr.bf16.mxu0 0
      %1825 = vmatmul.mubr.bf16.gmra.mrb[0].mxu0 %v1070
      %v1826 = vpop.f32.mrb[0].mxu0
      %v1827 = vadd.f32 0.0, %v1826
      %v1828 = vpop.f32.mrb[0].mxu0
      %v1829 = vpop.f32.mrb[0].mxu0
      %v1830 = vadd.f32 0.0, %v1829
      %v1831 = vpop.f32.mrb[0].mxu0
      %1832 = vmatprep.mubr.bf16.mxu0 0
      %1833 = vmatmul.mubr.bf16.gmra.mrb[0].mxu0 %v1073
      %v1834 = vpop.f32.mrb[0].mxu0
      %v1835 = vadd.f32 0.0, %v1834
      %v1836 = vpop.f32.mrb[0].mxu0
      %v1837 = vpop.f32.mrb[0].mxu0
      %v1838 = vadd.f32 0.0, %v1837
      %v1839 = vpop.f32.mrb[0].mxu0
      %1840 = vmatprep.mubr.bf16.mxu0 0
      %1841 = vmatmul.mubr.bf16.gmra.mrb[0].mxu0 %v1076
      %v1842 = vpop.f32.mrb[0].mxu0
      %v1843 = vadd.f32 0.0, %v1842
      %v1844 = vpop.f32.mrb[0].mxu0
      %v1845 = vpop.f32.mrb[0].mxu0
      %v1846 = vadd.f32 0.0, %v1845
      %v1847 = vpop.f32.mrb[0].mxu0
      %1848 = vmatprep.mubr.bf16.mxu0 0
      %1849 = vmatmul.mubr.bf16.gmra.mrb[0].mxu0 %v1691
      %v1850 = vpop.f32.mrb[0].mxu0
      %v1851 = vadd.f32 0.0, %v1850
      %v1852 = vpop.f32.mrb[0].mxu0
      %v1853 = vpop.f32.mrb[0].mxu0
      %v1854 = vadd.f32 0.0, %v1853
      %v1855 = vpop.f32.mrb[0].mxu0
      %1856 = vdwg.mxu0
      %v1857 = vadd.f32 %v1651, %v1731
      %v1858 = vadd.f32 %v1652, %v1734
      %v1859 = vadd.f32 %v1653, %v1739
      %v1860 = vadd.f32 %v1654, %v1742
      %v1861 = vadd.f32 %v1655, %v1747
      %v1862 = vadd.f32 %v1656, %v1750
      %v1863 = vadd.f32 %v1657, %v1755
      %v1864 = vadd.f32 %v1658, %v1758
      %v1865 = vadd.f32 %v1659, %v1763
      %v1866 = vadd.f32 %v1660, %v1766
      %v1867 = vadd.f32 %v1661, %v1771
      %v1868 = vadd.f32 %v1662, %v1774
      %v1869 = vadd.f32 %v1663, %v1779
      %v1870 = vadd.f32 %v1664, %v1782
      %v1871 = vadd.f32 %v1665, %v1787
      %v1872 = vadd.f32 %v1666, %v1790
      %v1873 = vadd.f32 %v1667, %v1795
      %v1874 = vadd.f32 %v1668, %v1798
      %v1875 = vadd.f32 %v1669, %v1803
      %v1876 = vadd.f32 %v1670, %v1806
      %v1877 = vadd.f32 %v1671, %v1811
      %v1878 = vadd.f32 %v1672, %v1814
      %v1879 = vadd.f32 %v1673, %v1819
      %v1880 = vadd.f32 %v1674, %v1822
      %v1881 = vadd.f32 %v1675, %v1827
      %v1882 = vadd.f32 %v1676, %v1830
      %v1883 = vadd.f32 %v1677, %v1835
      %v1884 = vadd.f32 %v1678, %v1838
      %v1885 = vadd.f32 %v1679, %v1843
      %v1886 = vadd.f32 %v1680, %v1846
      %v1887 = vadd.f32 %v1681, %v1851
      %v1888 = vadd.f32 %v1682, %v1854
      %v1890 = vshrl.u32 %v258, 16
      %v1892 = vrot.slane %v1890, 4
      %v1893 = vshll.u32 %v258, 16
      %v1895 = vrot.slane %v1893, 5
      %v1896 = vor.u32 %v1892, %v1895
      %v1897 = vrot.slane %v1896, 4
      %v1899 = vshll.u32 %v259, 16
      %v1901 = vrot.slane %v1899, 5
      %v1902 = vsel %vm301, %v1897, %v1901
      %v1903 = vshrl.u32 %v259, 16
      %v1905 = vrot.slane %v1903, 4
      %v1906 = vor.u32 %v1905, %v1901
      %v1907 = vrot.slane %v1906, 4
      %v1909 = vshll.u32 %v278, 16
      %v1911 = vrot.slane %v1909, 5
      %v1912 = vsel %vm301, %v1907, %v1911
      %s1913 = scalar_lea.vmem %s1, 8
      %v1914 = vld [vmem:[%s1913] sm:$0x3]
      %v1915 = vunpack.c.l.b16 %v1902
      %v1916 = vunpack.c.l.b16 %v1912
      %v1917 = vpack.c.b16 %v1916, %v1915
      %v1919 = vsel %vm736, %v1917, 0
      %v1922 = vsel %vm785, %v1914, 0
      %1924 = vmatprep.subr.bf16.mxu0 0
      %1925 = vmatpush1.bf16.msra.mxu0 %v1922
      %1926 = vmatprep.subr.bf16.mxu0 0
      %1927 = vmatpush1.bf16.msra.mxu0 0
      %1928 = vmatprep.subr.bf16.mxu0 0
      %1929 = vmatpush1.bf16.msra.mxu0 0
      %1930 = vmatprep.subr.bf16.mxu0 0
      %1931 = vmatpush1.bf16.msra.mxu0 0
      %1932 = vmatprep.subr.bf16.mxu0 0
      %1933 = vmatpush1.bf16.msra.mxu0 0
      %1934 = vmatprep.subr.bf16.mxu0 0
      %1935 = vmatpush1.bf16.msra.mxu0 0
      %1936 = vmatprep.subr.bf16.mxu0 0
      %1937 = vmatpush1.bf16.msra.mxu0 0
      %1938 = vmatprep.subr.bf16.mxu0 0
      %1939 = vmatpush1.bf16.msra.mxu0 0
      %1940 = vmatprep.subr.bf16.mxu0 0
      %1941 = vmatpush1.bf16.msra.mxu0 0
      %1942 = vmatprep.subr.bf16.mxu0 0
      %1943 = vmatpush1.bf16.msra.mxu0 0
      %1944 = vmatprep.subr.bf16.mxu0 0
      %1945 = vmatpush1.bf16.msra.mxu0 0
      %1946 = vmatprep.subr.bf16.mxu0 0
      %1947 = vmatpush1.bf16.msra.mxu0 0
      %1948 = vmatprep.subr.bf16.mxu0 0
      %1949 = vmatpush1.bf16.msra.mxu0 0
      %1950 = vmatprep.subr.bf16.mxu0 0
      %1951 = vmatpush1.bf16.msra.mxu0 0
      %1952 = vmatprep.subr.bf16.mxu0 0
      %1953 = vmatpush1.bf16.msra.mxu0 0
      %1954 = vmatprep.subr.bf16.mxu0 0
      %1955 = vmatpush1.bf16.msra.mxu0 0
      %1956 = vmatprep.mubr.bf16.mxu0 0
      %1957 = vmatmul.mubr.bf16.gmra.mrb[0].mxu0 %v741
      %v1958 = vpop.f32.mrb[0].mxu0
      %v1959 = vadd.f32 0.0, %v1958
      %v1960 = vpop.f32.mrb[0].mxu0
      %v1961 = vpop.f32.mrb[0].mxu0
      %v1962 = vadd.f32 0.0, %v1961
      %v1963 = vpop.f32.mrb[0].mxu0
      %1964 = vmatprep.mubr.bf16.mxu0 0
      %1965 = vmatmul.mubr.bf16.gmra.mrb[0].mxu0 %v744
      %v1966 = vpop.f32.mrb[0].mxu0
      %v1967 = vadd.f32 0.0, %v1966
      %v1968 = vpop.f32.mrb[0].mxu0
      %v1969 = vpop.f32.mrb[0].mxu0
      %v1970 = vadd.f32 0.0, %v1969
      %v1971 = vpop.f32.mrb[0].mxu0
      %1972 = vmatprep.mubr.bf16.mxu0 0
      %1973 = vmatmul.mubr.bf16.gmra.mrb[0].mxu0 %v747
      %v1974 = vpop.f32.mrb[0].mxu0
      %v1975 = vadd.f32 0.0, %v1974
      %v1976 = vpop.f32.mrb[0].mxu0
      %v1977 = vpop.f32.mrb[0].mxu0
      %v1978 = vadd.f32 0.0, %v1977
      %v1979 = vpop.f32.mrb[0].mxu0
      %1980 = vmatprep.mubr.bf16.mxu0 0
      %1981 = vmatmul.mubr.bf16.gmra.mrb[0].mxu0 %v750
      %v1982 = vpop.f32.mrb[0].mxu0
      %v1983 = vadd.f32 0.0, %v1982
      %v1984 = vpop.f32.mrb[0].mxu0
      %v1985 = vpop.f32.mrb[0].mxu0
      %v1986 = vadd.f32 0.0, %v1985
      %v1987 = vpop.f32.mrb[0].mxu0
      %1988 = vmatprep.mubr.bf16.mxu0 0
      %1989 = vmatmul.mubr.bf16.gmra.mrb[0].mxu0 %v753
      %v1990 = vpop.f32.mrb[0].mxu0
      %v1991 = vadd.f32 0.0, %v1990
      %v1992 = vpop.f32.mrb[0].mxu0
      %v1993 = vpop.f32.mrb[0].mxu0
      %v1994 = vadd.f32 0.0, %v1993
      %v1995 = vpop.f32.mrb[0].mxu0
      %1996 = vmatprep.mubr.bf16.mxu0 0
      %1997 = vmatmul.mubr.bf16.gmra.mrb[0].mxu0 %v756
      %v1998 = vpop.f32.mrb[0].mxu0
      %v1999 = vadd.f32 0.0, %v1998
      %v2000 = vpop.f32.mrb[0].mxu0
      %v2001 = vpop.f32.mrb[0].mxu0
      %v2002 = vadd.f32 0.0, %v2001
      %v2003 = vpop.f32.mrb[0].mxu0
      %2004 = vmatprep.mubr.bf16.mxu0 0
      %2005 = vmatmul.mubr.bf16.gmra.mrb[0].mxu0 %v759
      %v2006 = vpop.f32.mrb[0].mxu0
      %v2007 = vadd.f32 0.0, %v2006
      %v2008 = vpop.f32.mrb[0].mxu0
      %v2009 = vpop.f32.mrb[0].mxu0
      %v2010 = vadd.f32 0.0, %v2009
      %v2011 = vpop.f32.mrb[0].mxu0
      %2012 = vmatprep.mubr.bf16.mxu0 0
      %2013 = vmatmul.mubr.bf16.gmra.mrb[0].mxu0 %v762
      %v2014 = vpop.f32.mrb[0].mxu0
      %v2015 = vadd.f32 0.0, %v2014
      %v2016 = vpop.f32.mrb[0].mxu0
      %v2017 = vpop.f32.mrb[0].mxu0
      %v2018 = vadd.f32 0.0, %v2017
      %v2019 = vpop.f32.mrb[0].mxu0
      %2020 = vmatprep.mubr.bf16.mxu0 0
      %2021 = vmatmul.mubr.bf16.gmra.mrb[0].mxu0 %v765
      %v2022 = vpop.f32.mrb[0].mxu0
      %v2023 = vadd.f32 0.0, %v2022
      %v2024 = vpop.f32.mrb[0].mxu0
      %v2025 = vpop.f32.mrb[0].mxu0
      %v2026 = vadd.f32 0.0, %v2025
      %v2027 = vpop.f32.mrb[0].mxu0
      %2028 = vmatprep.mubr.bf16.mxu0 0
      %2029 = vmatmul.mubr.bf16.gmra.mrb[0].mxu0 %v768
      %v2030 = vpop.f32.mrb[0].mxu0
      %v2031 = vadd.f32 0.0, %v2030
      %v2032 = vpop.f32.mrb[0].mxu0
      %v2033 = vpop.f32.mrb[0].mxu0
      %v2034 = vadd.f32 0.0, %v2033
      %v2035 = vpop.f32.mrb[0].mxu0
      %2036 = vmatprep.mubr.bf16.mxu0 0
      %2037 = vmatmul.mubr.bf16.gmra.mrb[0].mxu0 %v771
      %v2038 = vpop.f32.mrb[0].mxu0
      %v2039 = vadd.f32 0.0, %v2038
      %v2040 = vpop.f32.mrb[0].mxu0
      %v2041 = vpop.f32.mrb[0].mxu0
      %v2042 = vadd.f32 0.0, %v2041
      %v2043 = vpop.f32.mrb[0].mxu0
      %2044 = vmatprep.mubr.bf16.mxu0 0
      %2045 = vmatmul.mubr.bf16.gmra.mrb[0].mxu0 %v774
      %v2046 = vpop.f32.mrb[0].mxu0
      %v2047 = vadd.f32 0.0, %v2046
      %v2048 = vpop.f32.mrb[0].mxu0
      %v2049 = vpop.f32.mrb[0].mxu0
      %v2050 = vadd.f32 0.0, %v2049
      %v2051 = vpop.f32.mrb[0].mxu0
      %2052 = vmatprep.mubr.bf16.mxu0 0
      %2053 = vmatmul.mubr.bf16.gmra.mrb[0].mxu0 %v777
      %v2054 = vpop.f32.mrb[0].mxu0
      %v2055 = vadd.f32 0.0, %v2054
      %v2056 = vpop.f32.mrb[0].mxu0
      %v2057 = vpop.f32.mrb[0].mxu0
      %v2058 = vadd.f32 0.0, %v2057
      %v2059 = vpop.f32.mrb[0].mxu0
      %2060 = vmatprep.mubr.bf16.mxu0 0
      %2061 = vmatmul.mubr.bf16.gmra.mrb[0].mxu0 %v780
      %v2062 = vpop.f32.mrb[0].mxu0
      %v2063 = vadd.f32 0.0, %v2062
      %v2064 = vpop.f32.mrb[0].mxu0
      %v2065 = vpop.f32.mrb[0].mxu0
      %v2066 = vadd.f32 0.0, %v2065
      %v2067 = vpop.f32.mrb[0].mxu0
      %2068 = vmatprep.mubr.bf16.mxu0 0
      %2069 = vmatmul.mubr.bf16.gmra.mrb[0].mxu0 %v783
      %v2070 = vpop.f32.mrb[0].mxu0
      %v2071 = vadd.f32 0.0, %v2070
      %v2072 = vpop.f32.mrb[0].mxu0
      %v2073 = vpop.f32.mrb[0].mxu0
      %v2074 = vadd.f32 0.0, %v2073
      %v2075 = vpop.f32.mrb[0].mxu0
      %2076 = vmatprep.mubr.bf16.mxu0 0
      %2077 = vmatmul.mubr.bf16.gmra.mrb[0].mxu0 %v1919
      %v2078 = vpop.f32.mrb[0].mxu0
      %v2079 = vadd.f32 0.0, %v2078
      %v2080 = vpop.f32.mrb[0].mxu0
      %v2081 = vpop.f32.mrb[0].mxu0
      %v2082 = vadd.f32 0.0, %v2081
      %v2083 = vpop.f32.mrb[0].mxu0
      %2084 = vdwg.mxu0
      %v2085 = vadd.f32 %v1857, %v1959
      %v2086 = vadd.f32 %v1858, %v1962
      %v2087 = vadd.f32 %v1859, %v1967
      %v2088 = vadd.f32 %v1860, %v1970
      %v2089 = vadd.f32 %v1861, %v1975
      %v2090 = vadd.f32 %v1862, %v1978
      %v2091 = vadd.f32 %v1863, %v1983
      %v2092 = vadd.f32 %v1864, %v1986
      %v2093 = vadd.f32 %v1865, %v1991
      %v2094 = vadd.f32 %v1866, %v1994
      %v2095 = vadd.f32 %v1867, %v1999
      %v2096 = vadd.f32 %v1868, %v2002
      %v2097 = vadd.f32 %v1869, %v2007
      %v2098 = vadd.f32 %v1870, %v2010
      %v2099 = vadd.f32 %v1871, %v2015
      %v2100 = vadd.f32 %v1872, %v2018
      %v2101 = vadd.f32 %v1873, %v2023
      %v2102 = vadd.f32 %v1874, %v2026
      %v2103 = vadd.f32 %v1875, %v2031
      %v2104 = vadd.f32 %v1876, %v2034
      %v2105 = vadd.f32 %v1877, %v2039
      %v2106 = vadd.f32 %v1878, %v2042
      %v2107 = vadd.f32 %v1879, %v2047
      %v2108 = vadd.f32 %v1880, %v2050
      %v2109 = vadd.f32 %v1881, %v2055
      %v2110 = vadd.f32 %v1882, %v2058
      %v2111 = vadd.f32 %v1883, %v2063
      %v2112 = vadd.f32 %v1884, %v2066
      %v2113 = vadd.f32 %v1885, %v2071
      %v2114 = vadd.f32 %v1886, %v2074
      %v2115 = vadd.f32 %v1887, %v2079
      %v2116 = vadd.f32 %v1888, %v2082
      %v2119 = vrot.slane %v296, 5
      %v2120 = vrot.slane %v2119, 4
      %v2121 = vrot.slane %v259, 5
      %v2122 = vsel %vm1276, %v2120, %v2121
      %v2123 = vrot.slane %v2121, 4
      %v2124 = vrot.slane %v278, 5
      %v2125 = vsel %vm1276, %v2123, %v2124
      %s2126 = scalar_lea.vmem %s1, 10
      %v2127 = vld [vmem:[%s2126] sm:$0x3]
      %v2128 = vunpack.c.l.b16 %v2122
      %v2129 = vunpack.c.l.b16 %v2125
      %v2130 = vpack.c.b16 %v2129, %v2128
      %v2132 = vsel %vm736, %v2130, 0
      %v2135 = vsel %vm785, %v2127, 0
      %2137 = vmatprep.subr.bf16.mxu0 0
      %2138 = vmatpush1.bf16.msra.mxu0 %v2135
      %2139 = vmatprep.subr.bf16.mxu0 0
      %2140 = vmatpush1.bf16.msra.mxu0 0
      %2141 = vmatprep.subr.bf16.mxu0 0
      %2142 = vmatpush1.bf16.msra.mxu0 0
      %2143 = vmatprep.subr.bf16.mxu0 0
      %2144 = vmatpush1.bf16.msra.mxu0 0
      %2145 = vmatprep.subr.bf16.mxu0 0
      %2146 = vmatpush1.bf16.msra.mxu0 0
      %2147 = vmatprep.subr.bf16.mxu0 0
      %2148 = vmatpush1.bf16.msra.mxu0 0
      %2149 = vmatprep.subr.bf16.mxu0 0
      %2150 = vmatpush1.bf16.msra.mxu0 0
      %2151 = vmatprep.subr.bf16.mxu0 0
      %2152 = vmatpush1.bf16.msra.mxu0 0
      %2153 = vmatprep.subr.bf16.mxu0 0
      %2154 = vmatpush1.bf16.msra.mxu0 0
      %2155 = vmatprep.subr.bf16.mxu0 0
      %2156 = vmatpush1.bf16.msra.mxu0 0
      %2157 = vmatprep.subr.bf16.mxu0 0
      %2158 = vmatpush1.bf16.msra.mxu0 0
      %2159 = vmatprep.subr.bf16.mxu0 0
      %2160 = vmatpush1.bf16.msra.mxu0 0
      %2161 = vmatprep.subr.bf16.mxu0 0
      %2162 = vmatpush1.bf16.msra.mxu0 0
      %2163 = vmatprep.subr.bf16.mxu0 0
      %2164 = vmatpush1.bf16.msra.mxu0 0
      %2165 = vmatprep.subr.bf16.mxu0 0
      %2166 = vmatpush1.bf16.msra.mxu0 0
      %2167 = vmatprep.subr.bf16.mxu0 0
      %2168 = vmatpush1.bf16.msra.mxu0 0
      %2169 = vmatprep.mubr.bf16.mxu0 0
      %2170 = vmatmul.mubr.bf16.gmra.mrb[0].mxu0 %v1443
      %v2171 = vpop.f32.mrb[0].mxu0
      %v2172 = vadd.f32 0.0, %v2171
      %v2173 = vpop.f32.mrb[0].mxu0
      %v2174 = vpop.f32.mrb[0].mxu0
      %v2175 = vadd.f32 0.0, %v2174
      %v2176 = vpop.f32.mrb[0].mxu0
      %2177 = vmatprep.mubr.bf16.mxu0 0
      %2178 = vmatmul.mubr.bf16.gmra.mrb[0].mxu0 %v1446
      %v2179 = vpop.f32.mrb[0].mxu0
      %v2180 = vadd.f32 0.0, %v2179
      %v2181 = vpop.f32.mrb[0].mxu0
      %v2182 = vpop.f32.mrb[0].mxu0
      %v2183 = vadd.f32 0.0, %v2182
      %v2184 = vpop.f32.mrb[0].mxu0
      %2185 = vmatprep.mubr.bf16.mxu0 0
      %2186 = vmatmul.mubr.bf16.gmra.mrb[0].mxu0 %v1449
      %v2187 = vpop.f32.mrb[0].mxu0
      %v2188 = vadd.f32 0.0, %v2187
      %v2189 = vpop.f32.mrb[0].mxu0
      %v2190 = vpop.f32.mrb[0].mxu0
      %v2191 = vadd.f32 0.0, %v2190
      %v2192 = vpop.f32.mrb[0].mxu0
      %2193 = vmatprep.mubr.bf16.mxu0 0
      %2194 = vmatmul.mubr.bf16.gmra.mrb[0].mxu0 %v1452
      %v2195 = vpop.f32.mrb[0].mxu0
      %v2196 = vadd.f32 0.0, %v2195
      %v2197 = vpop.f32.mrb[0].mxu0
      %v2198 = vpop.f32.mrb[0].mxu0
      %v2199 = vadd.f32 0.0, %v2198
      %v2200 = vpop.f32.mrb[0].mxu0
      %2201 = vmatprep.mubr.bf16.mxu0 0
      %2202 = vmatmul.mubr.bf16.gmra.mrb[0].mxu0 %v1455
      %v2203 = vpop.f32.mrb[0].mxu0
      %v2204 = vadd.f32 0.0, %v2203
      %v2205 = vpop.f32.mrb[0].mxu0
      %v2206 = vpop.f32.mrb[0].mxu0
      %v2207 = vadd.f32 0.0, %v2206
      %v2208 = vpop.f32.mrb[0].mxu0
      %2209 = vmatprep.mubr.bf16.mxu0 0
      %2210 = vmatmul.mubr.bf16.gmra.mrb[0].mxu0 %v1458
      %v2211 = vpop.f32.mrb[0].mxu0
      %v2212 = vadd.f32 0.0, %v2211
      %v2213 = vpop.f32.mrb[0].mxu0
      %v2214 = vpop.f32.mrb[0].mxu0
      %v2215 = vadd.f32 0.0, %v2214
      %v2216 = vpop.f32.mrb[0].mxu0
      %2217 = vmatprep.mubr.bf16.mxu0 0
      %2218 = vmatmul.mubr.bf16.gmra.mrb[0].mxu0 %v1461
      %v2219 = vpop.f32.mrb[0].mxu0
      %v2220 = vadd.f32 0.0, %v2219
      %v2221 = vpop.f32.mrb[0].mxu0
      %v2222 = vpop.f32.mrb[0].mxu0
      %v2223 = vadd.f32 0.0, %v2222
      %v2224 = vpop.f32.mrb[0].mxu0
      %2225 = vmatprep.mubr.bf16.mxu0 0
      %2226 = vmatmul.mubr.bf16.gmra.mrb[0].mxu0 %v1464
      %v2227 = vpop.f32.mrb[0].mxu0
      %v2228 = vadd.f32 0.0, %v2227
      %v2229 = vpop.f32.mrb[0].mxu0
      %v2230 = vpop.f32.mrb[0].mxu0
      %v2231 = vadd.f32 0.0, %v2230
      %v2232 = vpop.f32.mrb[0].mxu0
      %2233 = vmatprep.mubr.bf16.mxu0 0
      %2234 = vmatmul.mubr.bf16.gmra.mrb[0].mxu0 %v1467
      %v2235 = vpop.f32.mrb[0].mxu0
      %v2236 = vadd.f32 0.0, %v2235
      %v2237 = vpop.f32.mrb[0].mxu0
      %v2238 = vpop.f32.mrb[0].mxu0
      %v2239 = vadd.f32 0.0, %v2238
      %v2240 = vpop.f32.mrb[0].mxu0
      %2241 = vmatprep.mubr.bf16.mxu0 0
      %2242 = vmatmul.mubr.bf16.gmra.mrb[0].mxu0 %v1470
      %v2243 = vpop.f32.mrb[0].mxu0
      %v2244 = vadd.f32 0.0, %v2243
      %v2245 = vpop.f32.mrb[0].mxu0
      %v2246 = vpop.f32.mrb[0].mxu0
      %v2247 = vadd.f32 0.0, %v2246
      %v2248 = vpop.f32.mrb[0].mxu0
      %2249 = vmatprep.mubr.bf16.mxu0 0
      %2250 = vmatmul.mubr.bf16.gmra.mrb[0].mxu0 %v1473
      %v2251 = vpop.f32.mrb[0].mxu0
      %v2252 = vadd.f32 0.0, %v2251
      %v2253 = vpop.f32.mrb[0].mxu0
      %v2254 = vpop.f32.mrb[0].mxu0
      %v2255 = vadd.f32 0.0, %v2254
      %v2256 = vpop.f32.mrb[0].mxu0
      %2257 = vmatprep.mubr.bf16.mxu0 0
      %2258 = vmatmul.mubr.bf16.gmra.mrb[0].mxu0 %v1476
      %v2259 = vpop.f32.mrb[0].mxu0
      %v2260 = vadd.f32 0.0, %v2259
      %v2261 = vpop.f32.mrb[0].mxu0
      %v2262 = vpop.f32.mrb[0].mxu0
      %v2263 = vadd.f32 0.0, %v2262
      %v2264 = vpop.f32.mrb[0].mxu0
      %2265 = vmatprep.mubr.bf16.mxu0 0
      %2266 = vmatmul.mubr.bf16.gmra.mrb[0].mxu0 %v1479
      %v2267 = vpop.f32.mrb[0].mxu0
      %v2268 = vadd.f32 0.0, %v2267
      %v2269 = vpop.f32.mrb[0].mxu0
      %v2270 = vpop.f32.mrb[0].mxu0
      %v2271 = vadd.f32 0.0, %v2270
      %v2272 = vpop.f32.mrb[0].mxu0
      %2273 = vmatprep.mubr.bf16.mxu0 0
      %2274 = vmatmul.mubr.bf16.gmra.mrb[0].mxu0 %v1482
      %v2275 = vpop.f32.mrb[0].mxu0
      %v2276 = vadd.f32 0.0, %v2275
      %v2277 = vpop.f32.mrb[0].mxu0
      %v2278 = vpop.f32.mrb[0].mxu0
      %v2279 = vadd.f32 0.0, %v2278
      %v2280 = vpop.f32.mrb[0].mxu0
      %2281 = vmatprep.mubr.bf16.mxu0 0
      %2282 = vmatmul.mubr.bf16.gmra.mrb[0].mxu0 %v1485
      %v2283 = vpop.f32.mrb[0].mxu0
      %v2284 = vadd.f32 0.0, %v2283
      %v2285 = vpop.f32.mrb[0].mxu0
      %v2286 = vpop.f32.mrb[0].mxu0
      %v2287 = vadd.f32 0.0, %v2286
      %v2288 = vpop.f32.mrb[0].mxu0
      %2289 = vmatprep.mubr.bf16.mxu0 0
      %2290 = vmatmul.mubr.bf16.gmra.mrb[0].mxu0 %v2132
      %v2291 = vpop.f32.mrb[0].mxu0
      %v2292 = vadd.f32 0.0, %v2291
      %v2293 = vpop.f32.mrb[0].mxu0
      %v2294 = vpop.f32.mrb[0].mxu0
      %v2295 = vadd.f32 0.0, %v2294
      %v2296 = vpop.f32.mrb[0].mxu0
      %2297 = vdwg.mxu0
      %v2298 = vadd.f32 %v2085, %v2172
      %v2299 = vadd.f32 %v2086, %v2175
      %v2300 = vadd.f32 %v2087, %v2180
      %v2301 = vadd.f32 %v2088, %v2183
      %v2302 = vadd.f32 %v2089, %v2188
      %v2303 = vadd.f32 %v2090, %v2191
      %v2304 = vadd.f32 %v2091, %v2196
      %v2305 = vadd.f32 %v2092, %v2199
      %v2306 = vadd.f32 %v2093, %v2204
      %v2307 = vadd.f32 %v2094, %v2207
      %v2308 = vadd.f32 %v2095, %v2212
      %v2309 = vadd.f32 %v2096, %v2215
      %v2310 = vadd.f32 %v2097, %v2220
      %v2311 = vadd.f32 %v2098, %v2223
      %v2312 = vadd.f32 %v2099, %v2228
      %v2313 = vadd.f32 %v2100, %v2231
      %v2314 = vadd.f32 %v2101, %v2236
      %v2315 = vadd.f32 %v2102, %v2239
      %v2316 = vadd.f32 %v2103, %v2244
      %v2317 = vadd.f32 %v2104, %v2247
      %v2318 = vadd.f32 %v2105, %v2252
      %v2319 = vadd.f32 %v2106, %v2255
      %v2320 = vadd.f32 %v2107, %v2260
      %v2321 = vadd.f32 %v2108, %v2263
      %v2322 = vadd.f32 %v2109, %v2268
      %v2323 = vadd.f32 %v2110, %v2271
      %v2324 = vadd.f32 %v2111, %v2276
      %v2325 = vadd.f32 %v2112, %v2279
      %v2326 = vadd.f32 %v2113, %v2284
      %v2327 = vadd.f32 %v2114, %v2287
      %v2328 = vadd.f32 %v2115, %v2292
      %v2329 = vadd.f32 %v2116, %v2295
      %s2330 = scalar_lea.vmem %s1, 12
      %v2331 = vld [vmem:[%s2330] sm:$0x3]
      %v2334 = vunpack.c.l.b16 %v260
      %v2335 = vunpack.c.l.b16 %v261
      %v2336 = vpack.c.b16 %v2335, %v2334
      %v2338 = vsel %vm736, %v2336, 0
      %v2341 = vsel %vm785, %v2331, 0
      %2343 = vmatprep.subr.bf16.mxu0 0
      %2344 = vmatpush1.bf16.msra.mxu0 %v2341
      %2345 = vmatprep.subr.bf16.mxu0 0
      %2346 = vmatpush1.bf16.msra.mxu0 0
      %2347 = vmatprep.subr.bf16.mxu0 0
      %2348 = vmatpush1.bf16.msra.mxu0 0
      %2349 = vmatprep.subr.bf16.mxu0 0
      %2350 = vmatpush1.bf16.msra.mxu0 0
      %2351 = vmatprep.subr.bf16.mxu0 0
      %2352 = vmatpush1.bf16.msra.mxu0 0
      %2353 = vmatprep.subr.bf16.mxu0 0
      %2354 = vmatpush1.bf16.msra.mxu0 0
      %2355 = vmatprep.subr.bf16.mxu0 0
      %2356 = vmatpush1.bf16.msra.mxu0 0
      %2357 = vmatprep.subr.bf16.mxu0 0
      %2358 = vmatpush1.bf16.msra.mxu0 0
      %2359 = vmatprep.subr.bf16.mxu0 0
      %2360 = vmatpush1.bf16.msra.mxu0 0
      %2361 = vmatprep.subr.bf16.mxu0 0
      %2362 = vmatpush1.bf16.msra.mxu0 0
      %2363 = vmatprep.subr.bf16.mxu0 0
      %2364 = vmatpush1.bf16.msra.mxu0 0
      %2365 = vmatprep.subr.bf16.mxu0 0
      %2366 = vmatpush1.bf16.msra.mxu0 0
      %2367 = vmatprep.subr.bf16.mxu0 0
      %2368 = vmatpush1.bf16.msra.mxu0 0
      %2369 = vmatprep.subr.bf16.mxu0 0
      %2370 = vmatpush1.bf16.msra.mxu0 0
      %2371 = vmatprep.subr.bf16.mxu0 0
      %2372 = vmatpush1.bf16.msra.mxu0 0
      %2373 = vmatprep.subr.bf16.mxu0 0
      %2374 = vmatpush1.bf16.msra.mxu0 0
      %2375 = vmatprep.mubr.bf16.mxu0 0
      %2376 = vmatmul.mubr.bf16.gmra.mrb[0].mxu0 %v1037
      %v2377 = vpop.f32.mrb[0].mxu0
      %v2378 = vadd.f32 0.0, %v2377
      %v2379 = vpop.f32.mrb[0].mxu0
      %v2380 = vpop.f32.mrb[0].mxu0
      %v2381 = vadd.f32 0.0, %v2380
      %v2382 = vpop.f32.mrb[0].mxu0
      %2383 = vmatprep.mubr.bf16.mxu0 0
      %2384 = vmatmul.mubr.bf16.gmra.mrb[0].mxu0 %v1040
      %v2385 = vpop.f32.mrb[0].mxu0
      %v2386 = vadd.f32 0.0, %v2385
      %v2387 = vpop.f32.mrb[0].mxu0
      %v2388 = vpop.f32.mrb[0].mxu0
      %v2389 = vadd.f32 0.0, %v2388
      %v2390 = vpop.f32.mrb[0].mxu0
      %2391 = vmatprep.mubr.bf16.mxu0 0
      %2392 = vmatmul.mubr.bf16.gmra.mrb[0].mxu0 %v1043
      %v2393 = vpop.f32.mrb[0].mxu0
      %v2394 = vadd.f32 0.0, %v2393
      %v2395 = vpop.f32.mrb[0].mxu0
      %v2396 = vpop.f32.mrb[0].mxu0
      %v2397 = vadd.f32 0.0, %v2396
      %v2398 = vpop.f32.mrb[0].mxu0
      %2399 = vmatprep.mubr.bf16.mxu0 0
      %2400 = vmatmul.mubr.bf16.gmra.mrb[0].mxu0 %v1046
      %v2401 = vpop.f32.mrb[0].mxu0
      %v2402 = vadd.f32 0.0, %v2401
      %v2403 = vpop.f32.mrb[0].mxu0
      %v2404 = vpop.f32.mrb[0].mxu0
      %v2405 = vadd.f32 0.0, %v2404
      %v2406 = vpop.f32.mrb[0].mxu0
      %2407 = vmatprep.mubr.bf16.mxu0 0
      %2408 = vmatmul.mubr.bf16.gmra.mrb[0].mxu0 %v1049
      %v2409 = vpop.f32.mrb[0].mxu0
      %v2410 = vadd.f32 0.0, %v2409
      %v2411 = vpop.f32.mrb[0].mxu0
      %v2412 = vpop.f32.mrb[0].mxu0
      %v2413 = vadd.f32 0.0, %v2412
      %v2414 = vpop.f32.mrb[0].mxu0
      %2415 = vmatprep.mubr.bf16.mxu0 0
      %2416 = vmatmul.mubr.bf16.gmra.mrb[0].mxu0 %v1052
      %v2417 = vpop.f32.mrb[0].mxu0
      %v2418 = vadd.f32 0.0, %v2417
      %v2419 = vpop.f32.mrb[0].mxu0
      %v2420 = vpop.f32.mrb[0].mxu0
      %v2421 = vadd.f32 0.0, %v2420
      %v2422 = vpop.f32.mrb[0].mxu0
      %2423 = vmatprep.mubr.bf16.mxu0 0
      %2424 = vmatmul.mubr.bf16.gmra.mrb[0].mxu0 %v1055
      %v2425 = vpop.f32.mrb[0].mxu0
      %v2426 = vadd.f32 0.0, %v2425
      %v2427 = vpop.f32.mrb[0].mxu0
      %v2428 = vpop.f32.mrb[0].mxu0
      %v2429 = vadd.f32 0.0, %v2428
      %v2430 = vpop.f32.mrb[0].mxu0
      %2431 = vmatprep.mubr.bf16.mxu0 0
      %2432 = vmatmul.mubr.bf16.gmra.mrb[0].mxu0 %v1058
      %v2433 = vpop.f32.mrb[0].mxu0
      %v2434 = vadd.f32 0.0, %v2433
      %v2435 = vpop.f32.mrb[0].mxu0
      %v2436 = vpop.f32.mrb[0].mxu0
      %v2437 = vadd.f32 0.0, %v2436
      %v2438 = vpop.f32.mrb[0].mxu0
      %2439 = vmatprep.mubr.bf16.mxu0 0
      %2440 = vmatmul.mubr.bf16.gmra.mrb[0].mxu0 %v1061
      %v2441 = vpop.f32.mrb[0].mxu0
      %v2442 = vadd.f32 0.0, %v2441
      %v2443 = vpop.f32.mrb[0].mxu0
      %v2444 = vpop.f32.mrb[0].mxu0
      %v2445 = vadd.f32 0.0, %v2444
      %v2446 = vpop.f32.mrb[0].mxu0
      %2447 = vmatprep.mubr.bf16.mxu0 0
      %2448 = vmatmul.mubr.bf16.gmra.mrb[0].mxu0 %v1064
      %v2449 = vpop.f32.mrb[0].mxu0
      %v2450 = vadd.f32 0.0, %v2449
      %v2451 = vpop.f32.mrb[0].mxu0
      %v2452 = vpop.f32.mrb[0].mxu0
      %v2453 = vadd.f32 0.0, %v2452
      %v2454 = vpop.f32.mrb[0].mxu0
      %2455 = vmatprep.mubr.bf16.mxu0 0
      %2456 = vmatmul.mubr.bf16.gmra.mrb[0].mxu0 %v1067
      %v2457 = vpop.f32.mrb[0].mxu0
      %v2458 = vadd.f32 0.0, %v2457
      %v2459 = vpop.f32.mrb[0].mxu0
      %v2460 = vpop.f32.mrb[0].mxu0
      %v2461 = vadd.f32 0.0, %v2460
      %v2462 = vpop.f32.mrb[0].mxu0
      %2463 = vmatprep.mubr.bf16.mxu0 0
      %2464 = vmatmul.mubr.bf16.gmra.mrb[0].mxu0 %v1070
      %v2465 = vpop.f32.mrb[0].mxu0
      %v2466 = vadd.f32 0.0, %v2465
      %v2467 = vpop.f32.mrb[0].mxu0
      %v2468 = vpop.f32.mrb[0].mxu0
      %v2469 = vadd.f32 0.0, %v2468
      %v2470 = vpop.f32.mrb[0].mxu0
      %2471 = vmatprep.mubr.bf16.mxu0 0
      %2472 = vmatmul.mubr.bf16.gmra.mrb[0].mxu0 %v1073
      %v2473 = vpop.f32.mrb[0].mxu0
      %v2474 = vadd.f32 0.0, %v2473
      %v2475 = vpop.f32.mrb[0].mxu0
      %v2476 = vpop.f32.mrb[0].mxu0
      %v2477 = vadd.f32 0.0, %v2476
      %v2478 = vpop.f32.mrb[0].mxu0
      %2479 = vmatprep.mubr.bf16.mxu0 0
      %2480 = vmatmul.mubr.bf16.gmra.mrb[0].mxu0 %v1076
      %v2481 = vpop.f32.mrb[0].mxu0
      %v2482 = vadd.f32 0.0, %v2481
      %v2483 = vpop.f32.mrb[0].mxu0
      %v2484 = vpop.f32.mrb[0].mxu0
      %v2485 = vadd.f32 0.0, %v2484
      %v2486 = vpop.f32.mrb[0].mxu0
      %2487 = vmatprep.mubr.bf16.mxu0 0
      %2488 = vmatmul.mubr.bf16.gmra.mrb[0].mxu0 %v1691
      %v2489 = vpop.f32.mrb[0].mxu0
      %v2490 = vadd.f32 0.0, %v2489
      %v2491 = vpop.f32.mrb[0].mxu0
      %v2492 = vpop.f32.mrb[0].mxu0
      %v2493 = vadd.f32 0.0, %v2492
      %v2494 = vpop.f32.mrb[0].mxu0
      %2495 = vmatprep.mubr.bf16.mxu0 0
      %2496 = vmatmul.mubr.bf16.gmra.mrb[0].mxu0 %v2338
      %v2497 = vpop.f32.mrb[0].mxu0
      %v2498 = vadd.f32 0.0, %v2497
      %v2499 = vpop.f32.mrb[0].mxu0
      %v2500 = vpop.f32.mrb[0].mxu0
      %v2501 = vadd.f32 0.0, %v2500
      %v2502 = vpop.f32.mrb[0].mxu0
      %2503 = vdwg.mxu0
      %v2504 = vadd.f32 %v2298, %v2378
      %v2505 = vadd.f32 %v2299, %v2381
      %v2506 = vadd.f32 %v2300, %v2386
      %v2507 = vadd.f32 %v2301, %v2389
      %v2508 = vadd.f32 %v2302, %v2394
      %v2509 = vadd.f32 %v2303, %v2397
      %v2510 = vadd.f32 %v2304, %v2402
      %v2511 = vadd.f32 %v2305, %v2405
      %v2512 = vadd.f32 %v2306, %v2410
      %v2513 = vadd.f32 %v2307, %v2413
      %v2514 = vadd.f32 %v2308, %v2418
      %v2515 = vadd.f32 %v2309, %v2421
      %v2516 = vadd.f32 %v2310, %v2426
      %v2517 = vadd.f32 %v2311, %v2429
      %v2518 = vadd.f32 %v2312, %v2434
      %v2519 = vadd.f32 %v2313, %v2437
      %v2520 = vadd.f32 %v2314, %v2442
      %v2521 = vadd.f32 %v2315, %v2445
      %v2522 = vadd.f32 %v2316, %v2450
      %v2523 = vadd.f32 %v2317, %v2453
      %v2524 = vadd.f32 %v2318, %v2458
      %v2525 = vadd.f32 %v2319, %v2461
      %v2526 = vadd.f32 %v2320, %v2466
      %v2527 = vadd.f32 %v2321, %v2469
      %v2528 = vadd.f32 %v2322, %v2474
      %v2529 = vadd.f32 %v2323, %v2477
      %v2530 = vadd.f32 %v2324, %v2482
      %v2531 = vadd.f32 %v2325, %v2485
      %v2532 = vadd.f32 %v2326, %v2490
      %v2533 = vadd.f32 %v2327, %v2493
      %v2534 = vadd.f32 %v2328, %v2498
      %v2535 = vadd.f32 %v2329, %v2501
      %v2537 = vshrl.u32 %v260, 16
      %v2539 = vrot.slane %v2537, 4
      %v2540 = vshll.u32 %v260, 16
      %v2542 = vrot.slane %v2540, 5
      %v2543 = vor.u32 %v2539, %v2542
      %v2544 = vrot.slane %v2543, 4
      %v2546 = vshll.u32 %v261, 16
      %v2548 = vrot.slane %v2546, 5
      %v2549 = vsel %vm301, %v2544, %v2548
      %v2550 = vshrl.u32 %v261, 16
      %v2552 = vrot.slane %v2550, 4
      %v2553 = vor.u32 %v2552, %v2548
      %v2554 = vrot.slane %v2553, 4
      %v2556 = vshll.u32 %v279, 16
      %v2558 = vrot.slane %v2556, 5
      %v2559 = vsel %vm301, %v2554, %v2558
      %s2560 = scalar_lea.vmem %s1, 14
      %v2561 = vld [vmem:[%s2560] sm:$0x3]
      %v2562 = vunpack.c.l.b16 %v2549
      %v2563 = vunpack.c.l.b16 %v2559
      %v2564 = vpack.c.b16 %v2563, %v2562
      %v2566 = vsel %vm736, %v2564, 0
      %v2569 = vsel %vm785, %v2561, 0
      %2571 = vmatprep.subr.bf16.mxu0 0
      %2572 = vmatpush1.bf16.msra.mxu0 %v2569
      %2573 = vmatprep.subr.bf16.mxu0 0
      %2574 = vmatpush1.bf16.msra.mxu0 0
      %2575 = vmatprep.subr.bf16.mxu0 0
      %2576 = vmatpush1.bf16.msra.mxu0 0
      %2577 = vmatprep.subr.bf16.mxu0 0
      %2578 = vmatpush1.bf16.msra.mxu0 0
      %2579 = vmatprep.subr.bf16.mxu0 0
      %2580 = vmatpush1.bf16.msra.mxu0 0
      %2581 = vmatprep.subr.bf16.mxu0 0
      %2582 = vmatpush1.bf16.msra.mxu0 0
      %2583 = vmatprep.subr.bf16.mxu0 0
      %2584 = vmatpush1.bf16.msra.mxu0 0
      %2585 = vmatprep.subr.bf16.mxu0 0
      %2586 = vmatpush1.bf16.msra.mxu0 0
      %2587 = vmatprep.subr.bf16.mxu0 0
      %2588 = vmatpush1.bf16.msra.mxu0 0
      %2589 = vmatprep.subr.bf16.mxu0 0
      %2590 = vmatpush1.bf16.msra.mxu0 0
      %2591 = vmatprep.subr.bf16.mxu0 0
      %2592 = vmatpush1.bf16.msra.mxu0 0
      %2593 = vmatprep.subr.bf16.mxu0 0
      %2594 = vmatpush1.bf16.msra.mxu0 0
      %2595 = vmatprep.subr.bf16.mxu0 0
      %2596 = vmatpush1.bf16.msra.mxu0 0
      %2597 = vmatprep.subr.bf16.mxu0 0
      %2598 = vmatpush1.bf16.msra.mxu0 0
      %2599 = vmatprep.subr.bf16.mxu0 0
      %2600 = vmatpush1.bf16.msra.mxu0 0
      %2601 = vmatprep.subr.bf16.mxu0 0
      %2602 = vmatpush1.bf16.msra.mxu0 0
      %2603 = vmatprep.mubr.bf16.mxu0 0
      %2604 = vmatmul.mubr.bf16.gmra.mrb[0].mxu0 %v744
      %v2605 = vpop.f32.mrb[0].mxu0
      %v2606 = vadd.f32 0.0, %v2605
      %v2607 = vpop.f32.mrb[0].mxu0
      %v2608 = vpop.f32.mrb[0].mxu0
      %v2609 = vadd.f32 0.0, %v2608
      %v2610 = vpop.f32.mrb[0].mxu0
      %2611 = vmatprep.mubr.bf16.mxu0 0
      %2612 = vmatmul.mubr.bf16.gmra.mrb[0].mxu0 %v747
      %v2613 = vpop.f32.mrb[0].mxu0
      %v2614 = vadd.f32 0.0, %v2613
      %v2615 = vpop.f32.mrb[0].mxu0
      %v2616 = vpop.f32.mrb[0].mxu0
      %v2617 = vadd.f32 0.0, %v2616
      %v2618 = vpop.f32.mrb[0].mxu0
      %2619 = vmatprep.mubr.bf16.mxu0 0
      %2620 = vmatmul.mubr.bf16.gmra.mrb[0].mxu0 %v750
      %v2621 = vpop.f32.mrb[0].mxu0
      %v2622 = vadd.f32 0.0, %v2621
      %v2623 = vpop.f32.mrb[0].mxu0
      %v2624 = vpop.f32.mrb[0].mxu0
      %v2625 = vadd.f32 0.0, %v2624
      %v2626 = vpop.f32.mrb[0].mxu0
      %2627 = vmatprep.mubr.bf16.mxu0 0
      %2628 = vmatmul.mubr.bf16.gmra.mrb[0].mxu0 %v753
      %v2629 = vpop.f32.mrb[0].mxu0
      %v2630 = vadd.f32 0.0, %v2629
      %v2631 = vpop.f32.mrb[0].mxu0
      %v2632 = vpop.f32.mrb[0].mxu0
      %v2633 = vadd.f32 0.0, %v2632
      %v2634 = vpop.f32.mrb[0].mxu0
      %2635 = vmatprep.mubr.bf16.mxu0 0
      %2636 = vmatmul.mubr.bf16.gmra.mrb[0].mxu0 %v756
      %v2637 = vpop.f32.mrb[0].mxu0
      %v2638 = vadd.f32 0.0, %v2637
      %v2639 = vpop.f32.mrb[0].mxu0
      %v2640 = vpop.f32.mrb[0].mxu0
      %v2641 = vadd.f32 0.0, %v2640
      %v2642 = vpop.f32.mrb[0].mxu0
      %2643 = vmatprep.mubr.bf16.mxu0 0
      %2644 = vmatmul.mubr.bf16.gmra.mrb[0].mxu0 %v759
      %v2645 = vpop.f32.mrb[0].mxu0
      %v2646 = vadd.f32 0.0, %v2645
      %v2647 = vpop.f32.mrb[0].mxu0
      %v2648 = vpop.f32.mrb[0].mxu0
      %v2649 = vadd.f32 0.0, %v2648
      %v2650 = vpop.f32.mrb[0].mxu0
      %2651 = vmatprep.mubr.bf16.mxu0 0
      %2652 = vmatmul.mubr.bf16.gmra.mrb[0].mxu0 %v762
      %v2653 = vpop.f32.mrb[0].mxu0
      %v2654 = vadd.f32 0.0, %v2653
      %v2655 = vpop.f32.mrb[0].mxu0
      %v2656 = vpop.f32.mrb[0].mxu0
      %v2657 = vadd.f32 0.0, %v2656
      %v2658 = vpop.f32.mrb[0].mxu0
      %2659 = vmatprep.mubr.bf16.mxu0 0
      %2660 = vmatmul.mubr.bf16.gmra.mrb[0].mxu0 %v765
      %v2661 = vpop.f32.mrb[0].mxu0
      %v2662 = vadd.f32 0.0, %v2661
      %v2663 = vpop.f32.mrb[0].mxu0
      %v2664 = vpop.f32.mrb[0].mxu0
      %v2665 = vadd.f32 0.0, %v2664
      %v2666 = vpop.f32.mrb[0].mxu0
      %2667 = vmatprep.mubr.bf16.mxu0 0
      %2668 = vmatmul.mubr.bf16.gmra.mrb[0].mxu0 %v768
      %v2669 = vpop.f32.mrb[0].mxu0
      %v2670 = vadd.f32 0.0, %v2669
      %v2671 = vpop.f32.mrb[0].mxu0
      %v2672 = vpop.f32.mrb[0].mxu0
      %v2673 = vadd.f32 0.0, %v2672
      %v2674 = vpop.f32.mrb[0].mxu0
      %2675 = vmatprep.mubr.bf16.mxu0 0
      %2676 = vmatmul.mubr.bf16.gmra.mrb[0].mxu0 %v771
      %v2677 = vpop.f32.mrb[0].mxu0
      %v2678 = vadd.f32 0.0, %v2677
      %v2679 = vpop.f32.mrb[0].mxu0
      %v2680 = vpop.f32.mrb[0].mxu0
      %v2681 = vadd.f32 0.0, %v2680
      %v2682 = vpop.f32.mrb[0].mxu0
      %2683 = vmatprep.mubr.bf16.mxu0 0
      %2684 = vmatmul.mubr.bf16.gmra.mrb[0].mxu0 %v774
      %v2685 = vpop.f32.mrb[0].mxu0
      %v2686 = vadd.f32 0.0, %v2685
      %v2687 = vpop.f32.mrb[0].mxu0
      %v2688 = vpop.f32.mrb[0].mxu0
      %v2689 = vadd.f32 0.0, %v2688
      %v2690 = vpop.f32.mrb[0].mxu0
      %2691 = vmatprep.mubr.bf16.mxu0 0
      %2692 = vmatmul.mubr.bf16.gmra.mrb[0].mxu0 %v777
      %v2693 = vpop.f32.mrb[0].mxu0
      %v2694 = vadd.f32 0.0, %v2693
      %v2695 = vpop.f32.mrb[0].mxu0
      %v2696 = vpop.f32.mrb[0].mxu0
      %v2697 = vadd.f32 0.0, %v2696
      %v2698 = vpop.f32.mrb[0].mxu0
      %2699 = vmatprep.mubr.bf16.mxu0 0
      %2700 = vmatmul.mubr.bf16.gmra.mrb[0].mxu0 %v780
      %v2701 = vpop.f32.mrb[0].mxu0
      %v2702 = vadd.f32 0.0, %v2701
      %v2703 = vpop.f32.mrb[0].mxu0
      %v2704 = vpop.f32.mrb[0].mxu0
      %v2705 = vadd.f32 0.0, %v2704
      %v2706 = vpop.f32.mrb[0].mxu0
      %2707 = vmatprep.mubr.bf16.mxu0 0
      %2708 = vmatmul.mubr.bf16.gmra.mrb[0].mxu0 %v783
      %v2709 = vpop.f32.mrb[0].mxu0
      %v2710 = vadd.f32 0.0, %v2709
      %v2711 = vpop.f32.mrb[0].mxu0
      %v2712 = vpop.f32.mrb[0].mxu0
      %v2713 = vadd.f32 0.0, %v2712
      %v2714 = vpop.f32.mrb[0].mxu0
      %2715 = vmatprep.mubr.bf16.mxu0 0
      %2716 = vmatmul.mubr.bf16.gmra.mrb[0].mxu0 %v1919
      %v2717 = vpop.f32.mrb[0].mxu0
      %v2718 = vadd.f32 0.0, %v2717
      %v2719 = vpop.f32.mrb[0].mxu0
      %v2720 = vpop.f32.mrb[0].mxu0
      %v2721 = vadd.f32 0.0, %v2720
      %v2722 = vpop.f32.mrb[0].mxu0
      %2723 = vmatprep.mubr.bf16.mxu0 0
      %2724 = vmatmul.mubr.bf16.gmra.mrb[0].mxu0 %v2566
      %v2725 = vpop.f32.mrb[0].mxu0
      %v2726 = vadd.f32 0.0, %v2725
      %v2727 = vpop.f32.mrb[0].mxu0
      %v2728 = vpop.f32.mrb[0].mxu0
      %v2729 = vadd.f32 0.0, %v2728
      %v2730 = vpop.f32.mrb[0].mxu0
      %2731 = vdwg.mxu0
      %v2732 = vadd.f32 %v2504, %v2606
      %v2733 = vadd.f32 %v2505, %v2609
      %v2734 = vadd.f32 %v2506, %v2614
      %v2735 = vadd.f32 %v2507, %v2617
      %v2736 = vadd.f32 %v2508, %v2622
      %v2737 = vadd.f32 %v2509, %v2625
      %v2738 = vadd.f32 %v2510, %v2630
      %v2739 = vadd.f32 %v2511, %v2633
      %v2740 = vadd.f32 %v2512, %v2638
      %v2741 = vadd.f32 %v2513, %v2641
      %v2742 = vadd.f32 %v2514, %v2646
      %v2743 = vadd.f32 %v2515, %v2649
      %v2744 = vadd.f32 %v2516, %v2654
      %v2745 = vadd.f32 %v2517, %v2657
      %v2746 = vadd.f32 %v2518, %v2662
      %v2747 = vadd.f32 %v2519, %v2665
      %v2748 = vadd.f32 %v2520, %v2670
      %v2749 = vadd.f32 %v2521, %v2673
      %v2750 = vadd.f32 %v2522, %v2678
      %v2751 = vadd.f32 %v2523, %v2681
      %v2752 = vadd.f32 %v2524, %v2686
      %v2753 = vadd.f32 %v2525, %v2689
      %v2754 = vadd.f32 %v2526, %v2694
      %v2755 = vadd.f32 %v2527, %v2697
      %v2756 = vadd.f32 %v2528, %v2702
      %v2757 = vadd.f32 %v2529, %v2705
      %v2758 = vadd.f32 %v2530, %v2710
      %v2759 = vadd.f32 %v2531, %v2713
      %v2760 = vadd.f32 %v2532, %v2718
      %v2761 = vadd.f32 %v2533, %v2721
      %v2762 = vadd.f32 %v2534, %v2726
      %v2763 = vadd.f32 %v2535, %v2729
      %v2766 = vrot.slane %v297, 5
      %v2767 = vrot.slane %v2766, 4
      %v2768 = vrot.slane %v261, 5
      %v2769 = vsel %vm1276, %v2767, %v2768
      %v2770 = vrot.slane %v2768, 4
      %v2771 = vrot.slane %v279, 5
      %v2772 = vsel %vm1276, %v2770, %v2771
      %s2773 = scalar_lea.vmem %s1, 16
      %v2774 = vld [vmem:[%s2773] sm:$0x3]
      %v2775 = vunpack.c.l.b16 %v2769
      %v2776 = vunpack.c.l.b16 %v2772
      %v2777 = vpack.c.b16 %v2776, %v2775
      %v2779 = vsel %vm736, %v2777, 0
      %v2782 = vsel %vm785, %v2774, 0
      %2784 = vmatprep.subr.bf16.mxu0 0
      %2785 = vmatpush1.bf16.msra.mxu0 %v2782
      %2786 = vmatprep.subr.bf16.mxu0 0
      %2787 = vmatpush1.bf16.msra.mxu0 0
      %2788 = vmatprep.subr.bf16.mxu0 0
      %2789 = vmatpush1.bf16.msra.mxu0 0
      %2790 = vmatprep.subr.bf16.mxu0 0
      %2791 = vmatpush1.bf16.msra.mxu0 0
      %2792 = vmatprep.subr.bf16.mxu0 0
      %2793 = vmatpush1.bf16.msra.mxu0 0
      %2794 = vmatprep.subr.bf16.mxu0 0
      %2795 = vmatpush1.bf16.msra.mxu0 0
      %2796 = vmatprep.subr.bf16.mxu0 0
      %2797 = vmatpush1.bf16.msra.mxu0 0
      %2798 = vmatprep.subr.bf16.mxu0 0
      %2799 = vmatpush1.bf16.msra.mxu0 0
      %2800 = vmatprep.subr.bf16.mxu0 0
      %2801 = vmatpush1.bf16.msra.mxu0 0
      %2802 = vmatprep.subr.bf16.mxu0 0
      %2803 = vmatpush1.bf16.msra.mxu0 0
      %2804 = vmatprep.subr.bf16.mxu0 0
      %2805 = vmatpush1.bf16.msra.mxu0 0
      %2806 = vmatprep.subr.bf16.mxu0 0
      %2807 = vmatpush1.bf16.msra.mxu0 0
      %2808 = vmatprep.subr.bf16.mxu0 0
      %2809 = vmatpush1.bf16.msra.mxu0 0
      %2810 = vmatprep.subr.bf16.mxu0 0
      %2811 = vmatpush1.bf16.msra.mxu0 0
      %2812 = vmatprep.subr.bf16.mxu0 0
      %2813 = vmatpush1.bf16.msra.mxu0 0
      %2814 = vmatprep.subr.bf16.mxu0 0
      %2815 = vmatpush1.bf16.msra.mxu0 0
      %2816 = vmatprep.mubr.bf16.mxu0 0
      %2817 = vmatmul.mubr.bf16.gmra.mrb[0].mxu0 %v1446
      %v2818 = vpop.f32.mrb[0].mxu0
      %v2819 = vadd.f32 0.0, %v2818
      %v2820 = vpop.f32.mrb[0].mxu0
      %v2821 = vpop.f32.mrb[0].mxu0
      %v2822 = vadd.f32 0.0, %v2821
      %v2823 = vpop.f32.mrb[0].mxu0
      %2824 = vmatprep.mubr.bf16.mxu0 0
      %2825 = vmatmul.mubr.bf16.gmra.mrb[0].mxu0 %v1449
      %v2826 = vpop.f32.mrb[0].mxu0
      %v2827 = vadd.f32 0.0, %v2826
      %v2828 = vpop.f32.mrb[0].mxu0
      %v2829 = vpop.f32.mrb[0].mxu0
      %v2830 = vadd.f32 0.0, %v2829
      %v2831 = vpop.f32.mrb[0].mxu0
      %2832 = vmatprep.mubr.bf16.mxu0 0
      %2833 = vmatmul.mubr.bf16.gmra.mrb[0].mxu0 %v1452
      %v2834 = vpop.f32.mrb[0].mxu0
      %v2835 = vadd.f32 0.0, %v2834
      %v2836 = vpop.f32.mrb[0].mxu0
      %v2837 = vpop.f32.mrb[0].mxu0
      %v2838 = vadd.f32 0.0, %v2837
      %v2839 = vpop.f32.mrb[0].mxu0
      %2840 = vmatprep.mubr.bf16.mxu0 0
      %2841 = vmatmul.mubr.bf16.gmra.mrb[0].mxu0 %v1455
      %v2842 = vpop.f32.mrb[0].mxu0
      %v2843 = vadd.f32 0.0, %v2842
      %v2844 = vpop.f32.mrb[0].mxu0
      %v2845 = vpop.f32.mrb[0].mxu0
      %v2846 = vadd.f32 0.0, %v2845
      %v2847 = vpop.f32.mrb[0].mxu0
      %2848 = vmatprep.mubr.bf16.mxu0 0
      %2849 = vmatmul.mubr.bf16.gmra.mrb[0].mxu0 %v1458
      %v2850 = vpop.f32.mrb[0].mxu0
      %v2851 = vadd.f32 0.0, %v2850
      %v2852 = vpop.f32.mrb[0].mxu0
      %v2853 = vpop.f32.mrb[0].mxu0
      %v2854 = vadd.f32 0.0, %v2853
      %v2855 = vpop.f32.mrb[0].mxu0
      %2856 = vmatprep.mubr.bf16.mxu0 0
      %2857 = vmatmul.mubr.bf16.gmra.mrb[0].mxu0 %v1461
      %v2858 = vpop.f32.mrb[0].mxu0
      %v2859 = vadd.f32 0.0, %v2858
      %v2860 = vpop.f32.mrb[0].mxu0
      %v2861 = vpop.f32.mrb[0].mxu0
      %v2862 = vadd.f32 0.0, %v2861
      %v2863 = vpop.f32.mrb[0].mxu0
      %2864 = vmatprep.mubr.bf16.mxu0 0
      %2865 = vmatmul.mubr.bf16.gmra.mrb[0].mxu0 %v1464
      %v2866 = vpop.f32.mrb[0].mxu0
      %v2867 = vadd.f32 0.0, %v2866
      %v2868 = vpop.f32.mrb[0].mxu0
      %v2869 = vpop.f32.mrb[0].mxu0
      %v2870 = vadd.f32 0.0, %v2869
      %v2871 = vpop.f32.mrb[0].mxu0
      %2872 = vmatprep.mubr.bf16.mxu0 0
      %2873 = vmatmul.mubr.bf16.gmra.mrb[0].mxu0 %v1467
      %v2874 = vpop.f32.mrb[0].mxu0
      %v2875 = vadd.f32 0.0, %v2874
      %v2876 = vpop.f32.mrb[0].mxu0
      %v2877 = vpop.f32.mrb[0].mxu0
      %v2878 = vadd.f32 0.0, %v2877
      %v2879 = vpop.f32.mrb[0].mxu0
      %2880 = vmatprep.mubr.bf16.mxu0 0
      %2881 = vmatmul.mubr.bf16.gmra.mrb[0].mxu0 %v1470
      %v2882 = vpop.f32.mrb[0].mxu0
      %v2883 = vadd.f32 0.0, %v2882
      %v2884 = vpop.f32.mrb[0].mxu0
      %v2885 = vpop.f32.mrb[0].mxu0
      %v2886 = vadd.f32 0.0, %v2885
      %v2887 = vpop.f32.mrb[0].mxu0
      %2888 = vmatprep.mubr.bf16.mxu0 0
      %2889 = vmatmul.mubr.bf16.gmra.mrb[0].mxu0 %v1473
      %v2890 = vpop.f32.mrb[0].mxu0
      %v2891 = vadd.f32 0.0, %v2890
      %v2892 = vpop.f32.mrb[0].mxu0
      %v2893 = vpop.f32.mrb[0].mxu0
      %v2894 = vadd.f32 0.0, %v2893
      %v2895 = vpop.f32.mrb[0].mxu0
      %2896 = vmatprep.mubr.bf16.mxu0 0
      %2897 = vmatmul.mubr.bf16.gmra.mrb[0].mxu0 %v1476
      %v2898 = vpop.f32.mrb[0].mxu0
      %v2899 = vadd.f32 0.0, %v2898
      %v2900 = vpop.f32.mrb[0].mxu0
      %v2901 = vpop.f32.mrb[0].mxu0
      %v2902 = vadd.f32 0.0, %v2901
      %v2903 = vpop.f32.mrb[0].mxu0
      %2904 = vmatprep.mubr.bf16.mxu0 0
      %2905 = vmatmul.mubr.bf16.gmra.mrb[0].mxu0 %v1479
      %v2906 = vpop.f32.mrb[0].mxu0
      %v2907 = vadd.f32 0.0, %v2906
      %v2908 = vpop.f32.mrb[0].mxu0
      %v2909 = vpop.f32.mrb[0].mxu0
      %v2910 = vadd.f32 0.0, %v2909
      %v2911 = vpop.f32.mrb[0].mxu0
      %2912 = vmatprep.mubr.bf16.mxu0 0
      %2913 = vmatmul.mubr.bf16.gmra.mrb[0].mxu0 %v1482
      %v2914 = vpop.f32.mrb[0].mxu0
      %v2915 = vadd.f32 0.0, %v2914
      %v2916 = vpop.f32.mrb[0].mxu0
      %v2917 = vpop.f32.mrb[0].mxu0
      %v2918 = vadd.f32 0.0, %v2917
      %v2919 = vpop.f32.mrb[0].mxu0
      %2920 = vmatprep.mubr.bf16.mxu0 0
      %2921 = vmatmul.mubr.bf16.gmra.mrb[0].mxu0 %v1485
      %v2922 = vpop.f32.mrb[0].mxu0
      %v2923 = vadd.f32 0.0, %v2922
      %v2924 = vpop.f32.mrb[0].mxu0
      %v2925 = vpop.f32.mrb[0].mxu0
      %v2926 = vadd.f32 0.0, %v2925
      %v2927 = vpop.f32.mrb[0].mxu0
      %2928 = vmatprep.mubr.bf16.mxu0 0
      %2929 = vmatmul.mubr.bf16.gmra.mrb[0].mxu0 %v2132
      %v2930 = vpop.f32.mrb[0].mxu0
      %v2931 = vadd.f32 0.0, %v2930
      %v2932 = vpop.f32.mrb[0].mxu0
      %v2933 = vpop.f32.mrb[0].mxu0
      %v2934 = vadd.f32 0.0, %v2933
      %v2935 = vpop.f32.mrb[0].mxu0
      %2936 = vmatprep.mubr.bf16.mxu0 0
      %2937 = vmatmul.mubr.bf16.gmra.mrb[0].mxu0 %v2779
      %v2938 = vpop.f32.mrb[0].mxu0
      %v2939 = vadd.f32 0.0, %v2938
      %v2940 = vpop.f32.mrb[0].mxu0
      %v2941 = vpop.f32.mrb[0].mxu0
      %v2942 = vadd.f32 0.0, %v2941
      %v2943 = vpop.f32.mrb[0].mxu0
      %2944 = vdwg.mxu0
      %v2945 = vadd.f32 %v2732, %v2819
      %v2946 = vadd.f32 %v2733, %v2822
      %v2947 = vadd.f32 %v2734, %v2827
      %v2948 = vadd.f32 %v2735, %v2830
      %v2949 = vadd.f32 %v2736, %v2835
      %v2950 = vadd.f32 %v2737, %v2838
      %v2951 = vadd.f32 %v2738, %v2843
      %v2952 = vadd.f32 %v2739, %v2846
      %v2953 = vadd.f32 %v2740, %v2851
      %v2954 = vadd.f32 %v2741, %v2854
      %v2955 = vadd.f32 %v2742, %v2859
      %v2956 = vadd.f32 %v2743, %v2862
      %v2957 = vadd.f32 %v2744, %v2867
      %v2958 = vadd.f32 %v2745, %v2870
      %v2959 = vadd.f32 %v2746, %v2875
      %v2960 = vadd.f32 %v2747, %v2878
      %v2961 = vadd.f32 %v2748, %v2883
      %v2962 = vadd.f32 %v2749, %v2886
      %v2963 = vadd.f32 %v2750, %v2891
      %v2964 = vadd.f32 %v2751, %v2894
      %v2965 = vadd.f32 %v2752, %v2899
      %v2966 = vadd.f32 %v2753, %v2902
      %v2967 = vadd.f32 %v2754, %v2907
      %v2968 = vadd.f32 %v2755, %v2910
      %v2969 = vadd.f32 %v2756, %v2915
      %v2970 = vadd.f32 %v2757, %v2918
      %v2971 = vadd.f32 %v2758, %v2923
      %v2972 = vadd.f32 %v2759, %v2926
      %v2973 = vadd.f32 %v2760, %v2931
      %v2974 = vadd.f32 %v2761, %v2934
      %v2975 = vadd.f32 %v2762, %v2939
      %v2976 = vadd.f32 %v2763, %v2942
      %v2977 = vld [vmem:[%s2] sm:$0x1]
      %v2979 = vlaneseq
      %v2980 = vshrl.u32 %v2979, 7
      %v2981 = vsub.s32 0, %v2980
      %v2982 = vrot.slane %v2977, %v2981
      %v2984 = vadd.f32 %v2945, %v2982
      %v2985 = vadd.f32 %v2946, %v2982
      %v2986 = vadd.f32 %v2947, %v2982
      %v2987 = vadd.f32 %v2948, %v2982
      %v2988 = vadd.f32 %v2949, %v2982
      %v2989 = vadd.f32 %v2950, %v2982
      %v2990 = vadd.f32 %v2951, %v2982
      %v2991 = vadd.f32 %v2952, %v2982
      %v2992 = vadd.f32 %v2953, %v2982
      %v2993 = vadd.f32 %v2954, %v2982
      %v2994 = vadd.f32 %v2955, %v2982
      %v2995 = vadd.f32 %v2956, %v2982
      %v2996 = vadd.f32 %v2957, %v2982
      %v2997 = vadd.f32 %v2958, %v2982
      %v2998 = vadd.f32 %v2959, %v2982
      %v2999 = vadd.f32 %v2960, %v2982
      %v3000 = vadd.f32 %v2961, %v2982
      %v3001 = vadd.f32 %v2962, %v2982
      %v3002 = vadd.f32 %v2963, %v2982
      %v3003 = vadd.f32 %v2964, %v2982
      %v3004 = vadd.f32 %v2965, %v2982
      %v3005 = vadd.f32 %v2966, %v2982
      %v3006 = vadd.f32 %v2967, %v2982
      %v3007 = vadd.f32 %v2968, %v2982
      %v3008 = vadd.f32 %v2969, %v2982
      %v3009 = vadd.f32 %v2970, %v2982
      %v3010 = vadd.f32 %v2971, %v2982
      %v3011 = vadd.f32 %v2972, %v2982
      %v3012 = vadd.f32 %v2973, %v2982
      %v3013 = vadd.f32 %v2974, %v2982
      %v3014 = vadd.f32 %v2975, %v2982
      %v3015 = vadd.f32 %v2976, %v2982
      %v3016 = vmax.f32 %v2984, 0.0
      %v3017 = vmax.f32 %v2985, 0.0
      %v3018 = vmax.f32 %v2986, 0.0
      %v3019 = vmax.f32 %v2987, 0.0
      %v3020 = vmax.f32 %v2988, 0.0
      %v3021 = vmax.f32 %v2989, 0.0
      %v3022 = vmax.f32 %v2990, 0.0
      %v3023 = vmax.f32 %v2991, 0.0
      %v3024 = vmax.f32 %v2992, 0.0
      %v3025 = vmax.f32 %v2993, 0.0
      %v3026 = vmax.f32 %v2994, 0.0
      %v3027 = vmax.f32 %v2995, 0.0
      %v3028 = vmax.f32 %v2996, 0.0
      %v3029 = vmax.f32 %v2997, 0.0
      %v3030 = vmax.f32 %v2998, 0.0
      %v3031 = vmax.f32 %v2999, 0.0
      %v3032 = vmax.f32 %v3000, 0.0
      %v3033 = vmax.f32 %v3001, 0.0
      %v3034 = vmax.f32 %v3002, 0.0
      %v3035 = vmax.f32 %v3003, 0.0
      %v3036 = vmax.f32 %v3004, 0.0
      %v3037 = vmax.f32 %v3005, 0.0
      %v3038 = vmax.f32 %v3006, 0.0
      %v3039 = vmax.f32 %v3007, 0.0
      %v3040 = vmax.f32 %v3008, 0.0
      %v3041 = vmax.f32 %v3009, 0.0
      %v3042 = vmax.f32 %v3010, 0.0
      %v3043 = vmax.f32 %v3011, 0.0
      %v3044 = vmax.f32 %v3012, 0.0
      %v3045 = vmax.f32 %v3013, 0.0
      %v3046 = vmax.f32 %v3014, 0.0
      %v3047 = vmax.f32 %v3015, 0.0
      %vm3048 = vcmask 60416
      %3049 = vst.msk [vmem:[#allocation2] sm:$0xf] %vm3048, 0
      %3050 = vst.msk [vmem:[#allocation2 + $0x4] sm:$0xf] %vm3048, 0
      %vm3051 = vcmask 57344
      %3052 = vst.msk [vmem:[#allocation2 + $0x8] sm:$0x1] %vm3051, 0
      %s3053 = scalar_lea.vmem [#allocation2], 204
      %3054 = vst.msk [vmem:[%s3053] sm:$0xf] %vm3048, 0
      %3055 = vst.msk [vmem:[%s3053 + $0x4] sm:$0xf] %vm3048, 0
      %3056 = vst.msk [vmem:[%s3053 + $0x8] sm:$0x1] %vm3051, 0
      %s3057 = scalar_lea.vmem [#allocation2], 12
      %vm3058 = vcmask 57344
      %vm3059 = vsmask.f32 256
      %vm3060 = vmand %vm3058, %vm3059
      %v3061 = vld [vmem:[%s3057] sm:$0x1]
      %v3062 = vsel %vm3060, 0, %v3061
      %3063 = vst [vmem:[%s3057] sm:$0x1] %v3062
      %v3064 = vld [vmem:[%s3057 + $0xc] sm:$0x1]
      %v3065 = vsel %vm3060, 0, %v3064
      %3066 = vst [vmem:[%s3057 + $0xc] sm:$0x1] %v3065
      %v3067 = vld [vmem:[%s3057 + $0x18] sm:$0x1]
      %v3068 = vsel %vm3060, 0, %v3067
      %3069 = vst [vmem:[%s3057 + $0x18] sm:$0x1] %v3068
      %v3070 = vld [vmem:[%s3057 + $0x24] sm:$0x1]
      %v3071 = vsel %vm3060, 0, %v3070
      %3072 = vst [vmem:[%s3057 + $0x24] sm:$0x1] %v3071
      %v3073 = vld [vmem:[%s3057 + $0x30] sm:$0x1]
      %v3074 = vsel %vm3060, 0, %v3073
      %3075 = vst [vmem:[%s3057 + $0x30] sm:$0x1] %v3074
      %v3076 = vld [vmem:[%s3057 + $0x3c] sm:$0x1]
      %v3077 = vsel %vm3060, 0, %v3076
      %3078 = vst [vmem:[%s3057 + $0x3c] sm:$0x1] %v3077
      %v3079 = vld [vmem:[%s3057 + $0x48] sm:$0x1]
      %v3080 = vsel %vm3060, 0, %v3079
      %3081 = vst [vmem:[%s3057 + $0x48] sm:$0x1] %v3080
      %v3082 = vld [vmem:[%s3057 + $0x54] sm:$0x1]
      %v3083 = vsel %vm3060, 0, %v3082
      %3084 = vst [vmem:[%s3057 + $0x54] sm:$0x1] %v3083
      %v3085 = vld [vmem:[%s3057 + $0x60] sm:$0x1]
      %v3086 = vsel %vm3060, 0, %v3085
      %3087 = vst [vmem:[%s3057 + $0x60] sm:$0x1] %v3086
      %v3088 = vld [vmem:[%s3057 + $0x6c] sm:$0x1]
      %v3089 = vsel %vm3060, 0, %v3088
      %3090 = vst [vmem:[%s3057 + $0x6c] sm:$0x1] %v3089
      %v3091 = vld [vmem:[%s3057 + $0x78] sm:$0x1]
      %v3092 = vsel %vm3060, 0, %v3091
      %3093 = vst [vmem:[%s3057 + $0x78] sm:$0x1] %v3092
      %v3094 = vld [vmem:[%s3057 + $0x84] sm:$0x1]
      %v3095 = vsel %vm3060, 0, %v3094
      %3096 = vst [vmem:[%s3057 + $0x84] sm:$0x1] %v3095
      %v3097 = vld [vmem:[%s3057 + $0x90] sm:$0x1]
      %v3098 = vsel %vm3060, 0, %v3097
      %3099 = vst [vmem:[%s3057 + $0x90] sm:$0x1] %v3098
      %v3100 = vld [vmem:[%s3057 + $0x9c] sm:$0x1]
      %v3101 = vsel %vm3060, 0, %v3100
      %3102 = vst [vmem:[%s3057 + $0x9c] sm:$0x1] %v3101
      %v3103 = vld [vmem:[%s3057 + $0xa8] sm:$0x1]
      %v3104 = vsel %vm3060, 0, %v3103
      %3105 = vst [vmem:[%s3057 + $0xa8] sm:$0x1] %v3104
      %v3106 = vld [vmem:[%s3057 + $0xb4] sm:$0x1]
      %v3107 = vsel %vm3060, 0, %v3106
      %3108 = vst [vmem:[%s3057 + $0xb4] sm:$0x1] %v3107
      %vm3109 = vsmask.f32 7938
      %vm3110 = vmand %vm3058, %vm3109
      %v3111 = vld [vmem:[%s3057 + $0x8] sm:$0x1]
      %v3112 = vsel %vm3110, 0, %v3111
      %3113 = vst [vmem:[%s3057 + $0x8] sm:$0x1] %v3112
      %v3114 = vld [vmem:[%s3057 + $0x14] sm:$0x1]
      %v3115 = vsel %vm3110, 0, %v3114
      %3116 = vst [vmem:[%s3057 + $0x14] sm:$0x1] %v3115
      %v3117 = vld [vmem:[%s3057 + $0x20] sm:$0x1]
      %v3118 = vsel %vm3110, 0, %v3117
      %3119 = vst [vmem:[%s3057 + $0x20] sm:$0x1] %v3118
      %v3120 = vld [vmem:[%s3057 + $0x2c] sm:$0x1]
      %v3121 = vsel %vm3110, 0, %v3120
      %3122 = vst [vmem:[%s3057 + $0x2c] sm:$0x1] %v3121
      %v3123 = vld [vmem:[%s3057 + $0x38] sm:$0x1]
      %v3124 = vsel %vm3110, 0, %v3123
      %3125 = vst [vmem:[%s3057 + $0x38] sm:$0x1] %v3124
      %v3126 = vld [vmem:[%s3057 + $0x44] sm:$0x1]
      %v3127 = vsel %vm3110, 0, %v3126
      %3128 = vst [vmem:[%s3057 + $0x44] sm:$0x1] %v3127
      %v3129 = vld [vmem:[%s3057 + $0x50] sm:$0x1]
      %v3130 = vsel %vm3110, 0, %v3129
      %3131 = vst [vmem:[%s3057 + $0x50] sm:$0x1] %v3130
      %v3132 = vld [vmem:[%s3057 + $0x5c] sm:$0x1]
      %v3133 = vsel %vm3110, 0, %v3132
      %3134 = vst [vmem:[%s3057 + $0x5c] sm:$0x1] %v3133
      %v3135 = vld [vmem:[%s3057 + $0x68] sm:$0x1]
      %v3136 = vsel %vm3110, 0, %v3135
      %3137 = vst [vmem:[%s3057 + $0x68] sm:$0x1] %v3136
      %v3138 = vld [vmem:[%s3057 + $0x74] sm:$0x1]
      %v3139 = vsel %vm3110, 0, %v3138
      %3140 = vst [vmem:[%s3057 + $0x74] sm:$0x1] %v3139
      %v3141 = vld [vmem:[%s3057 + $0x80] sm:$0x1]
      %v3142 = vsel %vm3110, 0, %v3141
      %3143 = vst [vmem:[%s3057 + $0x80] sm:$0x1] %v3142
      %v3144 = vld [vmem:[%s3057 + $0x8c] sm:$0x1]
      %v3145 = vsel %vm3110, 0, %v3144
      %3146 = vst [vmem:[%s3057 + $0x8c] sm:$0x1] %v3145
      %v3147 = vld [vmem:[%s3057 + $0x98] sm:$0x1]
      %v3148 = vsel %vm3110, 0, %v3147
      %3149 = vst [vmem:[%s3057 + $0x98] sm:$0x1] %v3148
      %v3150 = vld [vmem:[%s3057 + $0xa4] sm:$0x1]
      %v3151 = vsel %vm3110, 0, %v3150
      %3152 = vst [vmem:[%s3057 + $0xa4] sm:$0x1] %v3151
      %v3153 = vld [vmem:[%s3057 + $0xb0] sm:$0x1]
      %v3154 = vsel %vm3110, 0, %v3153
      %3155 = vst [vmem:[%s3057 + $0xb0] sm:$0x1] %v3154
      %v3156 = vld [vmem:[%s3057 + $0xbc] sm:$0x1]
      %v3157 = vsel %vm3110, 0, %v3156
      %3158 = vst [vmem:[%s3057 + $0xbc] sm:$0x1] %v3157
      %v3159 = vpack.c.bf16 %v3017, %v3016
      %v3160 = vpack.c.bf16 %v3019, %v3018
      %v3161 = vpack.c.bf16 %v3021, %v3020
      %v3162 = vpack.c.bf16 %v3023, %v3022
      %v3163 = vpack.c.bf16 %v3025, %v3024
      %v3164 = vpack.c.bf16 %v3027, %v3026
      %v3165 = vpack.c.bf16 %v3029, %v3028
      %v3166 = vpack.c.bf16 %v3031, %v3030
      %v3167 = vpack.c.bf16 %v3033, %v3032
      %v3168 = vpack.c.bf16 %v3035, %v3034
      %v3169 = vpack.c.bf16 %v3037, %v3036
      %v3170 = vpack.c.bf16 %v3039, %v3038
      %v3171 = vpack.c.bf16 %v3041, %v3040
      %v3172 = vpack.c.bf16 %v3043, %v3042
      %v3173 = vpack.c.bf16 %v3045, %v3044
      %v3174 = vpack.c.bf16 %v3047, %v3046
      %v3191 = vunpack.c.l.b16 %v3159
      %v3192 = vunpack.c.h.b16 %v3159
      %v3193 = vunpack.c.l.b16 %v3160
      %v3194 = vunpack.c.h.b16 %v3160
      %v3195 = vunpack.c.l.b16 %v3161
      %v3196 = vunpack.c.h.b16 %v3161
      %v3197 = vunpack.c.l.b16 %v3162
      %v3198 = vunpack.c.h.b16 %v3162
      %v3199 = vunpack.c.l.b16 %v3163
      %v3200 = vunpack.c.h.b16 %v3163
      %v3201 = vunpack.c.l.b16 %v3164
      %v3202 = vunpack.c.h.b16 %v3164
      %v3203 = vunpack.c.l.b16 %v3165
      %v3204 = vunpack.c.h.b16 %v3165
      %v3205 = vunpack.c.l.b16 %v3166
      %v3206 = vunpack.c.h.b16 %v3166
      %v3207 = vunpack.c.l.b16 %v3167
      %v3208 = vunpack.c.h.b16 %v3167
      %v3209 = vunpack.c.l.b16 %v3168
      %v3210 = vunpack.c.h.b16 %v3168
      %v3211 = vunpack.c.l.b16 %v3169
      %v3212 = vunpack.c.h.b16 %v3169
      %v3213 = vunpack.c.l.b16 %v3170
      %v3214 = vunpack.c.h.b16 %v3170
      %v3215 = vunpack.c.l.b16 %v3171
      %v3216 = vunpack.c.h.b16 %v3171
      %v3217 = vunpack.c.l.b16 %v3172
      %v3218 = vunpack.c.h.b16 %v3172
      %v3219 = vunpack.c.l.b16 %v3173
      %v3220 = vunpack.c.h.b16 %v3173
      %v3221 = vunpack.c.l.b16 %v3174
      %v3222 = vunpack.c.h.b16 %v3174
      %v3223 = vpack.c.b16 %v3191, %v3191
      %v3224 = vpack.c.b16 %v3192, %v3192
      %v3225 = vpack.c.b16 %v3193, %v3193
      %v3226 = vpack.c.b16 %v3194, %v3194
      %v3227 = vpack.c.b16 %v3195, %v3195
      %v3228 = vpack.c.b16 %v3196, %v3196
      %v3229 = vpack.c.b16 %v3197, %v3197
      %v3230 = vpack.c.b16 %v3198, %v3198
      %v3231 = vpack.c.b16 %v3199, %v3199
      %v3232 = vpack.c.b16 %v3200, %v3200
      %v3233 = vpack.c.b16 %v3201, %v3201
      %v3234 = vpack.c.b16 %v3202, %v3202
      %v3235 = vpack.c.b16 %v3203, %v3203
      %v3236 = vpack.c.b16 %v3204, %v3204
      %v3237 = vpack.c.b16 %v3205, %v3205
      %v3238 = vpack.c.b16 %v3206, %v3206
      %v3239 = vpack.c.b16 %v3207, %v3207
      %v3240 = vpack.c.b16 %v3208, %v3208
      %v3241 = vpack.c.b16 %v3209, %v3209
      %v3242 = vpack.c.b16 %v3210, %v3210
      %v3243 = vpack.c.b16 %v3211, %v3211
      %v3244 = vpack.c.b16 %v3212, %v3212
      %v3245 = vpack.c.b16 %v3213, %v3213
      %v3246 = vpack.c.b16 %v3214, %v3214
      %v3247 = vpack.c.b16 %v3215, %v3215
      %v3248 = vpack.c.b16 %v3216, %v3216
      %v3249 = vpack.c.b16 %v3217, %v3217
      %v3250 = vpack.c.b16 %v3218, %v3218
      %v3251 = vpack.c.b16 %v3219, %v3219
      %v3252 = vpack.c.b16 %v3220, %v3220
      %v3253 = vpack.c.b16 %v3221, %v3221
      %v3254 = vpack.c.b16 %v3222, %v3222
      %vm3255 = vsmask.f32 4368
      %vm3256 = vmor %vm3059, %vm3255
      %v3258 = vshrl.u32 %v3223, 16
      %v3260 = vrot.slane %v3258, 7
      %v3261 = vshll.u32 %v3223, 16
      %v3263 = vor.u32 %v3260, %v3261
      %v3264 = vrot.slane %v3260, 4
      %v3266 = vshrl.u32 %v3224, 16
      %v3268 = vrot.slane %v3266, 7
      %v3269 = vshll.u32 %v3224, 16
      %v3271 = vor.u32 %v3268, %v3269
      %v3272 = vsel %vm3256, %v3264, %v3271
      %v3273 = vrot.slane %v3268, 4
      %v3275 = vshrl.u32 %v3225, 16
      %v3277 = vrot.slane %v3275, 7
      %v3278 = vshll.u32 %v3225, 16
      %v3280 = vor.u32 %v3277, %v3278
      %v3281 = vrot.slane %v3277, 4
      %v3283 = vshrl.u32 %v3226, 16
      %v3285 = vrot.slane %v3283, 7
      %v3286 = vshll.u32 %v3226, 16
      %v3288 = vor.u32 %v3285, %v3286
      %v3289 = vsel %vm3256, %v3281, %v3288
      %v3290 = vrot.slane %v3285, 4
      %v3292 = vshrl.u32 %v3227, 16
      %v3294 = vrot.slane %v3292, 7
      %v3295 = vshll.u32 %v3227, 16
      %v3297 = vor.u32 %v3294, %v3295
      %v3298 = vrot.slane %v3294, 4
      %v3300 = vshrl.u32 %v3228, 16
      %v3302 = vrot.slane %v3300, 7
      %v3303 = vshll.u32 %v3228, 16
      %v3305 = vor.u32 %v3302, %v3303
      %v3306 = vsel %vm3256, %v3298, %v3305
      %v3307 = vrot.slane %v3302, 4
      %v3309 = vshrl.u32 %v3229, 16
      %v3311 = vrot.slane %v3309, 7
      %v3312 = vshll.u32 %v3229, 16
      %v3314 = vor.u32 %v3311, %v3312
      %v3315 = vrot.slane %v3311, 4
      %v3317 = vshrl.u32 %v3230, 16
      %v3319 = vrot.slane %v3317, 7
      %v3320 = vshll.u32 %v3230, 16
      %v3322 = vor.u32 %v3319, %v3320
      %v3323 = vsel %vm3256, %v3315, %v3322
      %v3324 = vrot.slane %v3319, 4
      %v3326 = vshrl.u32 %v3231, 16
      %v3328 = vrot.slane %v3326, 7
      %v3329 = vshll.u32 %v3231, 16
      %v3331 = vor.u32 %v3328, %v3329
      %v3332 = vrot.slane %v3328, 4
      %v3334 = vshrl.u32 %v3232, 16
      %v3336 = vrot.slane %v3334, 7
      %v3337 = vshll.u32 %v3232, 16
      %v3339 = vor.u32 %v3336, %v3337
      %v3340 = vsel %vm3256, %v3332, %v3339
      %v3341 = vrot.slane %v3336, 4
      %v3343 = vshrl.u32 %v3233, 16
      %v3345 = vrot.slane %v3343, 7
      %v3346 = vshll.u32 %v3233, 16
      %v3348 = vor.u32 %v3345, %v3346
      %v3349 = vrot.slane %v3345, 4
      %v3351 = vshrl.u32 %v3234, 16
      %v3353 = vrot.slane %v3351, 7
      %v3354 = vshll.u32 %v3234, 16
      %v3356 = vor.u32 %v3353, %v3354
      %v3357 = vsel %vm3256, %v3349, %v3356
      %v3358 = vrot.slane %v3353, 4
      %v3360 = vshrl.u32 %v3235, 16
      %v3362 = vrot.slane %v3360, 7
      %v3363 = vshll.u32 %v3235, 16
      %v3365 = vor.u32 %v3362, %v3363
      %v3366 = vrot.slane %v3362, 4
      %v3368 = vshrl.u32 %v3236, 16
      %v3370 = vrot.slane %v3368, 7
      %v3371 = vshll.u32 %v3236, 16
      %v3373 = vor.u32 %v3370, %v3371
      %v3374 = vsel %vm3256, %v3366, %v3373
      %v3375 = vrot.slane %v3370, 4
      %v3377 = vshrl.u32 %v3237, 16
      %v3379 = vrot.slane %v3377, 7
      %v3380 = vshll.u32 %v3237, 16
      %v3382 = vor.u32 %v3379, %v3380
      %v3383 = vrot.slane %v3379, 4
      %v3385 = vshrl.u32 %v3238, 16
      %v3387 = vrot.slane %v3385, 7
      %v3388 = vshll.u32 %v3238, 16
      %v3390 = vor.u32 %v3387, %v3388
      %v3391 = vsel %vm3256, %v3383, %v3390
      %v3392 = vrot.slane %v3387, 4
      %v3394 = vshrl.u32 %v3239, 16
      %v3396 = vrot.slane %v3394, 7
      %v3397 = vshll.u32 %v3239, 16
      %v3399 = vor.u32 %v3396, %v3397
      %v3400 = vrot.slane %v3396, 4
      %v3402 = vshrl.u32 %v3240, 16
      %v3404 = vrot.slane %v3402, 7
      %v3405 = vshll.u32 %v3240, 16
      %v3407 = vor.u32 %v3404, %v3405
      %v3408 = vsel %vm3256, %v3400, %v3407
      %v3409 = vrot.slane %v3404, 4
      %v3411 = vshrl.u32 %v3241, 16
      %v3413 = vrot.slane %v3411, 7
      %v3414 = vshll.u32 %v3241, 16
      %v3416 = vor.u32 %v3413, %v3414
      %v3417 = vrot.slane %v3413, 4
      %v3419 = vshrl.u32 %v3242, 16
      %v3421 = vrot.slane %v3419, 7
      %v3422 = vshll.u32 %v3242, 16
      %v3424 = vor.u32 %v3421, %v3422
      %v3425 = vsel %vm3256, %v3417, %v3424
      %v3426 = vrot.slane %v3421, 4
      %v3428 = vshrl.u32 %v3243, 16
      %v3430 = vrot.slane %v3428, 7
      %v3431 = vshll.u32 %v3243, 16
      %v3433 = vor.u32 %v3430, %v3431
      %v3434 = vrot.slane %v3430, 4
      %v3436 = vshrl.u32 %v3244, 16
      %v3438 = vrot.slane %v3436, 7
      %v3439 = vshll.u32 %v3244, 16
      %v3441 = vor.u32 %v3438, %v3439
      %v3442 = vsel %vm3256, %v3434, %v3441
      %v3443 = vrot.slane %v3438, 4
      %v3445 = vshrl.u32 %v3245, 16
      %v3447 = vrot.slane %v3445, 7
      %v3448 = vshll.u32 %v3245, 16
      %v3450 = vor.u32 %v3447, %v3448
      %v3451 = vrot.slane %v3447, 4
      %v3453 = vshrl.u32 %v3246, 16
      %v3455 = vrot.slane %v3453, 7
      %v3456 = vshll.u32 %v3246, 16
      %v3458 = vor.u32 %v3455, %v3456
      %v3459 = vsel %vm3256, %v3451, %v3458
      %v3460 = vrot.slane %v3455, 4
      %v3462 = vshrl.u32 %v3247, 16
      %v3464 = vrot.slane %v3462, 7
      %v3465 = vshll.u32 %v3247, 16
      %v3467 = vor.u32 %v3464, %v3465
      %v3468 = vrot.slane %v3464, 4
      %v3470 = vshrl.u32 %v3248, 16
      %v3472 = vrot.slane %v3470, 7
      %v3473 = vshll.u32 %v3248, 16
      %v3475 = vor.u32 %v3472, %v3473
      %v3476 = vsel %vm3256, %v3468, %v3475
      %v3477 = vrot.slane %v3472, 4
      %v3479 = vshrl.u32 %v3249, 16
      %v3481 = vrot.slane %v3479, 7
      %v3482 = vshll.u32 %v3249, 16
      %v3484 = vor.u32 %v3481, %v3482
      %v3485 = vrot.slane %v3481, 4
      %v3487 = vshrl.u32 %v3250, 16
      %v3489 = vrot.slane %v3487, 7
      %v3490 = vshll.u32 %v3250, 16
      %v3492 = vor.u32 %v3489, %v3490
      %v3493 = vsel %vm3256, %v3485, %v3492
      %v3494 = vrot.slane %v3489, 4
      %v3496 = vshrl.u32 %v3251, 16
      %v3498 = vrot.slane %v3496, 7
      %v3499 = vshll.u32 %v3251, 16
      %v3501 = vor.u32 %v3498, %v3499
      %v3502 = vrot.slane %v3498, 4
      %v3504 = vshrl.u32 %v3252, 16
      %v3506 = vrot.slane %v3504, 7
      %v3507 = vshll.u32 %v3252, 16
      %v3509 = vor.u32 %v3506, %v3507
      %v3510 = vsel %vm3256, %v3502, %v3509
      %v3511 = vrot.slane %v3506, 4
      %v3513 = vshrl.u32 %v3253, 16
      %v3515 = vrot.slane %v3513, 7
      %v3516 = vshll.u32 %v3253, 16
      %v3518 = vor.u32 %v3515, %v3516
      %v3519 = vrot.slane %v3515, 4
      %v3521 = vshrl.u32 %v3254, 16
      %v3523 = vrot.slane %v3521, 7
      %v3524 = vshll.u32 %v3254, 16
      %v3526 = vor.u32 %v3523, %v3524
      %v3527 = vsel %vm3256, %v3519, %v3526
      %v3528 = vrot.slane %v3523, 4
      %vm3577 = vcmask 60416
      %vm3578 = vmand %vm3577, %vm3109
      %v3579 = vld [vmem:[%s3057] sm:$0xf]
      %v3580 = vsel %vm3578, %v3263, %v3579
      %3581 = vst [vmem:[%s3057] sm:$0xf] %v3580
      %3582 = vst.msk [vmem:[%s3057 + $0x4] sm:$0xf] %vm3048, %v3272
      %v3583 = vld [vmem:[%s3057 + $0x8] sm:$0x1]
      %v3584 = vsel %vm3060, %v3273, %v3583
      %3585 = vst [vmem:[%s3057 + $0x8] sm:$0x1] %v3584
      %v3586 = vld [vmem:[%s3057 + $0xc] sm:$0xf]
      %v3587 = vsel %vm3578, %v3280, %v3586
      %3588 = vst [vmem:[%s3057 + $0xc] sm:$0xf] %v3587
      %3589 = vst.msk [vmem:[%s3057 + $0x10] sm:$0xf] %vm3048, %v3289
      %v3590 = vld [vmem:[%s3057 + $0x14] sm:$0x1]
      %v3591 = vsel %vm3060, %v3290, %v3590
      %3592 = vst [vmem:[%s3057 + $0x14] sm:$0x1] %v3591
      %v3593 = vld [vmem:[%s3057 + $0x18] sm:$0xf]
      %v3594 = vsel %vm3578, %v3297, %v3593
      %3595 = vst [vmem:[%s3057 + $0x18] sm:$0xf] %v3594
      %3596 = vst.msk [vmem:[%s3057 + $0x1c] sm:$0xf] %vm3048, %v3306
      %v3597 = vld [vmem:[%s3057 + $0x20] sm:$0x1]
      %v3598 = vsel %vm3060, %v3307, %v3597
      %3599 = vst [vmem:[%s3057 + $0x20] sm:$0x1] %v3598
      %v3600 = vld [vmem:[%s3057 + $0x24] sm:$0xf]
      %v3601 = vsel %vm3578, %v3314, %v3600
      %3602 = vst [vmem:[%s3057 + $0x24] sm:$0xf] %v3601
      %3603 = vst.msk [vmem:[%s3057 + $0x28] sm:$0xf] %vm3048, %v3323
      %v3604 = vld [vmem:[%s3057 + $0x2c] sm:$0x1]
      %v3605 = vsel %vm3060, %v3324, %v3604
      %3606 = vst [vmem:[%s3057 + $0x2c] sm:$0x1] %v3605
      %v3607 = vld [vmem:[%s3057 + $0x30] sm:$0xf]
      %v3608 = vsel %vm3578, %v3331, %v3607
      %3609 = vst [vmem:[%s3057 + $0x30] sm:$0xf] %v3608
      %3610 = vst.msk [vmem:[%s3057 + $0x34] sm:$0xf] %vm3048, %v3340
      %v3611 = vld [vmem:[%s3057 + $0x38] sm:$0x1]
      %v3612 = vsel %vm3060, %v3341, %v3611
      %3613 = vst [vmem:[%s3057 + $0x38] sm:$0x1] %v3612
      %v3614 = vld [vmem:[%s3057 + $0x3c] sm:$0xf]
      %v3615 = vsel %vm3578, %v3348, %v3614
      %3616 = vst [vmem:[%s3057 + $0x3c] sm:$0xf] %v3615
      %3617 = vst.msk [vmem:[%s3057 + $0x40] sm:$0xf] %vm3048, %v3357
      %v3618 = vld [vmem:[%s3057 + $0x44] sm:$0x1]
      %v3619 = vsel %vm3060, %v3358, %v3618
      %3620 = vst [vmem:[%s3057 + $0x44] sm:$0x1] %v3619
      %v3621 = vld [vmem:[%s3057 + $0x48] sm:$0xf]
      %v3622 = vsel %vm3578, %v3365, %v3621
      %3623 = vst [vmem:[%s3057 + $0x48] sm:$0xf] %v3622
      %3624 = vst.msk [vmem:[%s3057 + $0x4c] sm:$0xf] %vm3048, %v3374
      %v3625 = vld [vmem:[%s3057 + $0x50] sm:$0x1]
      %v3626 = vsel %vm3060, %v3375, %v3625
      %3627 = vst [vmem:[%s3057 + $0x50] sm:$0x1] %v3626
      %v3628 = vld [vmem:[%s3057 + $0x54] sm:$0xf]
      %v3629 = vsel %vm3578, %v3382, %v3628
      %3630 = vst [vmem:[%s3057 + $0x54] sm:$0xf] %v3629
      %3631 = vst.msk [vmem:[%s3057 + $0x58] sm:$0xf] %vm3048, %v3391
      %v3632 = vld [vmem:[%s3057 + $0x5c] sm:$0x1]
      %v3633 = vsel %vm3060, %v3392, %v3632
      %3634 = vst [vmem:[%s3057 + $0x5c] sm:$0x1] %v3633
      %v3635 = vld [vmem:[%s3057 + $0x60] sm:$0xf]
      %v3636 = vsel %vm3578, %v3399, %v3635
      %3637 = vst [vmem:[%s3057 + $0x60] sm:$0xf] %v3636
      %3638 = vst.msk [vmem:[%s3057 + $0x64] sm:$0xf] %vm3048, %v3408
      %v3639 = vld [vmem:[%s3057 + $0x68] sm:$0x1]
      %v3640 = vsel %vm3060, %v3409, %v3639
      %3641 = vst [vmem:[%s3057 + $0x68] sm:$0x1] %v3640
      %v3642 = vld [vmem:[%s3057 + $0x6c] sm:$0xf]
      %v3643 = vsel %vm3578, %v3416, %v3642
      %3644 = vst [vmem:[%s3057 + $0x6c] sm:$0xf] %v3643
      %3645 = vst.msk [vmem:[%s3057 + $0x70] sm:$0xf] %vm3048, %v3425
      %v3646 = vld [vmem:[%s3057 + $0x74] sm:$0x1]
      %v3647 = vsel %vm3060, %v3426, %v3646
      %3648 = vst [vmem:[%s3057 + $0x74] sm:$0x1] %v3647
      %v3649 = vld [vmem:[%s3057 + $0x78] sm:$0xf]
      %v3650 = vsel %vm3578, %v3433, %v3649
      %3651 = vst [vmem:[%s3057 + $0x78] sm:$0xf] %v3650
      %3652 = vst.msk [vmem:[%s3057 + $0x7c] sm:$0xf] %vm3048, %v3442
      %v3653 = vld [vmem:[%s3057 + $0x80] sm:$0x1]
      %v3654 = vsel %vm3060, %v3443, %v3653
      %3655 = vst [vmem:[%s3057 + $0x80] sm:$0x1] %v3654
      %v3656 = vld [vmem:[%s3057 + $0x84] sm:$0xf]
      %v3657 = vsel %vm3578, %v3450, %v3656
      %3658 = vst [vmem:[%s3057 + $0x84] sm:$0xf] %v3657
      %3659 = vst.msk [vmem:[%s3057 + $0x88] sm:$0xf] %vm3048, %v3459
      %v3660 = vld [vmem:[%s3057 + $0x8c] sm:$0x1]
      %v3661 = vsel %vm3060, %v3460, %v3660
      %3662 = vst [vmem:[%s3057 + $0x8c] sm:$0x1] %v3661
      %v3663 = vld [vmem:[%s3057 + $0x90] sm:$0xf]
      %v3664 = vsel %vm3578, %v3467, %v3663
      %3665 = vst [vmem:[%s3057 + $0x90] sm:$0xf] %v3664
      %3666 = vst.msk [vmem:[%s3057 + $0x94] sm:$0xf] %vm3048, %v3476
      %v3667 = vld [vmem:[%s3057 + $0x98] sm:$0x1]
      %v3668 = vsel %vm3060, %v3477, %v3667
      %3669 = vst [vmem:[%s3057 + $0x98] sm:$0x1] %v3668
      %v3670 = vld [vmem:[%s3057 + $0x9c] sm:$0xf]
      %v3671 = vsel %vm3578, %v3484, %v3670
      %3672 = vst [vmem:[%s3057 + $0x9c] sm:$0xf] %v3671
      %3673 = vst.msk [vmem:[%s3057 + $0xa0] sm:$0xf] %vm3048, %v3493
      %v3674 = vld [vmem:[%s3057 + $0xa4] sm:$0x1]
      %v3675 = vsel %vm3060, %v3494, %v3674
      %3676 = vst [vmem:[%s3057 + $0xa4] sm:$0x1] %v3675
      %v3677 = vld [vmem:[%s3057 + $0xa8] sm:$0xf]
      %v3678 = vsel %vm3578, %v3501, %v3677
      %3679 = vst [vmem:[%s3057 + $0xa8] sm:$0xf] %v3678
      %3680 = vst.msk [vmem:[%s3057 + $0xac] sm:$0xf] %vm3048, %v3510
      %v3681 = vld [vmem:[%s3057 + $0xb0] sm:$0x1]
      %v3682 = vsel %vm3060, %v3511, %v3681
      %3683 = vst [vmem:[%s3057 + $0xb0] sm:$0x1] %v3682
      %v3684 = vld [vmem:[%s3057 + $0xb4] sm:$0xf]
      %v3685 = vsel %vm3578, %v3518, %v3684
      %3686 = vst [vmem:[%s3057 + $0xb4] sm:$0xf] %v3685
      %3687 = vst.msk [vmem:[%s3057 + $0xb8] sm:$0xf] %vm3048, %v3527
      %v3688 = vld [vmem:[%s3057 + $0xbc] sm:$0x1]
      %v3689 = vsel %vm3060, %v3528, %v3688
      %3690 = vst [vmem:[%s3057 + $0xbc] sm:$0x1] %v3689
      %v3691 = vld [vmem:[#allocation2] sm:$0xf]
      %v3692 = vld [vmem:[#allocation2 + $0x4] sm:$0xf]
      %v3693 = vld [vmem:[#allocation2 + $0xc] sm:$0xf]
      %v3694 = vld [vmem:[#allocation2 + $0x10] sm:$0xf]
      %v3695 = vld [vmem:[#allocation2 + $0x18] sm:$0xf]
      %v3696 = vld [vmem:[#allocation2 + $0x1c] sm:$0xf]
      %v3697 = vld [vmem:[#allocation2 + $0x24] sm:$0xf]
      %v3698 = vld [vmem:[#allocation2 + $0x28] sm:$0xf]
      %v3699 = vld [vmem:[#allocation2 + $0x30] sm:$0xf]
      %v3700 = vld [vmem:[#allocation2 + $0x34] sm:$0xf]
      %v3701 = vld [vmem:[#allocation2 + $0x3c] sm:$0xf]
      %v3702 = vld [vmem:[#allocation2 + $0x40] sm:$0xf]
      %v3703 = vld [vmem:[#allocation2 + $0x48] sm:$0xf]
      %v3704 = vld [vmem:[#allocation2 + $0x4c] sm:$0xf]
      %v3705 = vld [vmem:[#allocation2 + $0x54] sm:$0xf]
      %v3706 = vld [vmem:[#allocation2 + $0x58] sm:$0xf]
      %v3707 = vld [vmem:[#allocation2 + $0x60] sm:$0xf]
      %v3708 = vld [vmem:[#allocation2 + $0x64] sm:$0xf]
      %v3709 = vld [vmem:[#allocation2 + $0x6c] sm:$0xf]
      %v3710 = vld [vmem:[#allocation2 + $0x70] sm:$0xf]
      %v3711 = vld [vmem:[#allocation2 + $0x78] sm:$0xf]
      %v3712 = vld [vmem:[#allocation2 + $0x7c] sm:$0xf]
      %v3713 = vld [vmem:[#allocation2 + $0x84] sm:$0xf]
      %v3714 = vld [vmem:[#allocation2 + $0x88] sm:$0xf]
      %v3715 = vld [vmem:[#allocation2 + $0x90] sm:$0xf]
      %v3716 = vld [vmem:[#allocation2 + $0x94] sm:$0xf]
      %v3717 = vld [vmem:[#allocation2 + $0x9c] sm:$0xf]
      %v3718 = vld [vmem:[#allocation2 + $0xa0] sm:$0xf]
      %v3719 = vld [vmem:[#allocation2 + $0xa8] sm:$0xf]
      %v3720 = vld [vmem:[#allocation2 + $0xac] sm:$0xf]
      %v3721 = vld [vmem:[#allocation2 + $0xb4] sm:$0xf]
      %v3722 = vld [vmem:[#allocation2 + $0xb8] sm:$0xf]
      %v3723 = vld [vmem:[#allocation2 + $0xc0] sm:$0xf]
      %v3724 = vld [vmem:[#allocation2 + $0xc4] sm:$0xf]
      %v3725 = vld [vmem:[#allocation2 + $0xcc] sm:$0xf]
      %v3726 = vld [vmem:[#allocation2 + $0xd0] sm:$0xf]
      %v3727 = vld [vmem:[#allocation2 + $0x8] sm:$0x1]
      %v3728 = vld [vmem:[#allocation2 + $0x14] sm:$0x1]
      %v3729 = vld [vmem:[#allocation2 + $0x20] sm:$0x1]
      %v3730 = vld [vmem:[#allocation2 + $0x2c] sm:$0x1]
      %v3731 = vld [vmem:[#allocation2 + $0x38] sm:$0x1]
      %v3732 = vld [vmem:[#allocation2 + $0x44] sm:$0x1]
      %v3733 = vld [vmem:[#allocation2 + $0x50] sm:$0x1]
      %v3734 = vld [vmem:[#allocation2 + $0x5c] sm:$0x1]
      %v3735 = vld [vmem:[#allocation2 + $0x68] sm:$0x1]
      %v3736 = vld [vmem:[#allocation2 + $0x74] sm:$0x1]
      %v3737 = vld [vmem:[#allocation2 + $0x80] sm:$0x1]
      %v3738 = vld [vmem:[#allocation2 + $0x8c] sm:$0x1]
      %v3739 = vld [vmem:[#allocation2 + $0x98] sm:$0x1]
      %v3740 = vld [vmem:[#allocation2 + $0xa4] sm:$0x1]
      %v3741 = vld [vmem:[#allocation2 + $0xb0] sm:$0x1]
      %v3742 = vld [vmem:[#allocation2 + $0xbc] sm:$0x1]
      %v3743 = vld [vmem:[#allocation2 + $0xc8] sm:$0x1]
      %v3744 = vld [vmem:[#allocation2 + $0xd4] sm:$0x1]
      %v3745 = vld [vmem:[#allocation2] sm:$0xe]
      %v3746 = vld [vmem:[#allocation2 + $0xc] sm:$0xe]
      %v3747 = vld [vmem:[#allocation2 + $0x18] sm:$0xe]
      %v3748 = vld [vmem:[#allocation2 + $0x24] sm:$0xe]
      %v3749 = vld [vmem:[#allocation2 + $0x30] sm:$0xe]
      %v3750 = vld [vmem:[#allocation2 + $0x3c] sm:$0xe]
      %v3751 = vld [vmem:[#allocation2 + $0x48] sm:$0xe]
      %v3752 = vld [vmem:[#allocation2 + $0x54] sm:$0xe]
      %v3753 = vld [vmem:[#allocation2 + $0x60] sm:$0xe]
      %v3754 = vld [vmem:[#allocation2 + $0x6c] sm:$0xe]
      %v3755 = vld [vmem:[#allocation2 + $0x78] sm:$0xe]
      %v3756 = vld [vmem:[#allocation2 + $0x84] sm:$0xe]
      %v3757 = vld [vmem:[#allocation2 + $0x90] sm:$0xe]
      %v3758 = vld [vmem:[#allocation2 + $0x9c] sm:$0xe]
      %v3759 = vld [vmem:[#allocation2 + $0xa8] sm:$0xe]
      %v3760 = vld [vmem:[#allocation2 + $0xb4] sm:$0xe]
      %v3761 = vld [vmem:[#allocation2 + $0xc0] sm:$0xe]
      %v3762 = vld [vmem:[#allocation2 + $0xcc] sm:$0xe]
      %v3763 = vld [vmem:[%s3] sm:$0xf]
      %v3765 = vshrl.u32 %v3691, 16
      %v3767 = vrot.slane %v3765, 4
      %v3768 = vshll.u32 %v3691, 16
      %v3770 = vrot.slane %v3768, 5
      %v3771 = vor.u32 %v3767, %v3770
      %v3772 = vrot.slane %v3771, 4
      %v3774 = vshll.u32 %v3692, 16
      %v3776 = vrot.slane %v3774, 5
      %v3777 = vsel %vm301, %v3772, %v3776
      %v3778 = vshrl.u32 %v3692, 16
      %v3780 = vrot.slane %v3778, 4
      %v3781 = vor.u32 %v3780, %v3776
      %v3782 = vrot.slane %v3781, 4
      %v3784 = vshll.u32 %v3727, 16
      %v3786 = vrot.slane %v3784, 5
      %v3787 = vsel %vm301, %v3782, %v3786
      %v3789 = vshrl.u32 %v3693, 16
      %v3791 = vrot.slane %v3789, 4
      %v3792 = vshll.u32 %v3693, 16
      %v3794 = vrot.slane %v3792, 5
      %v3795 = vor.u32 %v3791, %v3794
      %v3796 = vrot.slane %v3795, 4
      %v3798 = vshll.u32 %v3694, 16
      %v3800 = vrot.slane %v3798, 5
      %v3801 = vsel %vm301, %v3796, %v3800
      %v3802 = vshrl.u32 %v3694, 16
      %v3804 = vrot.slane %v3802, 4
      %v3805 = vor.u32 %v3804, %v3800
      %v3806 = vrot.slane %v3805, 4
      %v3808 = vshll.u32 %v3728, 16
      %v3810 = vrot.slane %v3808, 5
      %v3811 = vsel %vm301, %v3806, %v3810
      %v3813 = vshrl.u32 %v3695, 16
      %v3815 = vrot.slane %v3813, 4
      %v3816 = vshll.u32 %v3695, 16
      %v3818 = vrot.slane %v3816, 5
      %v3819 = vor.u32 %v3815, %v3818
      %v3820 = vrot.slane %v3819, 4
      %v3822 = vshll.u32 %v3696, 16
      %v3824 = vrot.slane %v3822, 5
      %v3825 = vsel %vm301, %v3820, %v3824
      %v3826 = vshrl.u32 %v3696, 16
      %v3828 = vrot.slane %v3826, 4
      %v3829 = vor.u32 %v3828, %v3824
      %v3830 = vrot.slane %v3829, 4
      %v3832 = vshll.u32 %v3729, 16
      %v3834 = vrot.slane %v3832, 5
      %v3835 = vsel %vm301, %v3830, %v3834
      %v3837 = vshrl.u32 %v3697, 16
      %v3839 = vrot.slane %v3837, 4
      %v3840 = vshll.u32 %v3697, 16
      %v3842 = vrot.slane %v3840, 5
      %v3843 = vor.u32 %v3839, %v3842
      %v3844 = vrot.slane %v3843, 4
      %v3846 = vshll.u32 %v3698, 16
      %v3848 = vrot.slane %v3846, 5
      %v3849 = vsel %vm301, %v3844, %v3848
      %v3850 = vshrl.u32 %v3698, 16
      %v3852 = vrot.slane %v3850, 4
      %v3853 = vor.u32 %v3852, %v3848
      %v3854 = vrot.slane %v3853, 4
      %v3856 = vshll.u32 %v3730, 16
      %v3858 = vrot.slane %v3856, 5
      %v3859 = vsel %vm301, %v3854, %v3858
      %v3861 = vshrl.u32 %v3699, 16
      %v3863 = vrot.slane %v3861, 4
      %v3864 = vshll.u32 %v3699, 16
      %v3866 = vrot.slane %v3864, 5
      %v3867 = vor.u32 %v3863, %v3866
      %v3868 = vrot.slane %v3867, 4
      %v3870 = vshll.u32 %v3700, 16
      %v3872 = vrot.slane %v3870, 5
      %v3873 = vsel %vm301, %v3868, %v3872
      %v3874 = vshrl.u32 %v3700, 16
      %v3876 = vrot.slane %v3874, 4
      %v3877 = vor.u32 %v3876, %v3872
      %v3878 = vrot.slane %v3877, 4
      %v3880 = vshll.u32 %v3731, 16
      %v3882 = vrot.slane %v3880, 5
      %v3883 = vsel %vm301, %v3878, %v3882
      %v3885 = vshrl.u32 %v3701, 16
      %v3887 = vrot.slane %v3885, 4
      %v3888 = vshll.u32 %v3701, 16
      %v3890 = vrot.slane %v3888, 5
      %v3891 = vor.u32 %v3887, %v3890
      %v3892 = vrot.slane %v3891, 4
      %v3894 = vshll.u32 %v3702, 16
      %v3896 = vrot.slane %v3894, 5
      %v3897 = vsel %vm301, %v3892, %v3896
      %v3898 = vshrl.u32 %v3702, 16
      %v3900 = vrot.slane %v3898, 4
      %v3901 = vor.u32 %v3900, %v3896
      %v3902 = vrot.slane %v3901, 4
      %v3904 = vshll.u32 %v3732, 16
      %v3906 = vrot.slane %v3904, 5
      %v3907 = vsel %vm301, %v3902, %v3906
      %v3909 = vshrl.u32 %v3703, 16
      %v3911 = vrot.slane %v3909, 4
      %v3912 = vshll.u32 %v3703, 16
      %v3914 = vrot.slane %v3912, 5
      %v3915 = vor.u32 %v3911, %v3914
      %v3916 = vrot.slane %v3915, 4
      %v3918 = vshll.u32 %v3704, 16
      %v3920 = vrot.slane %v3918, 5
      %v3921 = vsel %vm301, %v3916, %v3920
      %v3922 = vshrl.u32 %v3704, 16
      %v3924 = vrot.slane %v3922, 4
      %v3925 = vor.u32 %v3924, %v3920
      %v3926 = vrot.slane %v3925, 4
      %v3928 = vshll.u32 %v3733, 16
      %v3930 = vrot.slane %v3928, 5
      %v3931 = vsel %vm301, %v3926, %v3930
      %v3933 = vshrl.u32 %v3705, 16
      %v3935 = vrot.slane %v3933, 4
      %v3936 = vshll.u32 %v3705, 16
      %v3938 = vrot.slane %v3936, 5
      %v3939 = vor.u32 %v3935, %v3938
      %v3940 = vrot.slane %v3939, 4
      %v3942 = vshll.u32 %v3706, 16
      %v3944 = vrot.slane %v3942, 5
      %v3945 = vsel %vm301, %v3940, %v3944
      %v3946 = vshrl.u32 %v3706, 16
      %v3948 = vrot.slane %v3946, 4
      %v3949 = vor.u32 %v3948, %v3944
      %v3950 = vrot.slane %v3949, 4
      %v3952 = vshll.u32 %v3734, 16
      %v3954 = vrot.slane %v3952, 5
      %v3955 = vsel %vm301, %v3950, %v3954
      %v3957 = vshrl.u32 %v3707, 16
      %v3959 = vrot.slane %v3957, 4
      %v3960 = vshll.u32 %v3707, 16
      %v3962 = vrot.slane %v3960, 5
      %v3963 = vor.u32 %v3959, %v3962
      %v3964 = vrot.slane %v3963, 4
      %v3966 = vshll.u32 %v3708, 16
      %v3968 = vrot.slane %v3966, 5
      %v3969 = vsel %vm301, %v3964, %v3968
      %v3970 = vshrl.u32 %v3708, 16
      %v3972 = vrot.slane %v3970, 4
      %v3973 = vor.u32 %v3972, %v3968
      %v3974 = vrot.slane %v3973, 4
      %v3976 = vshll.u32 %v3735, 16
      %v3978 = vrot.slane %v3976, 5
      %v3979 = vsel %vm301, %v3974, %v3978
      %v3981 = vshrl.u32 %v3709, 16
      %v3983 = vrot.slane %v3981, 4
      %v3984 = vshll.u32 %v3709, 16
      %v3986 = vrot.slane %v3984, 5
      %v3987 = vor.u32 %v3983, %v3986
      %v3988 = vrot.slane %v3987, 4
      %v3990 = vshll.u32 %v3710, 16
      %v3992 = vrot.slane %v3990, 5
      %v3993 = vsel %vm301, %v3988, %v3992
      %v3994 = vshrl.u32 %v3710, 16
      %v3996 = vrot.slane %v3994, 4
      %v3997 = vor.u32 %v3996, %v3992
      %v3998 = vrot.slane %v3997, 4
      %v4000 = vshll.u32 %v3736, 16
      %v4002 = vrot.slane %v4000, 5
      %v4003 = vsel %vm301, %v3998, %v4002
      %v4005 = vshrl.u32 %v3711, 16
      %v4007 = vrot.slane %v4005, 4
      %v4008 = vshll.u32 %v3711, 16
      %v4010 = vrot.slane %v4008, 5
      %v4011 = vor.u32 %v4007, %v4010
      %v4012 = vrot.slane %v4011, 4
      %v4014 = vshll.u32 %v3712, 16
      %v4016 = vrot.slane %v4014, 5
      %v4017 = vsel %vm301, %v4012, %v4016
      %v4018 = vshrl.u32 %v3712, 16
      %v4020 = vrot.slane %v4018, 4
      %v4021 = vor.u32 %v4020, %v4016
      %v4022 = vrot.slane %v4021, 4
      %v4024 = vshll.u32 %v3737, 16
      %v4026 = vrot.slane %v4024, 5
      %v4027 = vsel %vm301, %v4022, %v4026
      %v4029 = vshrl.u32 %v3713, 16
      %v4031 = vrot.slane %v4029, 4
      %v4032 = vshll.u32 %v3713, 16
      %v4034 = vrot.slane %v4032, 5
      %v4035 = vor.u32 %v4031, %v4034
      %v4036 = vrot.slane %v4035, 4
      %v4038 = vshll.u32 %v3714, 16
      %v4040 = vrot.slane %v4038, 5
      %v4041 = vsel %vm301, %v4036, %v4040
      %v4042 = vshrl.u32 %v3714, 16
      %v4044 = vrot.slane %v4042, 4
      %v4045 = vor.u32 %v4044, %v4040
      %v4046 = vrot.slane %v4045, 4
      %v4048 = vshll.u32 %v3738, 16
      %v4050 = vrot.slane %v4048, 5
      %v4051 = vsel %vm301, %v4046, %v4050
      %v4053 = vshrl.u32 %v3715, 16
      %v4055 = vrot.slane %v4053, 4
      %v4056 = vshll.u32 %v3715, 16
      %v4058 = vrot.slane %v4056, 5
      %v4059 = vor.u32 %v4055, %v4058
      %v4060 = vrot.slane %v4059, 4
      %v4062 = vshll.u32 %v3716, 16
      %v4064 = vrot.slane %v4062, 5
      %v4065 = vsel %vm301, %v4060, %v4064
      %v4066 = vshrl.u32 %v3716, 16
      %v4068 = vrot.slane %v4066, 4
      %v4069 = vor.u32 %v4068, %v4064
      %v4070 = vrot.slane %v4069, 4
      %v4072 = vshll.u32 %v3739, 16
      %v4074 = vrot.slane %v4072, 5
      %v4075 = vsel %vm301, %v4070, %v4074
      %v4077 = vshrl.u32 %v3717, 16
      %v4079 = vrot.slane %v4077, 4
      %v4080 = vshll.u32 %v3717, 16
      %v4082 = vrot.slane %v4080, 5
      %v4083 = vor.u32 %v4079, %v4082
      %v4084 = vrot.slane %v4083, 4
      %v4086 = vshll.u32 %v3718, 16
      %v4088 = vrot.slane %v4086, 5
      %v4089 = vsel %vm301, %v4084, %v4088
      %v4090 = vshrl.u32 %v3718, 16
      %v4092 = vrot.slane %v4090, 4
      %v4093 = vor.u32 %v4092, %v4088
      %v4094 = vrot.slane %v4093, 4
      %v4096 = vshll.u32 %v3740, 16
      %v4098 = vrot.slane %v4096, 5
      %v4099 = vsel %vm301, %v4094, %v4098
      %v4101 = vshrl.u32 %v3719, 16
      %v4103 = vrot.slane %v4101, 4
      %v4104 = vshll.u32 %v3719, 16
      %v4106 = vrot.slane %v4104, 5
      %v4107 = vor.u32 %v4103, %v4106
      %v4108 = vrot.slane %v4107, 4
      %v4110 = vshll.u32 %v3720, 16
      %v4112 = vrot.slane %v4110, 5
      %v4113 = vsel %vm301, %v4108, %v4112
      %v4114 = vshrl.u32 %v3720, 16
      %v4116 = vrot.slane %v4114, 4
      %v4117 = vor.u32 %v4116, %v4112
      %v4118 = vrot.slane %v4117, 4
      %v4120 = vshll.u32 %v3741, 16
      %v4122 = vrot.slane %v4120, 5
      %v4123 = vsel %vm301, %v4118, %v4122
      %v4125 = vshrl.u32 %v3721, 16
      %v4127 = vrot.slane %v4125, 4
      %v4128 = vshll.u32 %v3721, 16
      %v4130 = vrot.slane %v4128, 5
      %v4131 = vor.u32 %v4127, %v4130
      %v4132 = vrot.slane %v4131, 4
      %v4134 = vshll.u32 %v3722, 16
      %v4136 = vrot.slane %v4134, 5
      %v4137 = vsel %vm301, %v4132, %v4136
      %v4138 = vshrl.u32 %v3722, 16
      %v4140 = vrot.slane %v4138, 4
      %v4141 = vor.u32 %v4140, %v4136
      %v4142 = vrot.slane %v4141, 4
      %v4144 = vshll.u32 %v3742, 16
      %v4146 = vrot.slane %v4144, 5
      %v4147 = vsel %vm301, %v4142, %v4146
      %s4148 = scalar_lea.vmem %s3, 4
      %v4149 = vld [vmem:[%s4148] sm:$0xf]
      %v4150 = vunpack.c.l.b16 %v3777
      %v4151 = vunpack.c.l.b16 %v3787
      %v4152 = vunpack.c.l.b16 %v3801
      %v4153 = vunpack.c.l.b16 %v3811
      %v4154 = vunpack.c.l.b16 %v3825
      %v4155 = vunpack.c.l.b16 %v3835
      %v4156 = vunpack.c.l.b16 %v3849
      %v4157 = vunpack.c.l.b16 %v3859
      %v4158 = vunpack.c.l.b16 %v3873
      %v4159 = vunpack.c.l.b16 %v3883
      %v4160 = vunpack.c.l.b16 %v3897
      %v4161 = vunpack.c.l.b16 %v3907
      %v4162 = vunpack.c.l.b16 %v3921
      %v4163 = vunpack.c.l.b16 %v3931
      %v4164 = vunpack.c.l.b16 %v3945
      %v4165 = vunpack.c.l.b16 %v3955
      %v4166 = vunpack.c.l.b16 %v3969
      %v4167 = vunpack.c.l.b16 %v3979
      %v4168 = vunpack.c.l.b16 %v3993
      %v4169 = vunpack.c.l.b16 %v4003
      %v4170 = vunpack.c.l.b16 %v4017
      %v4171 = vunpack.c.l.b16 %v4027
      %v4172 = vunpack.c.l.b16 %v4041
      %v4173 = vunpack.c.l.b16 %v4051
      %v4174 = vunpack.c.l.b16 %v4065
      %v4175 = vunpack.c.l.b16 %v4075
      %v4176 = vunpack.c.l.b16 %v4089
      %v4177 = vunpack.c.l.b16 %v4099
      %v4178 = vunpack.c.l.b16 %v4113
      %v4179 = vunpack.c.l.b16 %v4123
      %v4180 = vunpack.c.l.b16 %v4137
      %v4181 = vunpack.c.l.b16 %v4147
      %v4182 = vpack.c.b16 %v4151, %v4150
      %v4183 = vpack.c.b16 %v4153, %v4152
      %v4184 = vpack.c.b16 %v4155, %v4154
      %v4185 = vpack.c.b16 %v4157, %v4156
      %v4186 = vpack.c.b16 %v4159, %v4158
      %v4187 = vpack.c.b16 %v4161, %v4160
      %v4188 = vpack.c.b16 %v4163, %v4162
      %v4189 = vpack.c.b16 %v4165, %v4164
      %v4190 = vpack.c.b16 %v4167, %v4166
      %v4191 = vpack.c.b16 %v4169, %v4168
      %v4192 = vpack.c.b16 %v4171, %v4170
      %v4193 = vpack.c.b16 %v4173, %v4172
      %v4194 = vpack.c.b16 %v4175, %v4174
      %v4195 = vpack.c.b16 %v4177, %v4176
      %v4196 = vpack.c.b16 %v4179, %v4178
      %v4197 = vpack.c.b16 %v4181, %v4180
      %vm4198 = vcmask 64512
      %v4200 = vsel %vm4198, %v4182, 0
      %v4203 = vsel %vm4198, %v4183, 0
      %v4206 = vsel %vm4198, %v4184, 0
      %v4209 = vsel %vm4198, %v4185, 0
      %v4212 = vsel %vm4198, %v4186, 0
      %v4215 = vsel %vm4198, %v4187, 0
      %v4218 = vsel %vm4198, %v4188, 0
      %v4221 = vsel %vm4198, %v4189, 0
      %v4224 = vsel %vm4198, %v4190, 0
      %v4227 = vsel %vm4198, %v4191, 0
      %v4230 = vsel %vm4198, %v4192, 0
      %v4233 = vsel %vm4198, %v4193, 0
      %v4236 = vsel %vm4198, %v4194, 0
      %v4239 = vsel %vm4198, %v4195, 0
      %v4242 = vsel %vm4198, %v4196, 0
      %v4245 = vsel %vm4198, %v4197, 0
      %vm4247 = vcmask 1043456
      %v4249 = vsel %vm4247, %v4149, 0
      %4251 = vmatprep.subr.bf16.mxu0 0
      %4252 = vmatpush1.bf16.msra.mxu0 %v4249
      %4253 = vmatprep.subr.bf16.mxu0 0
      %4254 = vmatpush1.bf16.msra.mxu0 0
      %4255 = vmatprep.subr.bf16.mxu0 0
      %4256 = vmatpush1.bf16.msra.mxu0 0
      %4257 = vmatprep.subr.bf16.mxu0 0
      %4258 = vmatpush1.bf16.msra.mxu0 0
      %4259 = vmatprep.subr.bf16.mxu0 0
      %4260 = vmatpush1.bf16.msra.mxu0 0
      %4261 = vmatprep.subr.bf16.mxu0 0
      %4262 = vmatpush1.bf16.msra.mxu0 0
      %4263 = vmatprep.subr.bf16.mxu0 0
      %4264 = vmatpush1.bf16.msra.mxu0 0
      %4265 = vmatprep.subr.bf16.mxu0 0
      %4266 = vmatpush1.bf16.msra.mxu0 0
      %4267 = vmatprep.subr.bf16.mxu0 0
      %4268 = vmatpush1.bf16.msra.mxu0 0
      %4269 = vmatprep.subr.bf16.mxu0 0
      %4270 = vmatpush1.bf16.msra.mxu0 0
      %4271 = vmatprep.subr.bf16.mxu0 0
      %4272 = vmatpush1.bf16.msra.mxu0 0
      %4273 = vmatprep.subr.bf16.mxu0 0
      %4274 = vmatpush1.bf16.msra.mxu0 0
      %4275 = vmatprep.subr.bf16.mxu0 0
      %4276 = vmatpush1.bf16.msra.mxu0 0
      %4277 = vmatprep.subr.bf16.mxu0 0
      %4278 = vmatpush1.bf16.msra.mxu0 0
      %4279 = vmatprep.subr.bf16.mxu0 0
      %4280 = vmatpush1.bf16.msra.mxu0 0
      %4281 = vmatprep.subr.bf16.mxu0 0
      %4282 = vmatpush1.bf16.msra.mxu0 0
      %4283 = vmatprep.mubr.bf16.mxu0 0
      %4284 = vmatmul.mubr.bf16.gmra.mrb[0].mxu0 %v4200
      %v4285 = vpop.f32.mrb[0].mxu0
      %v4286 = vadd.f32 0.0, %v4285
      %v4287 = vpop.f32.mrb[0].mxu0
      %v4288 = vpop.f32.mrb[0].mxu0
      %v4289 = vadd.f32 0.0, %v4288
      %v4290 = vpop.f32.mrb[0].mxu0
      %4291 = vmatprep.mubr.bf16.mxu0 0
      %4292 = vmatmul.mubr.bf16.gmra.mrb[0].mxu0 %v4203
      %v4293 = vpop.f32.mrb[0].mxu0
      %v4294 = vadd.f32 0.0, %v4293
      %v4295 = vpop.f32.mrb[0].mxu0
      %v4296 = vpop.f32.mrb[0].mxu0
      %v4297 = vadd.f32 0.0, %v4296
      %v4298 = vpop.f32.mrb[0].mxu0
      %4299 = vmatprep.mubr.bf16.mxu0 0
      %4300 = vmatmul.mubr.bf16.gmra.mrb[0].mxu0 %v4206
      %v4301 = vpop.f32.mrb[0].mxu0
      %v4302 = vadd.f32 0.0, %v4301
      %v4303 = vpop.f32.mrb[0].mxu0
      %v4304 = vpop.f32.mrb[0].mxu0
      %v4305 = vadd.f32 0.0, %v4304
      %v4306 = vpop.f32.mrb[0].mxu0
      %4307 = vmatprep.mubr.bf16.mxu0 0
      %4308 = vmatmul.mubr.bf16.gmra.mrb[0].mxu0 %v4209
      %v4309 = vpop.f32.mrb[0].mxu0
      %v4310 = vadd.f32 0.0, %v4309
      %v4311 = vpop.f32.mrb[0].mxu0
      %v4312 = vpop.f32.mrb[0].mxu0
      %v4313 = vadd.f32 0.0, %v4312
      %v4314 = vpop.f32.mrb[0].mxu0
      %4315 = vmatprep.mubr.bf16.mxu0 0
      %4316 = vmatmul.mubr.bf16.gmra.mrb[0].mxu0 %v4212
      %v4317 = vpop.f32.mrb[0].mxu0
      %v4318 = vadd.f32 0.0, %v4317
      %v4319 = vpop.f32.mrb[0].mxu0
      %v4320 = vpop.f32.mrb[0].mxu0
      %v4321 = vadd.f32 0.0, %v4320
      %v4322 = vpop.f32.mrb[0].mxu0
      %4323 = vmatprep.mubr.bf16.mxu0 0
      %4324 = vmatmul.mubr.bf16.gmra.mrb[0].mxu0 %v4215
      %v4325 = vpop.f32.mrb[0].mxu0
      %v4326 = vadd.f32 0.0, %v4325
      %v4327 = vpop.f32.mrb[0].mxu0
      %v4328 = vpop.f32.mrb[0].mxu0
      %v4329 = vadd.f32 0.0, %v4328
      %v4330 = vpop.f32.mrb[0].mxu0
      %4331 = vmatprep.mubr.bf16.mxu0 0
      %4332 = vmatmul.mubr.bf16.gmra.mrb[0].mxu0 %v4218
      %v4333 = vpop.f32.mrb[0].mxu0
      %v4334 = vadd.f32 0.0, %v4333
      %v4335 = vpop.f32.mrb[0].mxu0
      %v4336 = vpop.f32.mrb[0].mxu0
      %v4337 = vadd.f32 0.0, %v4336
      %v4338 = vpop.f32.mrb[0].mxu0
      %4339 = vmatprep.mubr.bf16.mxu0 0
      %4340 = vmatmul.mubr.bf16.gmra.mrb[0].mxu0 %v4221
      %v4341 = vpop.f32.mrb[0].mxu0
      %v4342 = vadd.f32 0.0, %v4341
      %v4343 = vpop.f32.mrb[0].mxu0
      %v4344 = vpop.f32.mrb[0].mxu0
      %v4345 = vadd.f32 0.0, %v4344
      %v4346 = vpop.f32.mrb[0].mxu0
      %4347 = vmatprep.mubr.bf16.mxu0 0
      %4348 = vmatmul.mubr.bf16.gmra.mrb[0].mxu0 %v4224
      %v4349 = vpop.f32.mrb[0].mxu0
      %v4350 = vadd.f32 0.0, %v4349
      %v4351 = vpop.f32.mrb[0].mxu0
      %v4352 = vpop.f32.mrb[0].mxu0
      %v4353 = vadd.f32 0.0, %v4352
      %v4354 = vpop.f32.mrb[0].mxu0
      %4355 = vmatprep.mubr.bf16.mxu0 0
      %4356 = vmatmul.mubr.bf16.gmra.mrb[0].mxu0 %v4227
      %v4357 = vpop.f32.mrb[0].mxu0
      %v4358 = vadd.f32 0.0, %v4357
      %v4359 = vpop.f32.mrb[0].mxu0
      %v4360 = vpop.f32.mrb[0].mxu0
      %v4361 = vadd.f32 0.0, %v4360
      %v4362 = vpop.f32.mrb[0].mxu0
      %4363 = vmatprep.mubr.bf16.mxu0 0
      %4364 = vmatmul.mubr.bf16.gmra.mrb[0].mxu0 %v4230
      %v4365 = vpop.f32.mrb[0].mxu0
      %v4366 = vadd.f32 0.0, %v4365
      %v4367 = vpop.f32.mrb[0].mxu0
      %v4368 = vpop.f32.mrb[0].mxu0
      %v4369 = vadd.f32 0.0, %v4368
      %v4370 = vpop.f32.mrb[0].mxu0
      %4371 = vmatprep.mubr.bf16.mxu0 0
      %4372 = vmatmul.mubr.bf16.gmra.mrb[0].mxu0 %v4233
      %v4373 = vpop.f32.mrb[0].mxu0
      %v4374 = vadd.f32 0.0, %v4373
      %v4375 = vpop.f32.mrb[0].mxu0
      %v4376 = vpop.f32.mrb[0].mxu0
      %v4377 = vadd.f32 0.0, %v4376
      %v4378 = vpop.f32.mrb[0].mxu0
      %4379 = vmatprep.mubr.bf16.mxu0 0
      %4380 = vmatmul.mubr.bf16.gmra.mrb[0].mxu0 %v4236
      %v4381 = vpop.f32.mrb[0].mxu0
      %v4382 = vadd.f32 0.0, %v4381
      %v4383 = vpop.f32.mrb[0].mxu0
      %v4384 = vpop.f32.mrb[0].mxu0
      %v4385 = vadd.f32 0.0, %v4384
      %v4386 = vpop.f32.mrb[0].mxu0
      %4387 = vmatprep.mubr.bf16.mxu0 0
      %4388 = vmatmul.mubr.bf16.gmra.mrb[0].mxu0 %v4239
      %v4389 = vpop.f32.mrb[0].mxu0
      %v4390 = vadd.f32 0.0, %v4389
      %v4391 = vpop.f32.mrb[0].mxu0
      %v4392 = vpop.f32.mrb[0].mxu0
      %v4393 = vadd.f32 0.0, %v4392
      %v4394 = vpop.f32.mrb[0].mxu0
      %4395 = vmatprep.mubr.bf16.mxu0 0
      %4396 = vmatmul.mubr.bf16.gmra.mrb[0].mxu0 %v4242
      %v4397 = vpop.f32.mrb[0].mxu0
      %v4398 = vadd.f32 0.0, %v4397
      %v4399 = vpop.f32.mrb[0].mxu0
      %v4400 = vpop.f32.mrb[0].mxu0
      %v4401 = vadd.f32 0.0, %v4400
      %v4402 = vpop.f32.mrb[0].mxu0
      %4403 = vmatprep.mubr.bf16.mxu0 0
      %4404 = vmatmul.mubr.bf16.gmra.mrb[0].mxu0 %v4245
      %v4405 = vpop.f32.mrb[0].mxu0
      %v4406 = vadd.f32 0.0, %v4405
      %v4407 = vpop.f32.mrb[0].mxu0
      %v4408 = vpop.f32.mrb[0].mxu0
      %v4409 = vadd.f32 0.0, %v4408
      %v4410 = vpop.f32.mrb[0].mxu0
      %4411 = vdwg.mxu0
      %v4444 = vunpack.c.l.b16 %v3691
      %v4445 = vunpack.c.l.b16 %v3692
      %v4446 = vunpack.c.l.b16 %v3693
      %v4447 = vunpack.c.l.b16 %v3694
      %v4448 = vunpack.c.l.b16 %v3695
      %v4449 = vunpack.c.l.b16 %v3696
      %v4450 = vunpack.c.l.b16 %v3697
      %v4451 = vunpack.c.l.b16 %v3698
      %v4452 = vunpack.c.l.b16 %v3699
      %v4453 = vunpack.c.l.b16 %v3700
      %v4454 = vunpack.c.l.b16 %v3701
      %v4455 = vunpack.c.l.b16 %v3702
      %v4456 = vunpack.c.l.b16 %v3703
      %v4457 = vunpack.c.l.b16 %v3704
      %v4458 = vunpack.c.l.b16 %v3705
      %v4459 = vunpack.c.l.b16 %v3706
      %v4460 = vunpack.c.l.b16 %v3707
      %v4461 = vunpack.c.l.b16 %v3708
      %v4462 = vunpack.c.l.b16 %v3709
      %v4463 = vunpack.c.l.b16 %v3710
      %v4464 = vunpack.c.l.b16 %v3711
      %v4465 = vunpack.c.l.b16 %v3712
      %v4466 = vunpack.c.l.b16 %v3713
      %v4467 = vunpack.c.l.b16 %v3714
      %v4468 = vunpack.c.l.b16 %v3715
      %v4469 = vunpack.c.l.b16 %v3716
      %v4470 = vunpack.c.l.b16 %v3717
      %v4471 = vunpack.c.l.b16 %v3718
      %v4472 = vunpack.c.l.b16 %v3719
      %v4473 = vunpack.c.l.b16 %v3720
      %v4474 = vunpack.c.l.b16 %v3721
      %v4475 = vunpack.c.l.b16 %v3722
      %v4476 = vpack.c.b16 %v4445, %v4444
      %v4477 = vpack.c.b16 %v4447, %v4446
      %v4478 = vpack.c.b16 %v4449, %v4448
      %v4479 = vpack.c.b16 %v4451, %v4450
      %v4480 = vpack.c.b16 %v4453, %v4452
      %v4481 = vpack.c.b16 %v4455, %v4454
      %v4482 = vpack.c.b16 %v4457, %v4456
      %v4483 = vpack.c.b16 %v4459, %v4458
      %v4484 = vpack.c.b16 %v4461, %v4460
      %v4485 = vpack.c.b16 %v4463, %v4462
      %v4486 = vpack.c.b16 %v4465, %v4464
      %v4487 = vpack.c.b16 %v4467, %v4466
      %v4488 = vpack.c.b16 %v4469, %v4468
      %v4489 = vpack.c.b16 %v4471, %v4470
      %v4490 = vpack.c.b16 %v4473, %v4472
      %v4491 = vpack.c.b16 %v4475, %v4474
      %v4493 = vsel %vm4198, %v4476, 0
      %v4496 = vsel %vm4198, %v4477, 0
      %v4499 = vsel %vm4198, %v4478, 0
      %v4502 = vsel %vm4198, %v4479, 0
      %v4505 = vsel %vm4198, %v4480, 0
      %v4508 = vsel %vm4198, %v4481, 0
      %v4511 = vsel %vm4198, %v4482, 0
      %v4514 = vsel %vm4198, %v4483, 0
      %v4517 = vsel %vm4198, %v4484, 0
      %v4520 = vsel %vm4198, %v4485, 0
      %v4523 = vsel %vm4198, %v4486, 0
      %v4526 = vsel %vm4198, %v4487, 0
      %v4529 = vsel %vm4198, %v4488, 0
      %v4532 = vsel %vm4198, %v4489, 0
      %v4535 = vsel %vm4198, %v4490, 0
      %v4538 = vsel %vm4198, %v4491, 0
      %v4541 = vsel %vm4247, %v3763, 0
      %4543 = vmatprep.subr.bf16.mxu0 0
      %4544 = vmatpush1.bf16.msra.mxu0 %v4541
      %4545 = vmatprep.subr.bf16.mxu0 0
      %4546 = vmatpush1.bf16.msra.mxu0 0
      %4547 = vmatprep.subr.bf16.mxu0 0
      %4548 = vmatpush1.bf16.msra.mxu0 0
      %4549 = vmatprep.subr.bf16.mxu0 0
      %4550 = vmatpush1.bf16.msra.mxu0 0
      %4551 = vmatprep.subr.bf16.mxu0 0
      %4552 = vmatpush1.bf16.msra.mxu0 0
      %4553 = vmatprep.subr.bf16.mxu0 0
      %4554 = vmatpush1.bf16.msra.mxu0 0
      %4555 = vmatprep.subr.bf16.mxu0 0
      %4556 = vmatpush1.bf16.msra.mxu0 0
      %4557 = vmatprep.subr.bf16.mxu0 0
      %4558 = vmatpush1.bf16.msra.mxu0 0
      %4559 = vmatprep.subr.bf16.mxu0 0
      %4560 = vmatpush1.bf16.msra.mxu0 0
      %4561 = vmatprep.subr.bf16.mxu0 0
      %4562 = vmatpush1.bf16.msra.mxu0 0
      %4563 = vmatprep.subr.bf16.mxu0 0
      %4564 = vmatpush1.bf16.msra.mxu0 0
      %4565 = vmatprep.subr.bf16.mxu0 0
      %4566 = vmatpush1.bf16.msra.mxu0 0
      %4567 = vmatprep.subr.bf16.mxu0 0
      %4568 = vmatpush1.bf16.msra.mxu0 0
      %4569 = vmatprep.subr.bf16.mxu0 0
      %4570 = vmatpush1.bf16.msra.mxu0 0
      %4571 = vmatprep.subr.bf16.mxu0 0
      %4572 = vmatpush1.bf16.msra.mxu0 0
      %4573 = vmatprep.subr.bf16.mxu0 0
      %4574 = vmatpush1.bf16.msra.mxu0 0
      %4575 = vmatprep.mubr.bf16.mxu0 0
      %4576 = vmatmul.mubr.bf16.gmra.mrb[0].mxu0 %v4493
      %v4577 = vpop.f32.mrb[0].mxu0
      %v4578 = vadd.f32 %v4286, %v4577
      %v4579 = vpop.f32.mrb[0].mxu0
      %v4580 = vpop.f32.mrb[0].mxu0
      %v4581 = vadd.f32 %v4289, %v4580
      %v4582 = vpop.f32.mrb[0].mxu0
      %4583 = vmatprep.mubr.bf16.mxu0 0
      %4584 = vmatmul.mubr.bf16.gmra.mrb[0].mxu0 %v4496
      %v4585 = vpop.f32.mrb[0].mxu0
      %v4586 = vadd.f32 %v4294, %v4585
      %v4587 = vpop.f32.mrb[0].mxu0
      %v4588 = vpop.f32.mrb[0].mxu0
      %v4589 = vadd.f32 %v4297, %v4588
      %v4590 = vpop.f32.mrb[0].mxu0
      %4591 = vmatprep.mubr.bf16.mxu0 0
      %4592 = vmatmul.mubr.bf16.gmra.mrb[0].mxu0 %v4499
      %v4593 = vpop.f32.mrb[0].mxu0
      %v4594 = vadd.f32 %v4302, %v4593
      %v4595 = vpop.f32.mrb[0].mxu0
      %v4596 = vpop.f32.mrb[0].mxu0
      %v4597 = vadd.f32 %v4305, %v4596
      %v4598 = vpop.f32.mrb[0].mxu0
      %4599 = vmatprep.mubr.bf16.mxu0 0
      %4600 = vmatmul.mubr.bf16.gmra.mrb[0].mxu0 %v4502
      %v4601 = vpop.f32.mrb[0].mxu0
      %v4602 = vadd.f32 %v4310, %v4601
      %v4603 = vpop.f32.mrb[0].mxu0
      %v4604 = vpop.f32.mrb[0].mxu0
      %v4605 = vadd.f32 %v4313, %v4604
      %v4606 = vpop.f32.mrb[0].mxu0
      %4607 = vmatprep.mubr.bf16.mxu0 0
      %4608 = vmatmul.mubr.bf16.gmra.mrb[0].mxu0 %v4505
      %v4609 = vpop.f32.mrb[0].mxu0
      %v4610 = vadd.f32 %v4318, %v4609
      %v4611 = vpop.f32.mrb[0].mxu0
      %v4612 = vpop.f32.mrb[0].mxu0
      %v4613 = vadd.f32 %v4321, %v4612
      %v4614 = vpop.f32.mrb[0].mxu0
      %4615 = vmatprep.mubr.bf16.mxu0 0
      %4616 = vmatmul.mubr.bf16.gmra.mrb[0].mxu0 %v4508
      %v4617 = vpop.f32.mrb[0].mxu0
      %v4618 = vadd.f32 %v4326, %v4617
      %v4619 = vpop.f32.mrb[0].mxu0
      %v4620 = vpop.f32.mrb[0].mxu0
      %v4621 = vadd.f32 %v4329, %v4620
      %v4622 = vpop.f32.mrb[0].mxu0
      %4623 = vmatprep.mubr.bf16.mxu0 0
      %4624 = vmatmul.mubr.bf16.gmra.mrb[0].mxu0 %v4511
      %v4625 = vpop.f32.mrb[0].mxu0
      %v4626 = vadd.f32 %v4334, %v4625
      %v4627 = vpop.f32.mrb[0].mxu0
      %v4628 = vpop.f32.mrb[0].mxu0
      %v4629 = vadd.f32 %v4337, %v4628
      %v4630 = vpop.f32.mrb[0].mxu0
      %4631 = vmatprep.mubr.bf16.mxu0 0
      %4632 = vmatmul.mubr.bf16.gmra.mrb[0].mxu0 %v4514
      %v4633 = vpop.f32.mrb[0].mxu0
      %v4634 = vadd.f32 %v4342, %v4633
      %v4635 = vpop.f32.mrb[0].mxu0
      %v4636 = vpop.f32.mrb[0].mxu0
      %v4637 = vadd.f32 %v4345, %v4636
      %v4638 = vpop.f32.mrb[0].mxu0
      %4639 = vmatprep.mubr.bf16.mxu0 0
      %4640 = vmatmul.mubr.bf16.gmra.mrb[0].mxu0 %v4517
      %v4641 = vpop.f32.mrb[0].mxu0
      %v4642 = vadd.f32 %v4350, %v4641
      %v4643 = vpop.f32.mrb[0].mxu0
      %v4644 = vpop.f32.mrb[0].mxu0
      %v4645 = vadd.f32 %v4353, %v4644
      %v4646 = vpop.f32.mrb[0].mxu0
      %4647 = vmatprep.mubr.bf16.mxu0 0
      %4648 = vmatmul.mubr.bf16.gmra.mrb[0].mxu0 %v4520
      %v4649 = vpop.f32.mrb[0].mxu0
      %v4650 = vadd.f32 %v4358, %v4649
      %v4651 = vpop.f32.mrb[0].mxu0
      %v4652 = vpop.f32.mrb[0].mxu0
      %v4653 = vadd.f32 %v4361, %v4652
      %v4654 = vpop.f32.mrb[0].mxu0
      %4655 = vmatprep.mubr.bf16.mxu0 0
      %4656 = vmatmul.mubr.bf16.gmra.mrb[0].mxu0 %v4523
      %v4657 = vpop.f32.mrb[0].mxu0
      %v4658 = vadd.f32 %v4366, %v4657
      %v4659 = vpop.f32.mrb[0].mxu0
      %v4660 = vpop.f32.mrb[0].mxu0
      %v4661 = vadd.f32 %v4369, %v4660
      %v4662 = vpop.f32.mrb[0].mxu0
      %4663 = vmatprep.mubr.bf16.mxu0 0
      %4664 = vmatmul.mubr.bf16.gmra.mrb[0].mxu0 %v4526
      %v4665 = vpop.f32.mrb[0].mxu0
      %v4666 = vadd.f32 %v4374, %v4665
      %v4667 = vpop.f32.mrb[0].mxu0
      %v4668 = vpop.f32.mrb[0].mxu0
      %v4669 = vadd.f32 %v4377, %v4668
      %v4670 = vpop.f32.mrb[0].mxu0
      %4671 = vmatprep.mubr.bf16.mxu0 0
      %4672 = vmatmul.mubr.bf16.gmra.mrb[0].mxu0 %v4529
      %v4673 = vpop.f32.mrb[0].mxu0
      %v4674 = vadd.f32 %v4382, %v4673
      %v4675 = vpop.f32.mrb[0].mxu0
      %v4676 = vpop.f32.mrb[0].mxu0
      %v4677 = vadd.f32 %v4385, %v4676
      %v4678 = vpop.f32.mrb[0].mxu0
      %4679 = vmatprep.mubr.bf16.mxu0 0
      %4680 = vmatmul.mubr.bf16.gmra.mrb[0].mxu0 %v4532
      %v4681 = vpop.f32.mrb[0].mxu0
      %v4682 = vadd.f32 %v4390, %v4681
      %v4683 = vpop.f32.mrb[0].mxu0
      %v4684 = vpop.f32.mrb[0].mxu0
      %v4685 = vadd.f32 %v4393, %v4684
      %v4686 = vpop.f32.mrb[0].mxu0
      %4687 = vmatprep.mubr.bf16.mxu0 0
      %4688 = vmatmul.mubr.bf16.gmra.mrb[0].mxu0 %v4535
      %v4689 = vpop.f32.mrb[0].mxu0
      %v4690 = vadd.f32 %v4398, %v4689
      %v4691 = vpop.f32.mrb[0].mxu0
      %v4692 = vpop.f32.mrb[0].mxu0
      %v4693 = vadd.f32 %v4401, %v4692
      %v4694 = vpop.f32.mrb[0].mxu0
      %4695 = vmatprep.mubr.bf16.mxu0 0
      %4696 = vmatmul.mubr.bf16.gmra.mrb[0].mxu0 %v4538
      %v4697 = vpop.f32.mrb[0].mxu0
      %v4698 = vadd.f32 %v4406, %v4697
      %v4699 = vpop.f32.mrb[0].mxu0
      %v4700 = vpop.f32.mrb[0].mxu0
      %v4701 = vadd.f32 %v4409, %v4700
      %v4702 = vpop.f32.mrb[0].mxu0
      %4703 = vdwg.mxu0
      %v4736 = vrot.slane %v3745, 5
      %v4737 = vrot.slane %v4736, 4
      %v4738 = vrot.slane %v3692, 5
      %v4739 = vsel %vm1276, %v4737, %v4738
      %v4740 = vrot.slane %v4738, 4
      %v4741 = vrot.slane %v3727, 5
      %v4742 = vsel %vm1276, %v4740, %v4741
      %v4743 = vrot.slane %v3746, 5
      %v4744 = vrot.slane %v4743, 4
      %v4745 = vrot.slane %v3694, 5
      %v4746 = vsel %vm1276, %v4744, %v4745
      %v4747 = vrot.slane %v4745, 4
      %v4748 = vrot.slane %v3728, 5
      %v4749 = vsel %vm1276, %v4747, %v4748
      %v4750 = vrot.slane %v3747, 5
      %v4751 = vrot.slane %v4750, 4
      %v4752 = vrot.slane %v3696, 5
      %v4753 = vsel %vm1276, %v4751, %v4752
      %v4754 = vrot.slane %v4752, 4
      %v4755 = vrot.slane %v3729, 5
      %v4756 = vsel %vm1276, %v4754, %v4755
      %v4757 = vrot.slane %v3748, 5
      %v4758 = vrot.slane %v4757, 4
      %v4759 = vrot.slane %v3698, 5
      %v4760 = vsel %vm1276, %v4758, %v4759
      %v4761 = vrot.slane %v4759, 4
      %v4762 = vrot.slane %v3730, 5
      %v4763 = vsel %vm1276, %v4761, %v4762
      %v4764 = vrot.slane %v3749, 5
      %v4765 = vrot.slane %v4764, 4
      %v4766 = vrot.slane %v3700, 5
      %v4767 = vsel %vm1276, %v4765, %v4766
      %v4768 = vrot.slane %v4766, 4
      %v4769 = vrot.slane %v3731, 5
      %v4770 = vsel %vm1276, %v4768, %v4769
      %v4771 = vrot.slane %v3750, 5
      %v4772 = vrot.slane %v4771, 4
      %v4773 = vrot.slane %v3702, 5
      %v4774 = vsel %vm1276, %v4772, %v4773
      %v4775 = vrot.slane %v4773, 4
      %v4776 = vrot.slane %v3732, 5
      %v4777 = vsel %vm1276, %v4775, %v4776
      %v4778 = vrot.slane %v3751, 5
      %v4779 = vrot.slane %v4778, 4
      %v4780 = vrot.slane %v3704, 5
      %v4781 = vsel %vm1276, %v4779, %v4780
      %v4782 = vrot.slane %v4780, 4
      %v4783 = vrot.slane %v3733, 5
      %v4784 = vsel %vm1276, %v4782, %v4783
      %v4785 = vrot.slane %v3752, 5
      %v4786 = vrot.slane %v4785, 4
      %v4787 = vrot.slane %v3706, 5
      %v4788 = vsel %vm1276, %v4786, %v4787
      %v4789 = vrot.slane %v4787, 4
      %v4790 = vrot.slane %v3734, 5
      %v4791 = vsel %vm1276, %v4789, %v4790
      %v4792 = vrot.slane %v3753, 5
      %v4793 = vrot.slane %v4792, 4
      %v4794 = vrot.slane %v3708, 5
      %v4795 = vsel %vm1276, %v4793, %v4794
      %v4796 = vrot.slane %v4794, 4
      %v4797 = vrot.slane %v3735, 5
      %v4798 = vsel %vm1276, %v4796, %v4797
      %v4799 = vrot.slane %v3754, 5
      %v4800 = vrot.slane %v4799, 4
      %v4801 = vrot.slane %v3710, 5
      %v4802 = vsel %vm1276, %v4800, %v4801
      %v4803 = vrot.slane %v4801, 4
      %v4804 = vrot.slane %v3736, 5
      %v4805 = vsel %vm1276, %v4803, %v4804
      %v4806 = vrot.slane %v3755, 5
      %v4807 = vrot.slane %v4806, 4
      %v4808 = vrot.slane %v3712, 5
      %v4809 = vsel %vm1276, %v4807, %v4808
      %v4810 = vrot.slane %v4808, 4
      %v4811 = vrot.slane %v3737, 5
      %v4812 = vsel %vm1276, %v4810, %v4811
      %v4813 = vrot.slane %v3756, 5
      %v4814 = vrot.slane %v4813, 4
      %v4815 = vrot.slane %v3714, 5
      %v4816 = vsel %vm1276, %v4814, %v4815
      %v4817 = vrot.slane %v4815, 4
      %v4818 = vrot.slane %v3738, 5
      %v4819 = vsel %vm1276, %v4817, %v4818
      %v4820 = vrot.slane %v3757, 5
      %v4821 = vrot.slane %v4820, 4
      %v4822 = vrot.slane %v3716, 5
      %v4823 = vsel %vm1276, %v4821, %v4822
      %v4824 = vrot.slane %v4822, 4
      %v4825 = vrot.slane %v3739, 5
      %v4826 = vsel %vm1276, %v4824, %v4825
      %v4827 = vrot.slane %v3758, 5
      %v4828 = vrot.slane %v4827, 4
      %v4829 = vrot.slane %v3718, 5
      %v4830 = vsel %vm1276, %v4828, %v4829
      %v4831 = vrot.slane %v4829, 4
      %v4832 = vrot.slane %v3740, 5
      %v4833 = vsel %vm1276, %v4831, %v4832
      %v4834 = vrot.slane %v3759, 5
      %v4835 = vrot.slane %v4834, 4
      %v4836 = vrot.slane %v3720, 5
      %v4837 = vsel %vm1276, %v4835, %v4836
      %v4838 = vrot.slane %v4836, 4
      %v4839 = vrot.slane %v3741, 5
      %v4840 = vsel %vm1276, %v4838, %v4839
      %v4841 = vrot.slane %v3760, 5
      %v4842 = vrot.slane %v4841, 4
      %v4843 = vrot.slane %v3722, 5
      %v4844 = vsel %vm1276, %v4842, %v4843
      %v4845 = vrot.slane %v4843, 4
      %v4846 = vrot.slane %v3742, 5
      %v4847 = vsel %vm1276, %v4845, %v4846
      %s4848 = scalar_lea.vmem %s3, 8
      %v4849 = vld [vmem:[%s4848] sm:$0xf]
      %v4850 = vunpack.c.l.b16 %v4739
      %v4851 = vunpack.c.l.b16 %v4742
      %v4852 = vunpack.c.l.b16 %v4746
      %v4853 = vunpack.c.l.b16 %v4749
      %v4854 = vunpack.c.l.b16 %v4753
      %v4855 = vunpack.c.l.b16 %v4756
      %v4856 = vunpack.c.l.b16 %v4760
      %v4857 = vunpack.c.l.b16 %v4763
      %v4858 = vunpack.c.l.b16 %v4767
      %v4859 = vunpack.c.l.b16 %v4770
      %v4860 = vunpack.c.l.b16 %v4774
      %v4861 = vunpack.c.l.b16 %v4777
      %v4862 = vunpack.c.l.b16 %v4781
      %v4863 = vunpack.c.l.b16 %v4784
      %v4864 = vunpack.c.l.b16 %v4788
      %v4865 = vunpack.c.l.b16 %v4791
      %v4866 = vunpack.c.l.b16 %v4795
      %v4867 = vunpack.c.l.b16 %v4798
      %v4868 = vunpack.c.l.b16 %v4802
      %v4869 = vunpack.c.l.b16 %v4805
      %v4870 = vunpack.c.l.b16 %v4809
      %v4871 = vunpack.c.l.b16 %v4812
      %v4872 = vunpack.c.l.b16 %v4816
      %v4873 = vunpack.c.l.b16 %v4819
      %v4874 = vunpack.c.l.b16 %v4823
      %v4875 = vunpack.c.l.b16 %v4826
      %v4876 = vunpack.c.l.b16 %v4830
      %v4877 = vunpack.c.l.b16 %v4833
      %v4878 = vunpack.c.l.b16 %v4837
      %v4879 = vunpack.c.l.b16 %v4840
      %v4880 = vunpack.c.l.b16 %v4844
      %v4881 = vunpack.c.l.b16 %v4847
      %v4882 = vpack.c.b16 %v4851, %v4850
      %v4883 = vpack.c.b16 %v4853, %v4852
      %v4884 = vpack.c.b16 %v4855, %v4854
      %v4885 = vpack.c.b16 %v4857, %v4856
      %v4886 = vpack.c.b16 %v4859, %v4858
      %v4887 = vpack.c.b16 %v4861, %v4860
      %v4888 = vpack.c.b16 %v4863, %v4862
      %v4889 = vpack.c.b16 %v4865, %v4864
      %v4890 = vpack.c.b16 %v4867, %v4866
      %v4891 = vpack.c.b16 %v4869, %v4868
      %v4892 = vpack.c.b16 %v4871, %v4870
      %v4893 = vpack.c.b16 %v4873, %v4872
      %v4894 = vpack.c.b16 %v4875, %v4874
      %v4895 = vpack.c.b16 %v4877, %v4876
      %v4896 = vpack.c.b16 %v4879, %v4878
      %v4897 = vpack.c.b16 %v4881, %v4880
      %v4899 = vsel %vm4198, %v4882, 0
      %v4902 = vsel %vm4198, %v4883, 0
      %v4905 = vsel %vm4198, %v4884, 0
      %v4908 = vsel %vm4198, %v4885, 0
      %v4911 = vsel %vm4198, %v4886, 0
      %v4914 = vsel %vm4198, %v4887, 0
      %v4917 = vsel %vm4198, %v4888, 0
      %v4920 = vsel %vm4198, %v4889, 0
      %v4923 = vsel %vm4198, %v4890, 0
      %v4926 = vsel %vm4198, %v4891, 0
      %v4929 = vsel %vm4198, %v4892, 0
      %v4932 = vsel %vm4198, %v4893, 0
      %v4935 = vsel %vm4198, %v4894, 0
      %v4938 = vsel %vm4198, %v4895, 0
      %v4941 = vsel %vm4198, %v4896, 0
      %v4944 = vsel %vm4198, %v4897, 0
      %v4947 = vsel %vm4247, %v4849, 0
      %4949 = vmatprep.subr.bf16.mxu0 0
      %4950 = vmatpush1.bf16.msra.mxu0 %v4947
      %4951 = vmatprep.subr.bf16.mxu0 0
      %4952 = vmatpush1.bf16.msra.mxu0 0
      %4953 = vmatprep.subr.bf16.mxu0 0
      %4954 = vmatpush1.bf16.msra.mxu0 0
      %4955 = vmatprep.subr.bf16.mxu0 0
      %4956 = vmatpush1.bf16.msra.mxu0 0
      %4957 = vmatprep.subr.bf16.mxu0 0
      %4958 = vmatpush1.bf16.msra.mxu0 0
      %4959 = vmatprep.subr.bf16.mxu0 0
      %4960 = vmatpush1.bf16.msra.mxu0 0
      %4961 = vmatprep.subr.bf16.mxu0 0
      %4962 = vmatpush1.bf16.msra.mxu0 0
      %4963 = vmatprep.subr.bf16.mxu0 0
      %4964 = vmatpush1.bf16.msra.mxu0 0
      %4965 = vmatprep.subr.bf16.mxu0 0
      %4966 = vmatpush1.bf16.msra.mxu0 0
      %4967 = vmatprep.subr.bf16.mxu0 0
      %4968 = vmatpush1.bf16.msra.mxu0 0
      %4969 = vmatprep.subr.bf16.mxu0 0
      %4970 = vmatpush1.bf16.msra.mxu0 0
      %4971 = vmatprep.subr.bf16.mxu0 0
      %4972 = vmatpush1.bf16.msra.mxu0 0
      %4973 = vmatprep.subr.bf16.mxu0 0
      %4974 = vmatpush1.bf16.msra.mxu0 0
      %4975 = vmatprep.subr.bf16.mxu0 0
      %4976 = vmatpush1.bf16.msra.mxu0 0
      %4977 = vmatprep.subr.bf16.mxu0 0
      %4978 = vmatpush1.bf16.msra.mxu0 0
      %4979 = vmatprep.subr.bf16.mxu0 0
      %4980 = vmatpush1.bf16.msra.mxu0 0
      %4981 = vmatprep.mubr.bf16.mxu0 0
      %4982 = vmatmul.mubr.bf16.gmra.mrb[0].mxu0 %v4899
      %v4983 = vpop.f32.mrb[0].mxu0
      %v4984 = vadd.f32 0.0, %v4983
      %v4985 = vpop.f32.mrb[0].mxu0
      %v4986 = vpop.f32.mrb[0].mxu0
      %v4987 = vadd.f32 0.0, %v4986
      %v4988 = vpop.f32.mrb[0].mxu0
      %4989 = vmatprep.mubr.bf16.mxu0 0
      %4990 = vmatmul.mubr.bf16.gmra.mrb[0].mxu0 %v4902
      %v4991 = vpop.f32.mrb[0].mxu0
      %v4992 = vadd.f32 0.0, %v4991
      %v4993 = vpop.f32.mrb[0].mxu0
      %v4994 = vpop.f32.mrb[0].mxu0
      %v4995 = vadd.f32 0.0, %v4994
      %v4996 = vpop.f32.mrb[0].mxu0
      %4997 = vmatprep.mubr.bf16.mxu0 0
      %4998 = vmatmul.mubr.bf16.gmra.mrb[0].mxu0 %v4905
      %v4999 = vpop.f32.mrb[0].mxu0
      %v5000 = vadd.f32 0.0, %v4999
      %v5001 = vpop.f32.mrb[0].mxu0
      %v5002 = vpop.f32.mrb[0].mxu0
      %v5003 = vadd.f32 0.0, %v5002
      %v5004 = vpop.f32.mrb[0].mxu0
      %5005 = vmatprep.mubr.bf16.mxu0 0
      %5006 = vmatmul.mubr.bf16.gmra.mrb[0].mxu0 %v4908
      %v5007 = vpop.f32.mrb[0].mxu0
      %v5008 = vadd.f32 0.0, %v5007
      %v5009 = vpop.f32.mrb[0].mxu0
      %v5010 = vpop.f32.mrb[0].mxu0
      %v5011 = vadd.f32 0.0, %v5010
      %v5012 = vpop.f32.mrb[0].mxu0
      %5013 = vmatprep.mubr.bf16.mxu0 0
      %5014 = vmatmul.mubr.bf16.gmra.mrb[0].mxu0 %v4911
      %v5015 = vpop.f32.mrb[0].mxu0
      %v5016 = vadd.f32 0.0, %v5015
      %v5017 = vpop.f32.mrb[0].mxu0
      %v5018 = vpop.f32.mrb[0].mxu0
      %v5019 = vadd.f32 0.0, %v5018
      %v5020 = vpop.f32.mrb[0].mxu0
      %5021 = vmatprep.mubr.bf16.mxu0 0
      %5022 = vmatmul.mubr.bf16.gmra.mrb[0].mxu0 %v4914
      %v5023 = vpop.f32.mrb[0].mxu0
      %v5024 = vadd.f32 0.0, %v5023
      %v5025 = vpop.f32.mrb[0].mxu0
      %v5026 = vpop.f32.mrb[0].mxu0
      %v5027 = vadd.f32 0.0, %v5026
      %v5028 = vpop.f32.mrb[0].mxu0
      %5029 = vmatprep.mubr.bf16.mxu0 0
      %5030 = vmatmul.mubr.bf16.gmra.mrb[0].mxu0 %v4917
      %v5031 = vpop.f32.mrb[0].mxu0
      %v5032 = vadd.f32 0.0, %v5031
      %v5033 = vpop.f32.mrb[0].mxu0
      %v5034 = vpop.f32.mrb[0].mxu0
      %v5035 = vadd.f32 0.0, %v5034
      %v5036 = vpop.f32.mrb[0].mxu0
      %5037 = vmatprep.mubr.bf16.mxu0 0
      %5038 = vmatmul.mubr.bf16.gmra.mrb[0].mxu0 %v4920
      %v5039 = vpop.f32.mrb[0].mxu0
      %v5040 = vadd.f32 0.0, %v5039
      %v5041 = vpop.f32.mrb[0].mxu0
      %v5042 = vpop.f32.mrb[0].mxu0
      %v5043 = vadd.f32 0.0, %v5042
      %v5044 = vpop.f32.mrb[0].mxu0
      %5045 = vmatprep.mubr.bf16.mxu0 0
      %5046 = vmatmul.mubr.bf16.gmra.mrb[0].mxu0 %v4923
      %v5047 = vpop.f32.mrb[0].mxu0
      %v5048 = vadd.f32 0.0, %v5047
      %v5049 = vpop.f32.mrb[0].mxu0
      %v5050 = vpop.f32.mrb[0].mxu0
      %v5051 = vadd.f32 0.0, %v5050
      %v5052 = vpop.f32.mrb[0].mxu0
      %5053 = vmatprep.mubr.bf16.mxu0 0
      %5054 = vmatmul.mubr.bf16.gmra.mrb[0].mxu0 %v4926
      %v5055 = vpop.f32.mrb[0].mxu0
      %v5056 = vadd.f32 0.0, %v5055
      %v5057 = vpop.f32.mrb[0].mxu0
      %v5058 = vpop.f32.mrb[0].mxu0
      %v5059 = vadd.f32 0.0, %v5058
      %v5060 = vpop.f32.mrb[0].mxu0
      %5061 = vmatprep.mubr.bf16.mxu0 0
      %5062 = vmatmul.mubr.bf16.gmra.mrb[0].mxu0 %v4929
      %v5063 = vpop.f32.mrb[0].mxu0
      %v5064 = vadd.f32 0.0, %v5063
      %v5065 = vpop.f32.mrb[0].mxu0
      %v5066 = vpop.f32.mrb[0].mxu0
      %v5067 = vadd.f32 0.0, %v5066
      %v5068 = vpop.f32.mrb[0].mxu0
      %5069 = vmatprep.mubr.bf16.mxu0 0
      %5070 = vmatmul.mubr.bf16.gmra.mrb[0].mxu0 %v4932
      %v5071 = vpop.f32.mrb[0].mxu0
      %v5072 = vadd.f32 0.0, %v5071
      %v5073 = vpop.f32.mrb[0].mxu0
      %v5074 = vpop.f32.mrb[0].mxu0
      %v5075 = vadd.f32 0.0, %v5074
      %v5076 = vpop.f32.mrb[0].mxu0
      %5077 = vmatprep.mubr.bf16.mxu0 0
      %5078 = vmatmul.mubr.bf16.gmra.mrb[0].mxu0 %v4935
      %v5079 = vpop.f32.mrb[0].mxu0
      %v5080 = vadd.f32 0.0, %v5079
      %v5081 = vpop.f32.mrb[0].mxu0
      %v5082 = vpop.f32.mrb[0].mxu0
      %v5083 = vadd.f32 0.0, %v5082
      %v5084 = vpop.f32.mrb[0].mxu0
      %5085 = vmatprep.mubr.bf16.mxu0 0
      %5086 = vmatmul.mubr.bf16.gmra.mrb[0].mxu0 %v4938
      %v5087 = vpop.f32.mrb[0].mxu0
      %v5088 = vadd.f32 0.0, %v5087
      %v5089 = vpop.f32.mrb[0].mxu0
      %v5090 = vpop.f32.mrb[0].mxu0
      %v5091 = vadd.f32 0.0, %v5090
      %v5092 = vpop.f32.mrb[0].mxu0
      %5093 = vmatprep.mubr.bf16.mxu0 0
      %5094 = vmatmul.mubr.bf16.gmra.mrb[0].mxu0 %v4941
      %v5095 = vpop.f32.mrb[0].mxu0
      %v5096 = vadd.f32 0.0, %v5095
      %v5097 = vpop.f32.mrb[0].mxu0
      %v5098 = vpop.f32.mrb[0].mxu0
      %v5099 = vadd.f32 0.0, %v5098
      %v5100 = vpop.f32.mrb[0].mxu0
      %5101 = vmatprep.mubr.bf16.mxu0 0
      %5102 = vmatmul.mubr.bf16.gmra.mrb[0].mxu0 %v4944
      %v5103 = vpop.f32.mrb[0].mxu0
      %v5104 = vadd.f32 0.0, %v5103
      %v5105 = vpop.f32.mrb[0].mxu0
      %v5106 = vpop.f32.mrb[0].mxu0
      %v5107 = vadd.f32 0.0, %v5106
      %v5108 = vpop.f32.mrb[0].mxu0
      %5109 = vdwg.mxu0
      %v5110 = vadd.f32 %v4578, %v4984
      %v5111 = vadd.f32 %v4581, %v4987
      %v5112 = vadd.f32 %v4586, %v4992
      %v5113 = vadd.f32 %v4589, %v4995
      %v5114 = vadd.f32 %v4594, %v5000
      %v5115 = vadd.f32 %v4597, %v5003
      %v5116 = vadd.f32 %v4602, %v5008
      %v5117 = vadd.f32 %v4605, %v5011
      %v5118 = vadd.f32 %v4610, %v5016
      %v5119 = vadd.f32 %v4613, %v5019
      %v5120 = vadd.f32 %v4618, %v5024
      %v5121 = vadd.f32 %v4621, %v5027
      %v5122 = vadd.f32 %v4626, %v5032
      %v5123 = vadd.f32 %v4629, %v5035
      %v5124 = vadd.f32 %v4634, %v5040
      %v5125 = vadd.f32 %v4637, %v5043
      %v5126 = vadd.f32 %v4642, %v5048
      %v5127 = vadd.f32 %v4645, %v5051
      %v5128 = vadd.f32 %v4650, %v5056
      %v5129 = vadd.f32 %v4653, %v5059
      %v5130 = vadd.f32 %v4658, %v5064
      %v5131 = vadd.f32 %v4661, %v5067
      %v5132 = vadd.f32 %v4666, %v5072
      %v5133 = vadd.f32 %v4669, %v5075
      %v5134 = vadd.f32 %v4674, %v5080
      %v5135 = vadd.f32 %v4677, %v5083
      %v5136 = vadd.f32 %v4682, %v5088
      %v5137 = vadd.f32 %v4685, %v5091
      %v5138 = vadd.f32 %v4690, %v5096
      %v5139 = vadd.f32 %v4693, %v5099
      %v5140 = vadd.f32 %v4698, %v5104
      %v5141 = vadd.f32 %v4701, %v5107
      %s5142 = scalar_lea.vmem %s3, 12
      %v5143 = vld [vmem:[%s5142] sm:$0xf]
      %v5146 = vunpack.c.l.b16 %v3723
      %v5147 = vunpack.c.l.b16 %v3724
      %v5148 = vpack.c.b16 %v5147, %v5146
      %v5150 = vsel %vm4198, %v5148, 0
      %v5153 = vsel %vm4247, %v5143, 0
      %5155 = vmatprep.subr.bf16.mxu0 0
      %5156 = vmatpush1.bf16.msra.mxu0 %v5153
      %5157 = vmatprep.subr.bf16.mxu0 0
      %5158 = vmatpush1.bf16.msra.mxu0 0
      %5159 = vmatprep.subr.bf16.mxu0 0
      %5160 = vmatpush1.bf16.msra.mxu0 0
      %5161 = vmatprep.subr.bf16.mxu0 0
      %5162 = vmatpush1.bf16.msra.mxu0 0
      %5163 = vmatprep.subr.bf16.mxu0 0
      %5164 = vmatpush1.bf16.msra.mxu0 0
      %5165 = vmatprep.subr.bf16.mxu0 0
      %5166 = vmatpush1.bf16.msra.mxu0 0
      %5167 = vmatprep.subr.bf16.mxu0 0
      %5168 = vmatpush1.bf16.msra.mxu0 0
      %5169 = vmatprep.subr.bf16.mxu0 0
      %5170 = vmatpush1.bf16.msra.mxu0 0
      %5171 = vmatprep.subr.bf16.mxu0 0
      %5172 = vmatpush1.bf16.msra.mxu0 0
      %5173 = vmatprep.subr.bf16.mxu0 0
      %5174 = vmatpush1.bf16.msra.mxu0 0
      %5175 = vmatprep.subr.bf16.mxu0 0
      %5176 = vmatpush1.bf16.msra.mxu0 0
      %5177 = vmatprep.subr.bf16.mxu0 0
      %5178 = vmatpush1.bf16.msra.mxu0 0
      %5179 = vmatprep.subr.bf16.mxu0 0
      %5180 = vmatpush1.bf16.msra.mxu0 0
      %5181 = vmatprep.subr.bf16.mxu0 0
      %5182 = vmatpush1.bf16.msra.mxu0 0
      %5183 = vmatprep.subr.bf16.mxu0 0
      %5184 = vmatpush1.bf16.msra.mxu0 0
      %5185 = vmatprep.subr.bf16.mxu0 0
      %5186 = vmatpush1.bf16.msra.mxu0 0
      %5187 = vmatprep.mubr.bf16.mxu0 0
      %5188 = vmatmul.mubr.bf16.gmra.mrb[0].mxu0 %v4496
      %v5189 = vpop.f32.mrb[0].mxu0
      %v5190 = vadd.f32 0.0, %v5189
      %v5191 = vpop.f32.mrb[0].mxu0
      %v5192 = vpop.f32.mrb[0].mxu0
      %v5193 = vadd.f32 0.0, %v5192
      %v5194 = vpop.f32.mrb[0].mxu0
      %5195 = vmatprep.mubr.bf16.mxu0 0
      %5196 = vmatmul.mubr.bf16.gmra.mrb[0].mxu0 %v4499
      %v5197 = vpop.f32.mrb[0].mxu0
      %v5198 = vadd.f32 0.0, %v5197
      %v5199 = vpop.f32.mrb[0].mxu0
      %v5200 = vpop.f32.mrb[0].mxu0
      %v5201 = vadd.f32 0.0, %v5200
      %v5202 = vpop.f32.mrb[0].mxu0
      %5203 = vmatprep.mubr.bf16.mxu0 0
      %5204 = vmatmul.mubr.bf16.gmra.mrb[0].mxu0 %v4502
      %v5205 = vpop.f32.mrb[0].mxu0
      %v5206 = vadd.f32 0.0, %v5205
      %v5207 = vpop.f32.mrb[0].mxu0
      %v5208 = vpop.f32.mrb[0].mxu0
      %v5209 = vadd.f32 0.0, %v5208
      %v5210 = vpop.f32.mrb[0].mxu0
      %5211 = vmatprep.mubr.bf16.mxu0 0
      %5212 = vmatmul.mubr.bf16.gmra.mrb[0].mxu0 %v4505
      %v5213 = vpop.f32.mrb[0].mxu0
      %v5214 = vadd.f32 0.0, %v5213
      %v5215 = vpop.f32.mrb[0].mxu0
      %v5216 = vpop.f32.mrb[0].mxu0
      %v5217 = vadd.f32 0.0, %v5216
      %v5218 = vpop.f32.mrb[0].mxu0
      %5219 = vmatprep.mubr.bf16.mxu0 0
      %5220 = vmatmul.mubr.bf16.gmra.mrb[0].mxu0 %v4508
      %v5221 = vpop.f32.mrb[0].mxu0
      %v5222 = vadd.f32 0.0, %v5221
      %v5223 = vpop.f32.mrb[0].mxu0
      %v5224 = vpop.f32.mrb[0].mxu0
      %v5225 = vadd.f32 0.0, %v5224
      %v5226 = vpop.f32.mrb[0].mxu0
      %5227 = vmatprep.mubr.bf16.mxu0 0
      %5228 = vmatmul.mubr.bf16.gmra.mrb[0].mxu0 %v4511
      %v5229 = vpop.f32.mrb[0].mxu0
      %v5230 = vadd.f32 0.0, %v5229
      %v5231 = vpop.f32.mrb[0].mxu0
      %v5232 = vpop.f32.mrb[0].mxu0
      %v5233 = vadd.f32 0.0, %v5232
      %v5234 = vpop.f32.mrb[0].mxu0
      %5235 = vmatprep.mubr.bf16.mxu0 0
      %5236 = vmatmul.mubr.bf16.gmra.mrb[0].mxu0 %v4514
      %v5237 = vpop.f32.mrb[0].mxu0
      %v5238 = vadd.f32 0.0, %v5237
      %v5239 = vpop.f32.mrb[0].mxu0
      %v5240 = vpop.f32.mrb[0].mxu0
      %v5241 = vadd.f32 0.0, %v5240
      %v5242 = vpop.f32.mrb[0].mxu0
      %5243 = vmatprep.mubr.bf16.mxu0 0
      %5244 = vmatmul.mubr.bf16.gmra.mrb[0].mxu0 %v4517
      %v5245 = vpop.f32.mrb[0].mxu0
      %v5246 = vadd.f32 0.0, %v5245
      %v5247 = vpop.f32.mrb[0].mxu0
      %v5248 = vpop.f32.mrb[0].mxu0
      %v5249 = vadd.f32 0.0, %v5248
      %v5250 = vpop.f32.mrb[0].mxu0
      %5251 = vmatprep.mubr.bf16.mxu0 0
      %5252 = vmatmul.mubr.bf16.gmra.mrb[0].mxu0 %v4520
      %v5253 = vpop.f32.mrb[0].mxu0
      %v5254 = vadd.f32 0.0, %v5253
      %v5255 = vpop.f32.mrb[0].mxu0
      %v5256 = vpop.f32.mrb[0].mxu0
      %v5257 = vadd.f32 0.0, %v5256
      %v5258 = vpop.f32.mrb[0].mxu0
      %5259 = vmatprep.mubr.bf16.mxu0 0
      %5260 = vmatmul.mubr.bf16.gmra.mrb[0].mxu0 %v4523
      %v5261 = vpop.f32.mrb[0].mxu0
      %v5262 = vadd.f32 0.0, %v5261
      %v5263 = vpop.f32.mrb[0].mxu0
      %v5264 = vpop.f32.mrb[0].mxu0
      %v5265 = vadd.f32 0.0, %v5264
      %v5266 = vpop.f32.mrb[0].mxu0
      %5267 = vmatprep.mubr.bf16.mxu0 0
      %5268 = vmatmul.mubr.bf16.gmra.mrb[0].mxu0 %v4526
      %v5269 = vpop.f32.mrb[0].mxu0
      %v5270 = vadd.f32 0.0, %v5269
      %v5271 = vpop.f32.mrb[0].mxu0
      %v5272 = vpop.f32.mrb[0].mxu0
      %v5273 = vadd.f32 0.0, %v5272
      %v5274 = vpop.f32.mrb[0].mxu0
      %5275 = vmatprep.mubr.bf16.mxu0 0
      %5276 = vmatmul.mubr.bf16.gmra.mrb[0].mxu0 %v4529
      %v5277 = vpop.f32.mrb[0].mxu0
      %v5278 = vadd.f32 0.0, %v5277
      %v5279 = vpop.f32.mrb[0].mxu0
      %v5280 = vpop.f32.mrb[0].mxu0
      %v5281 = vadd.f32 0.0, %v5280
      %v5282 = vpop.f32.mrb[0].mxu0
      %5283 = vmatprep.mubr.bf16.mxu0 0
      %5284 = vmatmul.mubr.bf16.gmra.mrb[0].mxu0 %v4532
      %v5285 = vpop.f32.mrb[0].mxu0
      %v5286 = vadd.f32 0.0, %v5285
      %v5287 = vpop.f32.mrb[0].mxu0
      %v5288 = vpop.f32.mrb[0].mxu0
      %v5289 = vadd.f32 0.0, %v5288
      %v5290 = vpop.f32.mrb[0].mxu0
      %5291 = vmatprep.mubr.bf16.mxu0 0
      %5292 = vmatmul.mubr.bf16.gmra.mrb[0].mxu0 %v4535
      %v5293 = vpop.f32.mrb[0].mxu0
      %v5294 = vadd.f32 0.0, %v5293
      %v5295 = vpop.f32.mrb[0].mxu0
      %v5296 = vpop.f32.mrb[0].mxu0
      %v5297 = vadd.f32 0.0, %v5296
      %v5298 = vpop.f32.mrb[0].mxu0
      %5299 = vmatprep.mubr.bf16.mxu0 0
      %5300 = vmatmul.mubr.bf16.gmra.mrb[0].mxu0 %v4538
      %v5301 = vpop.f32.mrb[0].mxu0
      %v5302 = vadd.f32 0.0, %v5301
      %v5303 = vpop.f32.mrb[0].mxu0
      %v5304 = vpop.f32.mrb[0].mxu0
      %v5305 = vadd.f32 0.0, %v5304
      %v5306 = vpop.f32.mrb[0].mxu0
      %5307 = vmatprep.mubr.bf16.mxu0 0
      %5308 = vmatmul.mubr.bf16.gmra.mrb[0].mxu0 %v5150
      %v5309 = vpop.f32.mrb[0].mxu0
      %v5310 = vadd.f32 0.0, %v5309
      %v5311 = vpop.f32.mrb[0].mxu0
      %v5312 = vpop.f32.mrb[0].mxu0
      %v5313 = vadd.f32 0.0, %v5312
      %v5314 = vpop.f32.mrb[0].mxu0
      %5315 = vdwg.mxu0
      %v5316 = vadd.f32 %v5110, %v5190
      %v5317 = vadd.f32 %v5111, %v5193
      %v5318 = vadd.f32 %v5112, %v5198
      %v5319 = vadd.f32 %v5113, %v5201
      %v5320 = vadd.f32 %v5114, %v5206
      %v5321 = vadd.f32 %v5115, %v5209
      %v5322 = vadd.f32 %v5116, %v5214
      %v5323 = vadd.f32 %v5117, %v5217
      %v5324 = vadd.f32 %v5118, %v5222
      %v5325 = vadd.f32 %v5119, %v5225
      %v5326 = vadd.f32 %v5120, %v5230
      %v5327 = vadd.f32 %v5121, %v5233
      %v5328 = vadd.f32 %v5122, %v5238
      %v5329 = vadd.f32 %v5123, %v5241
      %v5330 = vadd.f32 %v5124, %v5246
      %v5331 = vadd.f32 %v5125, %v5249
      %v5332 = vadd.f32 %v5126, %v5254
      %v5333 = vadd.f32 %v5127, %v5257
      %v5334 = vadd.f32 %v5128, %v5262
      %v5335 = vadd.f32 %v5129, %v5265
      %v5336 = vadd.f32 %v5130, %v5270
      %v5337 = vadd.f32 %v5131, %v5273
      %v5338 = vadd.f32 %v5132, %v5278
      %v5339 = vadd.f32 %v5133, %v5281
      %v5340 = vadd.f32 %v5134, %v5286
      %v5341 = vadd.f32 %v5135, %v5289
      %v5342 = vadd.f32 %v5136, %v5294
      %v5343 = vadd.f32 %v5137, %v5297
      %v5344 = vadd.f32 %v5138, %v5302
      %v5345 = vadd.f32 %v5139, %v5305
      %v5346 = vadd.f32 %v5140, %v5310
      %v5347 = vadd.f32 %v5141, %v5313
      %v5349 = vshrl.u32 %v3723, 16
      %v5351 = vrot.slane %v5349, 4
      %v5352 = vshll.u32 %v3723, 16
      %v5354 = vrot.slane %v5352, 5
      %v5355 = vor.u32 %v5351, %v5354
      %v5356 = vrot.slane %v5355, 4
      %v5358 = vshll.u32 %v3724, 16
      %v5360 = vrot.slane %v5358, 5
      %v5361 = vsel %vm301, %v5356, %v5360
      %v5362 = vshrl.u32 %v3724, 16
      %v5364 = vrot.slane %v5362, 4
      %v5365 = vor.u32 %v5364, %v5360
      %v5366 = vrot.slane %v5365, 4
      %v5368 = vshll.u32 %v3743, 16
      %v5370 = vrot.slane %v5368, 5
      %v5371 = vsel %vm301, %v5366, %v5370
      %s5372 = scalar_lea.vmem %s3, 16
      %v5373 = vld [vmem:[%s5372] sm:$0xf]
      %v5374 = vunpack.c.l.b16 %v5361
      %v5375 = vunpack.c.l.b16 %v5371
      %v5376 = vpack.c.b16 %v5375, %v5374
      %v5378 = vsel %vm4198, %v5376, 0
      %v5381 = vsel %vm4247, %v5373, 0
      %5383 = vmatprep.subr.bf16.mxu0 0
      %5384 = vmatpush1.bf16.msra.mxu0 %v5381
      %5385 = vmatprep.subr.bf16.mxu0 0
      %5386 = vmatpush1.bf16.msra.mxu0 0
      %5387 = vmatprep.subr.bf16.mxu0 0
      %5388 = vmatpush1.bf16.msra.mxu0 0
      %5389 = vmatprep.subr.bf16.mxu0 0
      %5390 = vmatpush1.bf16.msra.mxu0 0
      %5391 = vmatprep.subr.bf16.mxu0 0
      %5392 = vmatpush1.bf16.msra.mxu0 0
      %5393 = vmatprep.subr.bf16.mxu0 0
      %5394 = vmatpush1.bf16.msra.mxu0 0
      %5395 = vmatprep.subr.bf16.mxu0 0
      %5396 = vmatpush1.bf16.msra.mxu0 0
      %5397 = vmatprep.subr.bf16.mxu0 0
      %5398 = vmatpush1.bf16.msra.mxu0 0
      %5399 = vmatprep.subr.bf16.mxu0 0
      %5400 = vmatpush1.bf16.msra.mxu0 0
      %5401 = vmatprep.subr.bf16.mxu0 0
      %5402 = vmatpush1.bf16.msra.mxu0 0
      %5403 = vmatprep.subr.bf16.mxu0 0
      %5404 = vmatpush1.bf16.msra.mxu0 0
      %5405 = vmatprep.subr.bf16.mxu0 0
      %5406 = vmatpush1.bf16.msra.mxu0 0
      %5407 = vmatprep.subr.bf16.mxu0 0
      %5408 = vmatpush1.bf16.msra.mxu0 0
      %5409 = vmatprep.subr.bf16.mxu0 0
      %5410 = vmatpush1.bf16.msra.mxu0 0
      %5411 = vmatprep.subr.bf16.mxu0 0
      %5412 = vmatpush1.bf16.msra.mxu0 0
      %5413 = vmatprep.subr.bf16.mxu0 0
      %5414 = vmatpush1.bf16.msra.mxu0 0
      %5415 = vmatprep.mubr.bf16.mxu0 0
      %5416 = vmatmul.mubr.bf16.gmra.mrb[0].mxu0 %v4203
      %v5417 = vpop.f32.mrb[0].mxu0
      %v5418 = vadd.f32 0.0, %v5417
      %v5419 = vpop.f32.mrb[0].mxu0
      %v5420 = vpop.f32.mrb[0].mxu0
      %v5421 = vadd.f32 0.0, %v5420
      %v5422 = vpop.f32.mrb[0].mxu0
      %5423 = vmatprep.mubr.bf16.mxu0 0
      %5424 = vmatmul.mubr.bf16.gmra.mrb[0].mxu0 %v4206
      %v5425 = vpop.f32.mrb[0].mxu0
      %v5426 = vadd.f32 0.0, %v5425
      %v5427 = vpop.f32.mrb[0].mxu0
      %v5428 = vpop.f32.mrb[0].mxu0
      %v5429 = vadd.f32 0.0, %v5428
      %v5430 = vpop.f32.mrb[0].mxu0
      %5431 = vmatprep.mubr.bf16.mxu0 0
      %5432 = vmatmul.mubr.bf16.gmra.mrb[0].mxu0 %v4209
      %v5433 = vpop.f32.mrb[0].mxu0
      %v5434 = vadd.f32 0.0, %v5433
      %v5435 = vpop.f32.mrb[0].mxu0
      %v5436 = vpop.f32.mrb[0].mxu0
      %v5437 = vadd.f32 0.0, %v5436
      %v5438 = vpop.f32.mrb[0].mxu0
      %5439 = vmatprep.mubr.bf16.mxu0 0
      %5440 = vmatmul.mubr.bf16.gmra.mrb[0].mxu0 %v4212
      %v5441 = vpop.f32.mrb[0].mxu0
      %v5442 = vadd.f32 0.0, %v5441
      %v5443 = vpop.f32.mrb[0].mxu0
      %v5444 = vpop.f32.mrb[0].mxu0
      %v5445 = vadd.f32 0.0, %v5444
      %v5446 = vpop.f32.mrb[0].mxu0
      %5447 = vmatprep.mubr.bf16.mxu0 0
      %5448 = vmatmul.mubr.bf16.gmra.mrb[0].mxu0 %v4215
      %v5449 = vpop.f32.mrb[0].mxu0
      %v5450 = vadd.f32 0.0, %v5449
      %v5451 = vpop.f32.mrb[0].mxu0
      %v5452 = vpop.f32.mrb[0].mxu0
      %v5453 = vadd.f32 0.0, %v5452
      %v5454 = vpop.f32.mrb[0].mxu0
      %5455 = vmatprep.mubr.bf16.mxu0 0
      %5456 = vmatmul.mubr.bf16.gmra.mrb[0].mxu0 %v4218
      %v5457 = vpop.f32.mrb[0].mxu0
      %v5458 = vadd.f32 0.0, %v5457
      %v5459 = vpop.f32.mrb[0].mxu0
      %v5460 = vpop.f32.mrb[0].mxu0
      %v5461 = vadd.f32 0.0, %v5460
      %v5462 = vpop.f32.mrb[0].mxu0
      %5463 = vmatprep.mubr.bf16.mxu0 0
      %5464 = vmatmul.mubr.bf16.gmra.mrb[0].mxu0 %v4221
      %v5465 = vpop.f32.mrb[0].mxu0
      %v5466 = vadd.f32 0.0, %v5465
      %v5467 = vpop.f32.mrb[0].mxu0
      %v5468 = vpop.f32.mrb[0].mxu0
      %v5469 = vadd.f32 0.0, %v5468
      %v5470 = vpop.f32.mrb[0].mxu0
      %5471 = vmatprep.mubr.bf16.mxu0 0
      %5472 = vmatmul.mubr.bf16.gmra.mrb[0].mxu0 %v4224
      %v5473 = vpop.f32.mrb[0].mxu0
      %v5474 = vadd.f32 0.0, %v5473
      %v5475 = vpop.f32.mrb[0].mxu0
      %v5476 = vpop.f32.mrb[0].mxu0
      %v5477 = vadd.f32 0.0, %v5476
      %v5478 = vpop.f32.mrb[0].mxu0
      %5479 = vmatprep.mubr.bf16.mxu0 0
      %5480 = vmatmul.mubr.bf16.gmra.mrb[0].mxu0 %v4227
      %v5481 = vpop.f32.mrb[0].mxu0
      %v5482 = vadd.f32 0.0, %v5481
      %v5483 = vpop.f32.mrb[0].mxu0
      %v5484 = vpop.f32.mrb[0].mxu0
      %v5485 = vadd.f32 0.0, %v5484
      %v5486 = vpop.f32.mrb[0].mxu0
      %5487 = vmatprep.mubr.bf16.mxu0 0
      %5488 = vmatmul.mubr.bf16.gmra.mrb[0].mxu0 %v4230
      %v5489 = vpop.f32.mrb[0].mxu0
      %v5490 = vadd.f32 0.0, %v5489
      %v5491 = vpop.f32.mrb[0].mxu0
      %v5492 = vpop.f32.mrb[0].mxu0
      %v5493 = vadd.f32 0.0, %v5492
      %v5494 = vpop.f32.mrb[0].mxu0
      %5495 = vmatprep.mubr.bf16.mxu0 0
      %5496 = vmatmul.mubr.bf16.gmra.mrb[0].mxu0 %v4233
      %v5497 = vpop.f32.mrb[0].mxu0
      %v5498 = vadd.f32 0.0, %v5497
      %v5499 = vpop.f32.mrb[0].mxu0
      %v5500 = vpop.f32.mrb[0].mxu0
      %v5501 = vadd.f32 0.0, %v5500
      %v5502 = vpop.f32.mrb[0].mxu0
      %5503 = vmatprep.mubr.bf16.mxu0 0
      %5504 = vmatmul.mubr.bf16.gmra.mrb[0].mxu0 %v4236
      %v5505 = vpop.f32.mrb[0].mxu0
      %v5506 = vadd.f32 0.0, %v5505
      %v5507 = vpop.f32.mrb[0].mxu0
      %v5508 = vpop.f32.mrb[0].mxu0
      %v5509 = vadd.f32 0.0, %v5508
      %v5510 = vpop.f32.mrb[0].mxu0
      %5511 = vmatprep.mubr.bf16.mxu0 0
      %5512 = vmatmul.mubr.bf16.gmra.mrb[0].mxu0 %v4239
      %v5513 = vpop.f32.mrb[0].mxu0
      %v5514 = vadd.f32 0.0, %v5513
      %v5515 = vpop.f32.mrb[0].mxu0
      %v5516 = vpop.f32.mrb[0].mxu0
      %v5517 = vadd.f32 0.0, %v5516
      %v5518 = vpop.f32.mrb[0].mxu0
      %5519 = vmatprep.mubr.bf16.mxu0 0
      %5520 = vmatmul.mubr.bf16.gmra.mrb[0].mxu0 %v4242
      %v5521 = vpop.f32.mrb[0].mxu0
      %v5522 = vadd.f32 0.0, %v5521
      %v5523 = vpop.f32.mrb[0].mxu0
      %v5524 = vpop.f32.mrb[0].mxu0
      %v5525 = vadd.f32 0.0, %v5524
      %v5526 = vpop.f32.mrb[0].mxu0
      %5527 = vmatprep.mubr.bf16.mxu0 0
      %5528 = vmatmul.mubr.bf16.gmra.mrb[0].mxu0 %v4245
      %v5529 = vpop.f32.mrb[0].mxu0
      %v5530 = vadd.f32 0.0, %v5529
      %v5531 = vpop.f32.mrb[0].mxu0
      %v5532 = vpop.f32.mrb[0].mxu0
      %v5533 = vadd.f32 0.0, %v5532
      %v5534 = vpop.f32.mrb[0].mxu0
      %5535 = vmatprep.mubr.bf16.mxu0 0
      %5536 = vmatmul.mubr.bf16.gmra.mrb[0].mxu0 %v5378
      %v5537 = vpop.f32.mrb[0].mxu0
      %v5538 = vadd.f32 0.0, %v5537
      %v5539 = vpop.f32.mrb[0].mxu0
      %v5540 = vpop.f32.mrb[0].mxu0
      %v5541 = vadd.f32 0.0, %v5540
      %v5542 = vpop.f32.mrb[0].mxu0
      %5543 = vdwg.mxu0
      %v5544 = vadd.f32 %v5316, %v5418
      %v5545 = vadd.f32 %v5317, %v5421
      %v5546 = vadd.f32 %v5318, %v5426
      %v5547 = vadd.f32 %v5319, %v5429
      %v5548 = vadd.f32 %v5320, %v5434
      %v5549 = vadd.f32 %v5321, %v5437
      %v5550 = vadd.f32 %v5322, %v5442
      %v5551 = vadd.f32 %v5323, %v5445
      %v5552 = vadd.f32 %v5324, %v5450
      %v5553 = vadd.f32 %v5325, %v5453
      %v5554 = vadd.f32 %v5326, %v5458
      %v5555 = vadd.f32 %v5327, %v5461
      %v5556 = vadd.f32 %v5328, %v5466
      %v5557 = vadd.f32 %v5329, %v5469
      %v5558 = vadd.f32 %v5330, %v5474
      %v5559 = vadd.f32 %v5331, %v5477
      %v5560 = vadd.f32 %v5332, %v5482
      %v5561 = vadd.f32 %v5333, %v5485
      %v5562 = vadd.f32 %v5334, %v5490
      %v5563 = vadd.f32 %v5335, %v5493
      %v5564 = vadd.f32 %v5336, %v5498
      %v5565 = vadd.f32 %v5337, %v5501
      %v5566 = vadd.f32 %v5338, %v5506
      %v5567 = vadd.f32 %v5339, %v5509
      %v5568 = vadd.f32 %v5340, %v5514
      %v5569 = vadd.f32 %v5341, %v5517
      %v5570 = vadd.f32 %v5342, %v5522
      %v5571 = vadd.f32 %v5343, %v5525
      %v5572 = vadd.f32 %v5344, %v5530
      %v5573 = vadd.f32 %v5345, %v5533
      %v5574 = vadd.f32 %v5346, %v5538
      %v5575 = vadd.f32 %v5347, %v5541
      %v5578 = vrot.slane %v3761, 5
      %v5579 = vrot.slane %v5578, 4
      %v5580 = vrot.slane %v3724, 5
      %v5581 = vsel %vm1276, %v5579, %v5580
      %v5582 = vrot.slane %v5580, 4
      %v5583 = vrot.slane %v3743, 5
      %v5584 = vsel %vm1276, %v5582, %v5583
      %s5585 = scalar_lea.vmem %s3, 20
      %v5586 = vld [vmem:[%s5585] sm:$0xf]
      %v5587 = vunpack.c.l.b16 %v5581
      %v5588 = vunpack.c.l.b16 %v5584
      %v5589 = vpack.c.b16 %v5588, %v5587
      %v5591 = vsel %vm4198, %v5589, 0
      %v5594 = vsel %vm4247, %v5586, 0
      %5596 = vmatprep.subr.bf16.mxu0 0
      %5597 = vmatpush1.bf16.msra.mxu0 %v5594
      %5598 = vmatprep.subr.bf16.mxu0 0
      %5599 = vmatpush1.bf16.msra.mxu0 0
      %5600 = vmatprep.subr.bf16.mxu0 0
      %5601 = vmatpush1.bf16.msra.mxu0 0
      %5602 = vmatprep.subr.bf16.mxu0 0
      %5603 = vmatpush1.bf16.msra.mxu0 0
      %5604 = vmatprep.subr.bf16.mxu0 0
      %5605 = vmatpush1.bf16.msra.mxu0 0
      %5606 = vmatprep.subr.bf16.mxu0 0
      %5607 = vmatpush1.bf16.msra.mxu0 0
      %5608 = vmatprep.subr.bf16.mxu0 0
      %5609 = vmatpush1.bf16.msra.mxu0 0
      %5610 = vmatprep.subr.bf16.mxu0 0
      %5611 = vmatpush1.bf16.msra.mxu0 0
      %5612 = vmatprep.subr.bf16.mxu0 0
      %5613 = vmatpush1.bf16.msra.mxu0 0
      %5614 = vmatprep.subr.bf16.mxu0 0
      %5615 = vmatpush1.bf16.msra.mxu0 0
      %5616 = vmatprep.subr.bf16.mxu0 0
      %5617 = vmatpush1.bf16.msra.mxu0 0
      %5618 = vmatprep.subr.bf16.mxu0 0
      %5619 = vmatpush1.bf16.msra.mxu0 0
      %5620 = vmatprep.subr.bf16.mxu0 0
      %5621 = vmatpush1.bf16.msra.mxu0 0
      %5622 = vmatprep.subr.bf16.mxu0 0
      %5623 = vmatpush1.bf16.msra.mxu0 0
      %5624 = vmatprep.subr.bf16.mxu0 0
      %5625 = vmatpush1.bf16.msra.mxu0 0
      %5626 = vmatprep.subr.bf16.mxu0 0
      %5627 = vmatpush1.bf16.msra.mxu0 0
      %5628 = vmatprep.mubr.bf16.mxu0 0
      %5629 = vmatmul.mubr.bf16.gmra.mrb[0].mxu0 %v4902
      %v5630 = vpop.f32.mrb[0].mxu0
      %v5631 = vadd.f32 0.0, %v5630
      %v5632 = vpop.f32.mrb[0].mxu0
      %v5633 = vpop.f32.mrb[0].mxu0
      %v5634 = vadd.f32 0.0, %v5633
      %v5635 = vpop.f32.mrb[0].mxu0
      %5636 = vmatprep.mubr.bf16.mxu0 0
      %5637 = vmatmul.mubr.bf16.gmra.mrb[0].mxu0 %v4905
      %v5638 = vpop.f32.mrb[0].mxu0
      %v5639 = vadd.f32 0.0, %v5638
      %v5640 = vpop.f32.mrb[0].mxu0
      %v5641 = vpop.f32.mrb[0].mxu0
      %v5642 = vadd.f32 0.0, %v5641
      %v5643 = vpop.f32.mrb[0].mxu0
      %5644 = vmatprep.mubr.bf16.mxu0 0
      %5645 = vmatmul.mubr.bf16.gmra.mrb[0].mxu0 %v4908
      %v5646 = vpop.f32.mrb[0].mxu0
      %v5647 = vadd.f32 0.0, %v5646
      %v5648 = vpop.f32.mrb[0].mxu0
      %v5649 = vpop.f32.mrb[0].mxu0
      %v5650 = vadd.f32 0.0, %v5649
      %v5651 = vpop.f32.mrb[0].mxu0
      %5652 = vmatprep.mubr.bf16.mxu0 0
      %5653 = vmatmul.mubr.bf16.gmra.mrb[0].mxu0 %v4911
      %v5654 = vpop.f32.mrb[0].mxu0
      %v5655 = vadd.f32 0.0, %v5654
      %v5656 = vpop.f32.mrb[0].mxu0
      %v5657 = vpop.f32.mrb[0].mxu0
      %v5658 = vadd.f32 0.0, %v5657
      %v5659 = vpop.f32.mrb[0].mxu0
      %5660 = vmatprep.mubr.bf16.mxu0 0
      %5661 = vmatmul.mubr.bf16.gmra.mrb[0].mxu0 %v4914
      %v5662 = vpop.f32.mrb[0].mxu0
      %v5663 = vadd.f32 0.0, %v5662
      %v5664 = vpop.f32.mrb[0].mxu0
      %v5665 = vpop.f32.mrb[0].mxu0
      %v5666 = vadd.f32 0.0, %v5665
      %v5667 = vpop.f32.mrb[0].mxu0
      %5668 = vmatprep.mubr.bf16.mxu0 0
      %5669 = vmatmul.mubr.bf16.gmra.mrb[0].mxu0 %v4917
      %v5670 = vpop.f32.mrb[0].mxu0
      %v5671 = vadd.f32 0.0, %v5670
      %v5672 = vpop.f32.mrb[0].mxu0
      %v5673 = vpop.f32.mrb[0].mxu0
      %v5674 = vadd.f32 0.0, %v5673
      %v5675 = vpop.f32.mrb[0].mxu0
      %5676 = vmatprep.mubr.bf16.mxu0 0
      %5677 = vmatmul.mubr.bf16.gmra.mrb[0].mxu0 %v4920
      %v5678 = vpop.f32.mrb[0].mxu0
      %v5679 = vadd.f32 0.0, %v5678
      %v5680 = vpop.f32.mrb[0].mxu0
      %v5681 = vpop.f32.mrb[0].mxu0
      %v5682 = vadd.f32 0.0, %v5681
      %v5683 = vpop.f32.mrb[0].mxu0
      %5684 = vmatprep.mubr.bf16.mxu0 0
      %5685 = vmatmul.mubr.bf16.gmra.mrb[0].mxu0 %v4923
      %v5686 = vpop.f32.mrb[0].mxu0
      %v5687 = vadd.f32 0.0, %v5686
      %v5688 = vpop.f32.mrb[0].mxu0
      %v5689 = vpop.f32.mrb[0].mxu0
      %v5690 = vadd.f32 0.0, %v5689
      %v5691 = vpop.f32.mrb[0].mxu0
      %5692 = vmatprep.mubr.bf16.mxu0 0
      %5693 = vmatmul.mubr.bf16.gmra.mrb[0].mxu0 %v4926
      %v5694 = vpop.f32.mrb[0].mxu0
      %v5695 = vadd.f32 0.0, %v5694
      %v5696 = vpop.f32.mrb[0].mxu0
      %v5697 = vpop.f32.mrb[0].mxu0
      %v5698 = vadd.f32 0.0, %v5697
      %v5699 = vpop.f32.mrb[0].mxu0
      %5700 = vmatprep.mubr.bf16.mxu0 0
      %5701 = vmatmul.mubr.bf16.gmra.mrb[0].mxu0 %v4929
      %v5702 = vpop.f32.mrb[0].mxu0
      %v5703 = vadd.f32 0.0, %v5702
      %v5704 = vpop.f32.mrb[0].mxu0
      %v5705 = vpop.f32.mrb[0].mxu0
      %v5706 = vadd.f32 0.0, %v5705
      %v5707 = vpop.f32.mrb[0].mxu0
      %5708 = vmatprep.mubr.bf16.mxu0 0
      %5709 = vmatmul.mubr.bf16.gmra.mrb[0].mxu0 %v4932
      %v5710 = vpop.f32.mrb[0].mxu0
      %v5711 = vadd.f32 0.0, %v5710
      %v5712 = vpop.f32.mrb[0].mxu0
      %v5713 = vpop.f32.mrb[0].mxu0
      %v5714 = vadd.f32 0.0, %v5713
      %v5715 = vpop.f32.mrb[0].mxu0
      %5716 = vmatprep.mubr.bf16.mxu0 0
      %5717 = vmatmul.mubr.bf16.gmra.mrb[0].mxu0 %v4935
      %v5718 = vpop.f32.mrb[0].mxu0
      %v5719 = vadd.f32 0.0, %v5718
      %v5720 = vpop.f32.mrb[0].mxu0
      %v5721 = vpop.f32.mrb[0].mxu0
      %v5722 = vadd.f32 0.0, %v5721
      %v5723 = vpop.f32.mrb[0].mxu0
      %5724 = vmatprep.mubr.bf16.mxu0 0
      %5725 = vmatmul.mubr.bf16.gmra.mrb[0].mxu0 %v4938
      %v5726 = vpop.f32.mrb[0].mxu0
      %v5727 = vadd.f32 0.0, %v5726
      %v5728 = vpop.f32.mrb[0].mxu0
      %v5729 = vpop.f32.mrb[0].mxu0
      %v5730 = vadd.f32 0.0, %v5729
      %v5731 = vpop.f32.mrb[0].mxu0
      %5732 = vmatprep.mubr.bf16.mxu0 0
      %5733 = vmatmul.mubr.bf16.gmra.mrb[0].mxu0 %v4941
      %v5734 = vpop.f32.mrb[0].mxu0
      %v5735 = vadd.f32 0.0, %v5734
      %v5736 = vpop.f32.mrb[0].mxu0
      %v5737 = vpop.f32.mrb[0].mxu0
      %v5738 = vadd.f32 0.0, %v5737
      %v5739 = vpop.f32.mrb[0].mxu0
      %5740 = vmatprep.mubr.bf16.mxu0 0
      %5741 = vmatmul.mubr.bf16.gmra.mrb[0].mxu0 %v4944
      %v5742 = vpop.f32.mrb[0].mxu0
      %v5743 = vadd.f32 0.0, %v5742
      %v5744 = vpop.f32.mrb[0].mxu0
      %v5745 = vpop.f32.mrb[0].mxu0
      %v5746 = vadd.f32 0.0, %v5745
      %v5747 = vpop.f32.mrb[0].mxu0
      %5748 = vmatprep.mubr.bf16.mxu0 0
      %5749 = vmatmul.mubr.bf16.gmra.mrb[0].mxu0 %v5591
      %v5750 = vpop.f32.mrb[0].mxu0
      %v5751 = vadd.f32 0.0, %v5750
      %v5752 = vpop.f32.mrb[0].mxu0
      %v5753 = vpop.f32.mrb[0].mxu0
      %v5754 = vadd.f32 0.0, %v5753
      %v5755 = vpop.f32.mrb[0].mxu0
      %5756 = vdwg.mxu0
      %v5757 = vadd.f32 %v5544, %v5631
      %v5758 = vadd.f32 %v5545, %v5634
      %v5759 = vadd.f32 %v5546, %v5639
      %v5760 = vadd.f32 %v5547, %v5642
      %v5761 = vadd.f32 %v5548, %v5647
      %v5762 = vadd.f32 %v5549, %v5650
      %v5763 = vadd.f32 %v5550, %v5655
      %v5764 = vadd.f32 %v5551, %v5658
      %v5765 = vadd.f32 %v5552, %v5663
      %v5766 = vadd.f32 %v5553, %v5666
      %v5767 = vadd.f32 %v5554, %v5671
      %v5768 = vadd.f32 %v5555, %v5674
      %v5769 = vadd.f32 %v5556, %v5679
      %v5770 = vadd.f32 %v5557, %v5682
      %v5771 = vadd.f32 %v5558, %v5687
      %v5772 = vadd.f32 %v5559, %v5690
      %v5773 = vadd.f32 %v5560, %v5695
      %v5774 = vadd.f32 %v5561, %v5698
      %v5775 = vadd.f32 %v5562, %v5703
      %v5776 = vadd.f32 %v5563, %v5706
      %v5777 = vadd.f32 %v5564, %v5711
      %v5778 = vadd.f32 %v5565, %v5714
      %v5779 = vadd.f32 %v5566, %v5719
      %v5780 = vadd.f32 %v5567, %v5722
      %v5781 = vadd.f32 %v5568, %v5727
      %v5782 = vadd.f32 %v5569, %v5730
      %v5783 = vadd.f32 %v5570, %v5735
      %v5784 = vadd.f32 %v5571, %v5738
      %v5785 = vadd.f32 %v5572, %v5743
      %v5786 = vadd.f32 %v5573, %v5746
      %v5787 = vadd.f32 %v5574, %v5751
      %v5788 = vadd.f32 %v5575, %v5754
      %s5789 = scalar_lea.vmem %s3, 24
      %v5790 = vld [vmem:[%s5789] sm:$0xf]
      %v5793 = vunpack.c.l.b16 %v3725
      %v5794 = vunpack.c.l.b16 %v3726
      %v5795 = vpack.c.b16 %v5794, %v5793
      %v5797 = vsel %vm4198, %v5795, 0
      %v5800 = vsel %vm4247, %v5790, 0
      %5802 = vmatprep.subr.bf16.mxu0 0
      %5803 = vmatpush1.bf16.msra.mxu0 %v5800
      %5804 = vmatprep.subr.bf16.mxu0 0
      %5805 = vmatpush1.bf16.msra.mxu0 0
      %5806 = vmatprep.subr.bf16.mxu0 0
      %5807 = vmatpush1.bf16.msra.mxu0 0
      %5808 = vmatprep.subr.bf16.mxu0 0
      %5809 = vmatpush1.bf16.msra.mxu0 0
      %5810 = vmatprep.subr.bf16.mxu0 0
      %5811 = vmatpush1.bf16.msra.mxu0 0
      %5812 = vmatprep.subr.bf16.mxu0 0
      %5813 = vmatpush1.bf16.msra.mxu0 0
      %5814 = vmatprep.subr.bf16.mxu0 0
      %5815 = vmatpush1.bf16.msra.mxu0 0
      %5816 = vmatprep.subr.bf16.mxu0 0
      %5817 = vmatpush1.bf16.msra.mxu0 0
      %5818 = vmatprep.subr.bf16.mxu0 0
      %5819 = vmatpush1.bf16.msra.mxu0 0
      %5820 = vmatprep.subr.bf16.mxu0 0
      %5821 = vmatpush1.bf16.msra.mxu0 0
      %5822 = vmatprep.subr.bf16.mxu0 0
      %5823 = vmatpush1.bf16.msra.mxu0 0
      %5824 = vmatprep.subr.bf16.mxu0 0
      %5825 = vmatpush1.bf16.msra.mxu0 0
      %5826 = vmatprep.subr.bf16.mxu0 0
      %5827 = vmatpush1.bf16.msra.mxu0 0
      %5828 = vmatprep.subr.bf16.mxu0 0
      %5829 = vmatpush1.bf16.msra.mxu0 0
      %5830 = vmatprep.subr.bf16.mxu0 0
      %5831 = vmatpush1.bf16.msra.mxu0 0
      %5832 = vmatprep.subr.bf16.mxu0 0
      %5833 = vmatpush1.bf16.msra.mxu0 0
      %5834 = vmatprep.mubr.bf16.mxu0 0
      %5835 = vmatmul.mubr.bf16.gmra.mrb[0].mxu0 %v4499
      %v5836 = vpop.f32.mrb[0].mxu0
      %v5837 = vadd.f32 0.0, %v5836
      %v5838 = vpop.f32.mrb[0].mxu0
      %v5839 = vpop.f32.mrb[0].mxu0
      %v5840 = vadd.f32 0.0, %v5839
      %v5841 = vpop.f32.mrb[0].mxu0
      %5842 = vmatprep.mubr.bf16.mxu0 0
      %5843 = vmatmul.mubr.bf16.gmra.mrb[0].mxu0 %v4502
      %v5844 = vpop.f32.mrb[0].mxu0
      %v5845 = vadd.f32 0.0, %v5844
      %v5846 = vpop.f32.mrb[0].mxu0
      %v5847 = vpop.f32.mrb[0].mxu0
      %v5848 = vadd.f32 0.0, %v5847
      %v5849 = vpop.f32.mrb[0].mxu0
      %5850 = vmatprep.mubr.bf16.mxu0 0
      %5851 = vmatmul.mubr.bf16.gmra.mrb[0].mxu0 %v4505
      %v5852 = vpop.f32.mrb[0].mxu0
      %v5853 = vadd.f32 0.0, %v5852
      %v5854 = vpop.f32.mrb[0].mxu0
      %v5855 = vpop.f32.mrb[0].mxu0
      %v5856 = vadd.f32 0.0, %v5855
      %v5857 = vpop.f32.mrb[0].mxu0
      %5858 = vmatprep.mubr.bf16.mxu0 0
      %5859 = vmatmul.mubr.bf16.gmra.mrb[0].mxu0 %v4508
      %v5860 = vpop.f32.mrb[0].mxu0
      %v5861 = vadd.f32 0.0, %v5860
      %v5862 = vpop.f32.mrb[0].mxu0
      %v5863 = vpop.f32.mrb[0].mxu0
      %v5864 = vadd.f32 0.0, %v5863
      %v5865 = vpop.f32.mrb[0].mxu0
      %5866 = vmatprep.mubr.bf16.mxu0 0
      %5867 = vmatmul.mubr.bf16.gmra.mrb[0].mxu0 %v4511
      %v5868 = vpop.f32.mrb[0].mxu0
      %v5869 = vadd.f32 0.0, %v5868
      %v5870 = vpop.f32.mrb[0].mxu0
      %v5871 = vpop.f32.mrb[0].mxu0
      %v5872 = vadd.f32 0.0, %v5871
      %v5873 = vpop.f32.mrb[0].mxu0
      %5874 = vmatprep.mubr.bf16.mxu0 0
      %5875 = vmatmul.mubr.bf16.gmra.mrb[0].mxu0 %v4514
      %v5876 = vpop.f32.mrb[0].mxu0
      %v5877 = vadd.f32 0.0, %v5876
      %v5878 = vpop.f32.mrb[0].mxu0
      %v5879 = vpop.f32.mrb[0].mxu0
      %v5880 = vadd.f32 0.0, %v5879
      %v5881 = vpop.f32.mrb[0].mxu0
      %5882 = vmatprep.mubr.bf16.mxu0 0
      %5883 = vmatmul.mubr.bf16.gmra.mrb[0].mxu0 %v4517
      %v5884 = vpop.f32.mrb[0].mxu0
      %v5885 = vadd.f32 0.0, %v5884
      %v5886 = vpop.f32.mrb[0].mxu0
      %v5887 = vpop.f32.mrb[0].mxu0
      %v5888 = vadd.f32 0.0, %v5887
      %v5889 = vpop.f32.mrb[0].mxu0
      %5890 = vmatprep.mubr.bf16.mxu0 0
      %5891 = vmatmul.mubr.bf16.gmra.mrb[0].mxu0 %v4520
      %v5892 = vpop.f32.mrb[0].mxu0
      %v5893 = vadd.f32 0.0, %v5892
      %v5894 = vpop.f32.mrb[0].mxu0
      %v5895 = vpop.f32.mrb[0].mxu0
      %v5896 = vadd.f32 0.0, %v5895
      %v5897 = vpop.f32.mrb[0].mxu0
      %5898 = vmatprep.mubr.bf16.mxu0 0
      %5899 = vmatmul.mubr.bf16.gmra.mrb[0].mxu0 %v4523
      %v5900 = vpop.f32.mrb[0].mxu0
      %v5901 = vadd.f32 0.0, %v5900
      %v5902 = vpop.f32.mrb[0].mxu0
      %v5903 = vpop.f32.mrb[0].mxu0
      %v5904 = vadd.f32 0.0, %v5903
      %v5905 = vpop.f32.mrb[0].mxu0
      %5906 = vmatprep.mubr.bf16.mxu0 0
      %5907 = vmatmul.mubr.bf16.gmra.mrb[0].mxu0 %v4526
      %v5908 = vpop.f32.mrb[0].mxu0
      %v5909 = vadd.f32 0.0, %v5908
      %v5910 = vpop.f32.mrb[0].mxu0
      %v5911 = vpop.f32.mrb[0].mxu0
      %v5912 = vadd.f32 0.0, %v5911
      %v5913 = vpop.f32.mrb[0].mxu0
      %5914 = vmatprep.mubr.bf16.mxu0 0
      %5915 = vmatmul.mubr.bf16.gmra.mrb[0].mxu0 %v4529
      %v5916 = vpop.f32.mrb[0].mxu0
      %v5917 = vadd.f32 0.0, %v5916
      %v5918 = vpop.f32.mrb[0].mxu0
      %v5919 = vpop.f32.mrb[0].mxu0
      %v5920 = vadd.f32 0.0, %v5919
      %v5921 = vpop.f32.mrb[0].mxu0
      %5922 = vmatprep.mubr.bf16.mxu0 0
      %5923 = vmatmul.mubr.bf16.gmra.mrb[0].mxu0 %v4532
      %v5924 = vpop.f32.mrb[0].mxu0
      %v5925 = vadd.f32 0.0, %v5924
      %v5926 = vpop.f32.mrb[0].mxu0
      %v5927 = vpop.f32.mrb[0].mxu0
      %v5928 = vadd.f32 0.0, %v5927
      %v5929 = vpop.f32.mrb[0].mxu0
      %5930 = vmatprep.mubr.bf16.mxu0 0
      %5931 = vmatmul.mubr.bf16.gmra.mrb[0].mxu0 %v4535
      %v5932 = vpop.f32.mrb[0].mxu0
      %v5933 = vadd.f32 0.0, %v5932
      %v5934 = vpop.f32.mrb[0].mxu0
      %v5935 = vpop.f32.mrb[0].mxu0
      %v5936 = vadd.f32 0.0, %v5935
      %v5937 = vpop.f32.mrb[0].mxu0
      %5938 = vmatprep.mubr.bf16.mxu0 0
      %5939 = vmatmul.mubr.bf16.gmra.mrb[0].mxu0 %v4538
      %v5940 = vpop.f32.mrb[0].mxu0
      %v5941 = vadd.f32 0.0, %v5940
      %v5942 = vpop.f32.mrb[0].mxu0
      %v5943 = vpop.f32.mrb[0].mxu0
      %v5944 = vadd.f32 0.0, %v5943
      %v5945 = vpop.f32.mrb[0].mxu0
      %5946 = vmatprep.mubr.bf16.mxu0 0
      %5947 = vmatmul.mubr.bf16.gmra.mrb[0].mxu0 %v5150
      %v5948 = vpop.f32.mrb[0].mxu0
      %v5949 = vadd.f32 0.0, %v5948
      %v5950 = vpop.f32.mrb[0].mxu0
      %v5951 = vpop.f32.mrb[0].mxu0
      %v5952 = vadd.f32 0.0, %v5951
      %v5953 = vpop.f32.mrb[0].mxu0
      %5954 = vmatprep.mubr.bf16.mxu0 0
      %5955 = vmatmul.mubr.bf16.gmra.mrb[0].mxu0 %v5797
      %v5956 = vpop.f32.mrb[0].mxu0
      %v5957 = vadd.f32 0.0, %v5956
      %v5958 = vpop.f32.mrb[0].mxu0
      %v5959 = vpop.f32.mrb[0].mxu0
      %v5960 = vadd.f32 0.0, %v5959
      %v5961 = vpop.f32.mrb[0].mxu0
      %5962 = vdwg.mxu0
      %v5963 = vadd.f32 %v5757, %v5837
      %v5964 = vadd.f32 %v5758, %v5840
      %v5965 = vadd.f32 %v5759, %v5845
      %v5966 = vadd.f32 %v5760, %v5848
      %v5967 = vadd.f32 %v5761, %v5853
      %v5968 = vadd.f32 %v5762, %v5856
      %v5969 = vadd.f32 %v5763, %v5861
      %v5970 = vadd.f32 %v5764, %v5864
      %v5971 = vadd.f32 %v5765, %v5869
      %v5972 = vadd.f32 %v5766, %v5872
      %v5973 = vadd.f32 %v5767, %v5877
      %v5974 = vadd.f32 %v5768, %v5880
      %v5975 = vadd.f32 %v5769, %v5885
      %v5976 = vadd.f32 %v5770, %v5888
      %v5977 = vadd.f32 %v5771, %v5893
      %v5978 = vadd.f32 %v5772, %v5896
      %v5979 = vadd.f32 %v5773, %v5901
      %v5980 = vadd.f32 %v5774, %v5904
      %v5981 = vadd.f32 %v5775, %v5909
      %v5982 = vadd.f32 %v5776, %v5912
      %v5983 = vadd.f32 %v5777, %v5917
      %v5984 = vadd.f32 %v5778, %v5920
      %v5985 = vadd.f32 %v5779, %v5925
      %v5986 = vadd.f32 %v5780, %v5928
      %v5987 = vadd.f32 %v5781, %v5933
      %v5988 = vadd.f32 %v5782, %v5936
      %v5989 = vadd.f32 %v5783, %v5941
      %v5990 = vadd.f32 %v5784, %v5944
      %v5991 = vadd.f32 %v5785, %v5949
      %v5992 = vadd.f32 %v5786, %v5952
      %v5993 = vadd.f32 %v5787, %v5957
      %v5994 = vadd.f32 %v5788, %v5960
      %v5996 = vshrl.u32 %v3725, 16
      %v5998 = vrot.slane %v5996, 4
      %v5999 = vshll.u32 %v3725, 16
      %v6001 = vrot.slane %v5999, 5
      %v6002 = vor.u32 %v5998, %v6001
      %v6003 = vrot.slane %v6002, 4
      %v6005 = vshll.u32 %v3726, 16
      %v6007 = vrot.slane %v6005, 5
      %v6008 = vsel %vm301, %v6003, %v6007
      %v6009 = vshrl.u32 %v3726, 16
      %v6011 = vrot.slane %v6009, 4
      %v6012 = vor.u32 %v6011, %v6007
      %v6013 = vrot.slane %v6012, 4
      %v6015 = vshll.u32 %v3744, 16
      %v6017 = vrot.slane %v6015, 5
      %v6018 = vsel %vm301, %v6013, %v6017
      %s6019 = scalar_lea.vmem %s3, 28
      %v6020 = vld [vmem:[%s6019] sm:$0xf]
      %v6021 = vunpack.c.l.b16 %v6008
      %v6022 = vunpack.c.l.b16 %v6018
      %v6023 = vpack.c.b16 %v6022, %v6021
      %v6025 = vsel %vm4198, %v6023, 0
      %v6028 = vsel %vm4247, %v6020, 0
      %6030 = vmatprep.subr.bf16.mxu0 0
      %6031 = vmatpush1.bf16.msra.mxu0 %v6028
      %6032 = vmatprep.subr.bf16.mxu0 0
      %6033 = vmatpush1.bf16.msra.mxu0 0
      %6034 = vmatprep.subr.bf16.mxu0 0
      %6035 = vmatpush1.bf16.msra.mxu0 0
      %6036 = vmatprep.subr.bf16.mxu0 0
      %6037 = vmatpush1.bf16.msra.mxu0 0
      %6038 = vmatprep.subr.bf16.mxu0 0
      %6039 = vmatpush1.bf16.msra.mxu0 0
      %6040 = vmatprep.subr.bf16.mxu0 0
      %6041 = vmatpush1.bf16.msra.mxu0 0
      %6042 = vmatprep.subr.bf16.mxu0 0
      %6043 = vmatpush1.bf16.msra.mxu0 0
      %6044 = vmatprep.subr.bf16.mxu0 0
      %6045 = vmatpush1.bf16.msra.mxu0 0
      %6046 = vmatprep.subr.bf16.mxu0 0
      %6047 = vmatpush1.bf16.msra.mxu0 0
      %6048 = vmatprep.subr.bf16.mxu0 0
      %6049 = vmatpush1.bf16.msra.mxu0 0
      %6050 = vmatprep.subr.bf16.mxu0 0
      %6051 = vmatpush1.bf16.msra.mxu0 0
      %6052 = vmatprep.subr.bf16.mxu0 0
      %6053 = vmatpush1.bf16.msra.mxu0 0
      %6054 = vmatprep.subr.bf16.mxu0 0
      %6055 = vmatpush1.bf16.msra.mxu0 0
      %6056 = vmatprep.subr.bf16.mxu0 0
      %6057 = vmatpush1.bf16.msra.mxu0 0
      %6058 = vmatprep.subr.bf16.mxu0 0
      %6059 = vmatpush1.bf16.msra.mxu0 0
      %6060 = vmatprep.subr.bf16.mxu0 0
      %6061 = vmatpush1.bf16.msra.mxu0 0
      %6062 = vmatprep.mubr.bf16.mxu0 0
      %6063 = vmatmul.mubr.bf16.gmra.mrb[0].mxu0 %v4206
      %v6064 = vpop.f32.mrb[0].mxu0
      %v6065 = vadd.f32 0.0, %v6064
      %v6066 = vpop.f32.mrb[0].mxu0
      %v6067 = vpop.f32.mrb[0].mxu0
      %v6068 = vadd.f32 0.0, %v6067
      %v6069 = vpop.f32.mrb[0].mxu0
      %6070 = vmatprep.mubr.bf16.mxu0 0
      %6071 = vmatmul.mubr.bf16.gmra.mrb[0].mxu0 %v4209
      %v6072 = vpop.f32.mrb[0].mxu0
      %v6073 = vadd.f32 0.0, %v6072
      %v6074 = vpop.f32.mrb[0].mxu0
      %v6075 = vpop.f32.mrb[0].mxu0
      %v6076 = vadd.f32 0.0, %v6075
      %v6077 = vpop.f32.mrb[0].mxu0
      %6078 = vmatprep.mubr.bf16.mxu0 0
      %6079 = vmatmul.mubr.bf16.gmra.mrb[0].mxu0 %v4212
      %v6080 = vpop.f32.mrb[0].mxu0
      %v6081 = vadd.f32 0.0, %v6080
      %v6082 = vpop.f32.mrb[0].mxu0
      %v6083 = vpop.f32.mrb[0].mxu0
      %v6084 = vadd.f32 0.0, %v6083
      %v6085 = vpop.f32.mrb[0].mxu0
      %6086 = vmatprep.mubr.bf16.mxu0 0
      %6087 = vmatmul.mubr.bf16.gmra.mrb[0].mxu0 %v4215
      %v6088 = vpop.f32.mrb[0].mxu0
      %v6089 = vadd.f32 0.0, %v6088
      %v6090 = vpop.f32.mrb[0].mxu0
      %v6091 = vpop.f32.mrb[0].mxu0
      %v6092 = vadd.f32 0.0, %v6091
      %v6093 = vpop.f32.mrb[0].mxu0
      %6094 = vmatprep.mubr.bf16.mxu0 0
      %6095 = vmatmul.mubr.bf16.gmra.mrb[0].mxu0 %v4218
      %v6096 = vpop.f32.mrb[0].mxu0
      %v6097 = vadd.f32 0.0, %v6096
      %v6098 = vpop.f32.mrb[0].mxu0
      %v6099 = vpop.f32.mrb[0].mxu0
      %v6100 = vadd.f32 0.0, %v6099
      %v6101 = vpop.f32.mrb[0].mxu0
      %6102 = vmatprep.mubr.bf16.mxu0 0
      %6103 = vmatmul.mubr.bf16.gmra.mrb[0].mxu0 %v4221
      %v6104 = vpop.f32.mrb[0].mxu0
      %v6105 = vadd.f32 0.0, %v6104
      %v6106 = vpop.f32.mrb[0].mxu0
      %v6107 = vpop.f32.mrb[0].mxu0
      %v6108 = vadd.f32 0.0, %v6107
      %v6109 = vpop.f32.mrb[0].mxu0
      %6110 = vmatprep.mubr.bf16.mxu0 0
      %6111 = vmatmul.mubr.bf16.gmra.mrb[0].mxu0 %v4224
      %v6112 = vpop.f32.mrb[0].mxu0
      %v6113 = vadd.f32 0.0, %v6112
      %v6114 = vpop.f32.mrb[0].mxu0
      %v6115 = vpop.f32.mrb[0].mxu0
      %v6116 = vadd.f32 0.0, %v6115
      %v6117 = vpop.f32.mrb[0].mxu0
      %6118 = vmatprep.mubr.bf16.mxu0 0
      %6119 = vmatmul.mubr.bf16.gmra.mrb[0].mxu0 %v4227
      %v6120 = vpop.f32.mrb[0].mxu0
      %v6121 = vadd.f32 0.0, %v6120
      %v6122 = vpop.f32.mrb[0].mxu0
      %v6123 = vpop.f32.mrb[0].mxu0
      %v6124 = vadd.f32 0.0, %v6123
      %v6125 = vpop.f32.mrb[0].mxu0
      %6126 = vmatprep.mubr.bf16.mxu0 0
      %6127 = vmatmul.mubr.bf16.gmra.mrb[0].mxu0 %v4230
      %v6128 = vpop.f32.mrb[0].mxu0
      %v6129 = vadd.f32 0.0, %v6128
      %v6130 = vpop.f32.mrb[0].mxu0
      %v6131 = vpop.f32.mrb[0].mxu0
      %v6132 = vadd.f32 0.0, %v6131
      %v6133 = vpop.f32.mrb[0].mxu0
      %6134 = vmatprep.mubr.bf16.mxu0 0
      %6135 = vmatmul.mubr.bf16.gmra.mrb[0].mxu0 %v4233
      %v6136 = vpop.f32.mrb[0].mxu0
      %v6137 = vadd.f32 0.0, %v6136
      %v6138 = vpop.f32.mrb[0].mxu0
      %v6139 = vpop.f32.mrb[0].mxu0
      %v6140 = vadd.f32 0.0, %v6139
      %v6141 = vpop.f32.mrb[0].mxu0
      %6142 = vmatprep.mubr.bf16.mxu0 0
      %6143 = vmatmul.mubr.bf16.gmra.mrb[0].mxu0 %v4236
      %v6144 = vpop.f32.mrb[0].mxu0
      %v6145 = vadd.f32 0.0, %v6144
      %v6146 = vpop.f32.mrb[0].mxu0
      %v6147 = vpop.f32.mrb[0].mxu0
      %v6148 = vadd.f32 0.0, %v6147
      %v6149 = vpop.f32.mrb[0].mxu0
      %6150 = vmatprep.mubr.bf16.mxu0 0
      %6151 = vmatmul.mubr.bf16.gmra.mrb[0].mxu0 %v4239
      %v6152 = vpop.f32.mrb[0].mxu0
      %v6153 = vadd.f32 0.0, %v6152
      %v6154 = vpop.f32.mrb[0].mxu0
      %v6155 = vpop.f32.mrb[0].mxu0
      %v6156 = vadd.f32 0.0, %v6155
      %v6157 = vpop.f32.mrb[0].mxu0
      %6158 = vmatprep.mubr.bf16.mxu0 0
      %6159 = vmatmul.mubr.bf16.gmra.mrb[0].mxu0 %v4242
      %v6160 = vpop.f32.mrb[0].mxu0
      %v6161 = vadd.f32 0.0, %v6160
      %v6162 = vpop.f32.mrb[0].mxu0
      %v6163 = vpop.f32.mrb[0].mxu0
      %v6164 = vadd.f32 0.0, %v6163
      %v6165 = vpop.f32.mrb[0].mxu0
      %6166 = vmatprep.mubr.bf16.mxu0 0
      %6167 = vmatmul.mubr.bf16.gmra.mrb[0].mxu0 %v4245
      %v6168 = vpop.f32.mrb[0].mxu0
      %v6169 = vadd.f32 0.0, %v6168
      %v6170 = vpop.f32.mrb[0].mxu0
      %v6171 = vpop.f32.mrb[0].mxu0
      %v6172 = vadd.f32 0.0, %v6171
      %v6173 = vpop.f32.mrb[0].mxu0
      %6174 = vmatprep.mubr.bf16.mxu0 0
      %6175 = vmatmul.mubr.bf16.gmra.mrb[0].mxu0 %v5378
      %v6176 = vpop.f32.mrb[0].mxu0
      %v6177 = vadd.f32 0.0, %v6176
      %v6178 = vpop.f32.mrb[0].mxu0
      %v6179 = vpop.f32.mrb[0].mxu0
      %v6180 = vadd.f32 0.0, %v6179
      %v6181 = vpop.f32.mrb[0].mxu0
      %6182 = vmatprep.mubr.bf16.mxu0 0
      %6183 = vmatmul.mubr.bf16.gmra.mrb[0].mxu0 %v6025
      %v6184 = vpop.f32.mrb[0].mxu0
      %v6185 = vadd.f32 0.0, %v6184
      %v6186 = vpop.f32.mrb[0].mxu0
      %v6187 = vpop.f32.mrb[0].mxu0
      %v6188 = vadd.f32 0.0, %v6187
      %v6189 = vpop.f32.mrb[0].mxu0
      %6190 = vdwg.mxu0
      %v6191 = vadd.f32 %v5963, %v6065
      %v6192 = vadd.f32 %v5964, %v6068
      %v6193 = vadd.f32 %v5965, %v6073
      %v6194 = vadd.f32 %v5966, %v6076
      %v6195 = vadd.f32 %v5967, %v6081
      %v6196 = vadd.f32 %v5968, %v6084
      %v6197 = vadd.f32 %v5969, %v6089
      %v6198 = vadd.f32 %v5970, %v6092
      %v6199 = vadd.f32 %v5971, %v6097
      %v6200 = vadd.f32 %v5972, %v6100
      %v6201 = vadd.f32 %v5973, %v6105
      %v6202 = vadd.f32 %v5974, %v6108
      %v6203 = vadd.f32 %v5975, %v6113
      %v6204 = vadd.f32 %v5976, %v6116
      %v6205 = vadd.f32 %v5977, %v6121
      %v6206 = vadd.f32 %v5978, %v6124
      %v6207 = vadd.f32 %v5979, %v6129
      %v6208 = vadd.f32 %v5980, %v6132
      %v6209 = vadd.f32 %v5981, %v6137
      %v6210 = vadd.f32 %v5982, %v6140
      %v6211 = vadd.f32 %v5983, %v6145
      %v6212 = vadd.f32 %v5984, %v6148
      %v6213 = vadd.f32 %v5985, %v6153
      %v6214 = vadd.f32 %v5986, %v6156
      %v6215 = vadd.f32 %v5987, %v6161
      %v6216 = vadd.f32 %v5988, %v6164
      %v6217 = vadd.f32 %v5989, %v6169
      %v6218 = vadd.f32 %v5990, %v6172
      %v6219 = vadd.f32 %v5991, %v6177
      %v6220 = vadd.f32 %v5992, %v6180
      %v6221 = vadd.f32 %v5993, %v6185
      %v6222 = vadd.f32 %v5994, %v6188
      %v6225 = vrot.slane %v3762, 5
      %v6226 = vrot.slane %v6225, 4
      %v6227 = vrot.slane %v3726, 5
      %v6228 = vsel %vm1276, %v6226, %v6227
      %v6229 = vrot.slane %v6227, 4
      %v6230 = vrot.slane %v3744, 5
      %v6231 = vsel %vm1276, %v6229, %v6230
      %s6232 = scalar_lea.vmem %s3, 32
      %v6233 = vld [vmem:[%s6232] sm:$0xf]
      %v6234 = vunpack.c.l.b16 %v6228
      %v6235 = vunpack.c.l.b16 %v6231
      %v6236 = vpack.c.b16 %v6235, %v6234
      %v6238 = vsel %vm4198, %v6236, 0
      %v6241 = vsel %vm4247, %v6233, 0
      %6243 = vmatprep.subr.bf16.mxu0 0
      %6244 = vmatpush1.bf16.msra.mxu0 %v6241
      %6245 = vmatprep.subr.bf16.mxu0 0
      %6246 = vmatpush1.bf16.msra.mxu0 0
      %6247 = vmatprep.subr.bf16.mxu0 0
      %6248 = vmatpush1.bf16.msra.mxu0 0
      %6249 = vmatprep.subr.bf16.mxu0 0
      %6250 = vmatpush1.bf16.msra.mxu0 0
      %6251 = vmatprep.subr.bf16.mxu0 0
      %6252 = vmatpush1.bf16.msra.mxu0 0
      %6253 = vmatprep.subr.bf16.mxu0 0
      %6254 = vmatpush1.bf16.msra.mxu0 0
      %6255 = vmatprep.subr.bf16.mxu0 0
      %6256 = vmatpush1.bf16.msra.mxu0 0
      %6257 = vmatprep.subr.bf16.mxu0 0
      %6258 = vmatpush1.bf16.msra.mxu0 0
      %6259 = vmatprep.subr.bf16.mxu0 0
      %6260 = vmatpush1.bf16.msra.mxu0 0
      %6261 = vmatprep.subr.bf16.mxu0 0
      %6262 = vmatpush1.bf16.msra.mxu0 0
      %6263 = vmatprep.subr.bf16.mxu0 0
      %6264 = vmatpush1.bf16.msra.mxu0 0
      %6265 = vmatprep.subr.bf16.mxu0 0
      %6266 = vmatpush1.bf16.msra.mxu0 0
      %6267 = vmatprep.subr.bf16.mxu0 0
      %6268 = vmatpush1.bf16.msra.mxu0 0
      %6269 = vmatprep.subr.bf16.mxu0 0
      %6270 = vmatpush1.bf16.msra.mxu0 0
      %6271 = vmatprep.subr.bf16.mxu0 0
      %6272 = vmatpush1.bf16.msra.mxu0 0
      %6273 = vmatprep.subr.bf16.mxu0 0
      %6274 = vmatpush1.bf16.msra.mxu0 0
      %6275 = vmatprep.mubr.bf16.mxu0 0
      %6276 = vmatmul.mubr.bf16.gmra.mrb[0].mxu0 %v4905
      %v6277 = vpop.f32.mrb[0].mxu0
      %v6278 = vadd.f32 0.0, %v6277
      %v6279 = vpop.f32.mrb[0].mxu0
      %v6280 = vpop.f32.mrb[0].mxu0
      %v6281 = vadd.f32 0.0, %v6280
      %v6282 = vpop.f32.mrb[0].mxu0
      %6283 = vmatprep.mubr.bf16.mxu0 0
      %6284 = vmatmul.mubr.bf16.gmra.mrb[0].mxu0 %v4908
      %v6285 = vpop.f32.mrb[0].mxu0
      %v6286 = vadd.f32 0.0, %v6285
      %v6287 = vpop.f32.mrb[0].mxu0
      %v6288 = vpop.f32.mrb[0].mxu0
      %v6289 = vadd.f32 0.0, %v6288
      %v6290 = vpop.f32.mrb[0].mxu0
      %6291 = vmatprep.mubr.bf16.mxu0 0
      %6292 = vmatmul.mubr.bf16.gmra.mrb[0].mxu0 %v4911
      %v6293 = vpop.f32.mrb[0].mxu0
      %v6294 = vadd.f32 0.0, %v6293
      %v6295 = vpop.f32.mrb[0].mxu0
      %v6296 = vpop.f32.mrb[0].mxu0
      %v6297 = vadd.f32 0.0, %v6296
      %v6298 = vpop.f32.mrb[0].mxu0
      %6299 = vmatprep.mubr.bf16.mxu0 0
      %6300 = vmatmul.mubr.bf16.gmra.mrb[0].mxu0 %v4914
      %v6301 = vpop.f32.mrb[0].mxu0
      %v6302 = vadd.f32 0.0, %v6301
      %v6303 = vpop.f32.mrb[0].mxu0
      %v6304 = vpop.f32.mrb[0].mxu0
      %v6305 = vadd.f32 0.0, %v6304
      %v6306 = vpop.f32.mrb[0].mxu0
      %6307 = vmatprep.mubr.bf16.mxu0 0
      %6308 = vmatmul.mubr.bf16.gmra.mrb[0].mxu0 %v4917
      %v6309 = vpop.f32.mrb[0].mxu0
      %v6310 = vadd.f32 0.0, %v6309
      %v6311 = vpop.f32.mrb[0].mxu0
      %v6312 = vpop.f32.mrb[0].mxu0
      %v6313 = vadd.f32 0.0, %v6312
      %v6314 = vpop.f32.mrb[0].mxu0
      %6315 = vmatprep.mubr.bf16.mxu0 0
      %6316 = vmatmul.mubr.bf16.gmra.mrb[0].mxu0 %v4920
      %v6317 = vpop.f32.mrb[0].mxu0
      %v6318 = vadd.f32 0.0, %v6317
      %v6319 = vpop.f32.mrb[0].mxu0
      %v6320 = vpop.f32.mrb[0].mxu0
      %v6321 = vadd.f32 0.0, %v6320
      %v6322 = vpop.f32.mrb[0].mxu0
      %6323 = vmatprep.mubr.bf16.mxu0 0
      %6324 = vmatmul.mubr.bf16.gmra.mrb[0].mxu0 %v4923
      %v6325 = vpop.f32.mrb[0].mxu0
      %v6326 = vadd.f32 0.0, %v6325
      %v6327 = vpop.f32.mrb[0].mxu0
      %v6328 = vpop.f32.mrb[0].mxu0
      %v6329 = vadd.f32 0.0, %v6328
      %v6330 = vpop.f32.mrb[0].mxu0
      %6331 = vmatprep.mubr.bf16.mxu0 0
      %6332 = vmatmul.mubr.bf16.gmra.mrb[0].mxu0 %v4926
      %v6333 = vpop.f32.mrb[0].mxu0
      %v6334 = vadd.f32 0.0, %v6333
      %v6335 = vpop.f32.mrb[0].mxu0
      %v6336 = vpop.f32.mrb[0].mxu0
      %v6337 = vadd.f32 0.0, %v6336
      %v6338 = vpop.f32.mrb[0].mxu0
      %6339 = vmatprep.mubr.bf16.mxu0 0
      %6340 = vmatmul.mubr.bf16.gmra.mrb[0].mxu0 %v4929
      %v6341 = vpop.f32.mrb[0].mxu0
      %v6342 = vadd.f32 0.0, %v6341
      %v6343 = vpop.f32.mrb[0].mxu0
      %v6344 = vpop.f32.mrb[0].mxu0
      %v6345 = vadd.f32 0.0, %v6344
      %v6346 = vpop.f32.mrb[0].mxu0
      %6347 = vmatprep.mubr.bf16.mxu0 0
      %6348 = vmatmul.mubr.bf16.gmra.mrb[0].mxu0 %v4932
      %v6349 = vpop.f32.mrb[0].mxu0
      %v6350 = vadd.f32 0.0, %v6349
      %v6351 = vpop.f32.mrb[0].mxu0
      %v6352 = vpop.f32.mrb[0].mxu0
      %v6353 = vadd.f32 0.0, %v6352
      %v6354 = vpop.f32.mrb[0].mxu0
      %6355 = vmatprep.mubr.bf16.mxu0 0
      %6356 = vmatmul.mubr.bf16.gmra.mrb[0].mxu0 %v4935
      %v6357 = vpop.f32.mrb[0].mxu0
      %v6358 = vadd.f32 0.0, %v6357
      %v6359 = vpop.f32.mrb[0].mxu0
      %v6360 = vpop.f32.mrb[0].mxu0
      %v6361 = vadd.f32 0.0, %v6360
      %v6362 = vpop.f32.mrb[0].mxu0
      %6363 = vmatprep.mubr.bf16.mxu0 0
      %6364 = vmatmul.mubr.bf16.gmra.mrb[0].mxu0 %v4938
      %v6365 = vpop.f32.mrb[0].mxu0
      %v6366 = vadd.f32 0.0, %v6365
      %v6367 = vpop.f32.mrb[0].mxu0
      %v6368 = vpop.f32.mrb[0].mxu0
      %v6369 = vadd.f32 0.0, %v6368
      %v6370 = vpop.f32.mrb[0].mxu0
      %6371 = vmatprep.mubr.bf16.mxu0 0
      %6372 = vmatmul.mubr.bf16.gmra.mrb[0].mxu0 %v4941
      %v6373 = vpop.f32.mrb[0].mxu0
      %v6374 = vadd.f32 0.0, %v6373
      %v6375 = vpop.f32.mrb[0].mxu0
      %v6376 = vpop.f32.mrb[0].mxu0
      %v6377 = vadd.f32 0.0, %v6376
      %v6378 = vpop.f32.mrb[0].mxu0
      %6379 = vmatprep.mubr.bf16.mxu0 0
      %6380 = vmatmul.mubr.bf16.gmra.mrb[0].mxu0 %v4944
      %v6381 = vpop.f32.mrb[0].mxu0
      %v6382 = vadd.f32 0.0, %v6381
      %v6383 = vpop.f32.mrb[0].mxu0
      %v6384 = vpop.f32.mrb[0].mxu0
      %v6385 = vadd.f32 0.0, %v6384
      %v6386 = vpop.f32.mrb[0].mxu0
      %6387 = vmatprep.mubr.bf16.mxu0 0
      %6388 = vmatmul.mubr.bf16.gmra.mrb[0].mxu0 %v5591
      %v6389 = vpop.f32.mrb[0].mxu0
      %v6390 = vadd.f32 0.0, %v6389
      %v6391 = vpop.f32.mrb[0].mxu0
      %v6392 = vpop.f32.mrb[0].mxu0
      %v6393 = vadd.f32 0.0, %v6392
      %v6394 = vpop.f32.mrb[0].mxu0
      %6395 = vmatprep.mubr.bf16.mxu0 0
      %6396 = vmatmul.mubr.bf16.gmra.mrb[0].mxu0 %v6238
      %v6397 = vpop.f32.mrb[0].mxu0
      %v6398 = vadd.f32 0.0, %v6397
      %v6399 = vpop.f32.mrb[0].mxu0
      %v6400 = vpop.f32.mrb[0].mxu0
      %v6401 = vadd.f32 0.0, %v6400
      %v6402 = vpop.f32.mrb[0].mxu0
      %6403 = vdwg.mxu0
      %v6404 = vadd.f32 %v6191, %v6278
      %v6405 = vadd.f32 %v6192, %v6281
      %v6406 = vadd.f32 %v6193, %v6286
      %v6407 = vadd.f32 %v6194, %v6289
      %v6408 = vadd.f32 %v6195, %v6294
      %v6409 = vadd.f32 %v6196, %v6297
      %v6410 = vadd.f32 %v6197, %v6302
      %v6411 = vadd.f32 %v6198, %v6305
      %v6412 = vadd.f32 %v6199, %v6310
      %v6413 = vadd.f32 %v6200, %v6313
      %v6414 = vadd.f32 %v6201, %v6318
      %v6415 = vadd.f32 %v6202, %v6321
      %v6416 = vadd.f32 %v6203, %v6326
      %v6417 = vadd.f32 %v6204, %v6329
      %v6418 = vadd.f32 %v6205, %v6334
      %v6419 = vadd.f32 %v6206, %v6337
      %v6420 = vadd.f32 %v6207, %v6342
      %v6421 = vadd.f32 %v6208, %v6345
      %v6422 = vadd.f32 %v6209, %v6350
      %v6423 = vadd.f32 %v6210, %v6353
      %v6424 = vadd.f32 %v6211, %v6358
      %v6425 = vadd.f32 %v6212, %v6361
      %v6426 = vadd.f32 %v6213, %v6366
      %v6427 = vadd.f32 %v6214, %v6369
      %v6428 = vadd.f32 %v6215, %v6374
      %v6429 = vadd.f32 %v6216, %v6377
      %v6430 = vadd.f32 %v6217, %v6382
      %v6431 = vadd.f32 %v6218, %v6385
      %v6432 = vadd.f32 %v6219, %v6390
      %v6433 = vadd.f32 %v6220, %v6393
      %v6434 = vadd.f32 %v6221, %v6398
      %v6435 = vadd.f32 %v6222, %v6401
      %v6436 = vld [vmem:[%s4] sm:$0x1]
      %v6438 = vlaneseq
      %v6439 = vshrl.u32 %v6438, 7
      %v6440 = vsub.s32 0, %v6439
      %v6441 = vrot.slane %v6436, %v6440
      %v6443 = vadd.f32 %v6404, %v6441
      %v6444 = vadd.f32 %v6405, %v6441
      %v6445 = vadd.f32 %v6406, %v6441
      %v6446 = vadd.f32 %v6407, %v6441
      %v6447 = vadd.f32 %v6408, %v6441
      %v6448 = vadd.f32 %v6409, %v6441
      %v6449 = vadd.f32 %v6410, %v6441
      %v6450 = vadd.f32 %v6411, %v6441
      %v6451 = vadd.f32 %v6412, %v6441
      %v6452 = vadd.f32 %v6413, %v6441
      %v6453 = vadd.f32 %v6414, %v6441
      %v6454 = vadd.f32 %v6415, %v6441
      %v6455 = vadd.f32 %v6416, %v6441
      %v6456 = vadd.f32 %v6417, %v6441
      %v6457 = vadd.f32 %v6418, %v6441
      %v6458 = vadd.f32 %v6419, %v6441
      %v6459 = vadd.f32 %v6420, %v6441
      %v6460 = vadd.f32 %v6421, %v6441
      %v6461 = vadd.f32 %v6422, %v6441
      %v6462 = vadd.f32 %v6423, %v6441
      %v6463 = vadd.f32 %v6424, %v6441
      %v6464 = vadd.f32 %v6425, %v6441
      %v6465 = vadd.f32 %v6426, %v6441
      %v6466 = vadd.f32 %v6427, %v6441
      %v6467 = vadd.f32 %v6428, %v6441
      %v6468 = vadd.f32 %v6429, %v6441
      %v6469 = vadd.f32 %v6430, %v6441
      %v6470 = vadd.f32 %v6431, %v6441
      %v6471 = vadd.f32 %v6432, %v6441
      %v6472 = vadd.f32 %v6433, %v6441
      %v6473 = vadd.f32 %v6434, %v6441
      %v6474 = vadd.f32 %v6435, %v6441
      %v6475 = vmax.f32 %v6443, 0.0
      %v6476 = vmax.f32 %v6444, 0.0
      %v6477 = vmax.f32 %v6445, 0.0
      %v6478 = vmax.f32 %v6446, 0.0
      %v6479 = vmax.f32 %v6447, 0.0
      %v6480 = vmax.f32 %v6448, 0.0
      %v6481 = vmax.f32 %v6449, 0.0
      %v6482 = vmax.f32 %v6450, 0.0
      %v6483 = vmax.f32 %v6451, 0.0
      %v6484 = vmax.f32 %v6452, 0.0
      %v6485 = vmax.f32 %v6453, 0.0
      %v6486 = vmax.f32 %v6454, 0.0
      %v6487 = vmax.f32 %v6455, 0.0
      %v6488 = vmax.f32 %v6456, 0.0
      %v6489 = vmax.f32 %v6457, 0.0
      %v6490 = vmax.f32 %v6458, 0.0
      %v6491 = vmax.f32 %v6459, 0.0
      %v6492 = vmax.f32 %v6460, 0.0
      %v6493 = vmax.f32 %v6461, 0.0
      %v6494 = vmax.f32 %v6462, 0.0
      %v6495 = vmax.f32 %v6463, 0.0
      %v6496 = vmax.f32 %v6464, 0.0
      %v6497 = vmax.f32 %v6465, 0.0
      %v6498 = vmax.f32 %v6466, 0.0
      %v6499 = vmax.f32 %v6467, 0.0
      %v6500 = vmax.f32 %v6468, 0.0
      %v6501 = vmax.f32 %v6469, 0.0
      %v6502 = vmax.f32 %v6470, 0.0
      %v6503 = vmax.f32 %v6471, 0.0
      %v6504 = vmax.f32 %v6472, 0.0
      %v6505 = vmax.f32 %v6473, 0.0
      %v6506 = vmax.f32 %v6474, 0.0
      %6507 = vst.msk [vmem:[%s224] sm:$0xff] %vm4198, %v6475
      %6508 = vst.msk [vmem:[%s224 + $0x8] sm:$0xff] %vm4198, %v6476
      %6509 = vst.msk [vmem:[%s224 + $0x10] sm:$0xff] %vm4198, %v6477
      %6510 = vst.msk [vmem:[%s224 + $0x18] sm:$0xff] %vm4198, %v6478
      %6511 = vst.msk [vmem:[%s224 + $0x20] sm:$0xff] %vm4198, %v6479
      %6512 = vst.msk [vmem:[%s224 + $0x28] sm:$0xff] %vm4198, %v6480
      %6513 = vst.msk [vmem:[%s224 + $0x30] sm:$0xff] %vm4198, %v6481
      %6514 = vst.msk [vmem:[%s224 + $0x38] sm:$0xff] %vm4198, %v6482
      %6515 = vst.msk [vmem:[%s224 + $0x40] sm:$0xff] %vm4198, %v6483
      %6516 = vst.msk [vmem:[%s224 + $0x48] sm:$0xff] %vm4198, %v6484
      %6517 = vst.msk [vmem:[%s224 + $0x50] sm:$0xff] %vm4198, %v6485
      %6518 = vst.msk [vmem:[%s224 + $0x58] sm:$0xff] %vm4198, %v6486
      %6519 = vst.msk [vmem:[%s224 + $0x60] sm:$0xff] %vm4198, %v6487
      %6520 = vst.msk [vmem:[%s224 + $0x68] sm:$0xff] %vm4198, %v6488
      %6521 = vst.msk [vmem:[%s224 + $0x70] sm:$0xff] %vm4198, %v6489
      %6522 = vst.msk [vmem:[%s224 + $0x78] sm:$0xff] %vm4198, %v6490
      %6523 = vst.msk [vmem:[%s224 + $0x80] sm:$0xff] %vm4198, %v6491
      %6524 = vst.msk [vmem:[%s224 + $0x88] sm:$0xff] %vm4198, %v6492
      %6525 = vst.msk [vmem:[%s224 + $0x90] sm:$0xff] %vm4198, %v6493
      %6526 = vst.msk [vmem:[%s224 + $0x98] sm:$0xff] %vm4198, %v6494
      %6527 = vst.msk [vmem:[%s224 + $0xa0] sm:$0xff] %vm4198, %v6495
      %6528 = vst.msk [vmem:[%s224 + $0xa8] sm:$0xff] %vm4198, %v6496
      %6529 = vst.msk [vmem:[%s224 + $0xb0] sm:$0xff] %vm4198, %v6497
      %6530 = vst.msk [vmem:[%s224 + $0xb8] sm:$0xff] %vm4198, %v6498
      %6531 = vst.msk [vmem:[%s224 + $0xc0] sm:$0xff] %vm4198, %v6499
      %6532 = vst.msk [vmem:[%s224 + $0xc8] sm:$0xff] %vm4198, %v6500
      %6533 = vst.msk [vmem:[%s224 + $0xd0] sm:$0xff] %vm4198, %v6501
      %6534 = vst.msk [vmem:[%s224 + $0xd8] sm:$0xff] %vm4198, %v6502
      %6535 = vst.msk [vmem:[%s224 + $0xe0] sm:$0xff] %vm4198, %v6503
      %6536 = vst.msk [vmem:[%s224 + $0xe8] sm:$0xff] %vm4198, %v6504
      %6537 = vst.msk [vmem:[%s224 + $0xf0] sm:$0xff] %vm4198, %v6505
      %6538 = vst.msk [vmem:[%s224 + $0xf8] sm:$0xff] %vm4198, %v6506
      %p6539 = scmp.lt.s32.totalorder %s16, 1
      %s6540 = scalar_select %p6539, %s16, 1
      %s6541 = smul.addr %s6540, 32
      %s6542 = smul.addr %s6541, 8
      %s6543 = scalar_lea.vmem %s5, %s6542
      // Predicated region
      $region41: #{tpu_custom_call.1} parent=39 // pred_check
        %p6544 = pneg %p144
      $region42: #{tpu_custom_call.1} parent=39 // pred_check_branch
        %6546 = sbr.rel (%p6544) target = $region44
      $region43: #{tpu_custom_call.1} parent=39 // pred_region
        _
      $region44: #{tpu_custom_call.1} parent=39 // pred_fallthru
        _
    $region40: #{tpu_custom_call.1} parent=5 // pred_fallthru
      _
    %p6547 = scmp.le.s32.totalorder 2, %s11
    // Predicated region
    $region45: #{tpu_custom_call.1} parent=5 // pred_check
      %p6548 = pneg %p6547
    $region46: #{tpu_custom_call.1} parent=5 // pred_check_branch
      %6550 = sbr.rel (%p6548) target = $region48
    $region47: #{tpu_custom_call.1} parent=5 // pred_region
      %s6551 = ssub.s32 %s11, 2
      // Predicated region
      $region49: #{tpu_custom_call.1} parent=47 // pred_check
        %p6552 = pneg %p150
      $region50: #{tpu_custom_call.1} parent=47 // pred_check_branch
        %6554 = sbr.rel (%p6552) target = $region52
      $region51: #{tpu_custom_call.1} parent=47 // pred_region
        %p6555 = scmp.lt.s32.totalorder %s17, 1
        %s6556 = scalar_select %p6555, %s17, 1
        %s6557 = smul.addr %s6556, 32
        %s6558 = smul.addr %s6557, 8
        %s6559 = scalar_lea.vmem %s5, %s6558
      $region52: #{tpu_custom_call.1} parent=47 // pred_fallthru
        _
    $region48: #{tpu_custom_call.1} parent=5 // pred_fallthru
      _
  $region6: #{tpu_custom_call.1} parent=0 // loop_footer
    %s15 = sadd.s32 1, %s11
  $region7: #{tpu_custom_call.1} parent=0 // loop_footer_branch
    %10 = sbr.rel target = $region3
  $region8: #{tpu_custom_call.1} parent=0 // loop_exit
    _

</llo_original>
